<compile_context>
chip_gen: v5e
topology: v5e:2x2
jax: 0.10.0
libtpu: 0.0.40
codegen_flags: <defaults>
</compile_context>

<pallas_src>
import math
import functools

import jax
import jax.numpy as jnp
from jax.experimental import pallas as pl
from jax.experimental.pallas import tpu as pltpu


_LANE = 128
_VMEM_LIMIT_BYTES = 48 * 1024 * 1024    # below v7x's 64 MiB physical VMEM
_TILE_VMEM_BUDGET = 20 * 1024 * 1024    # budget for per-row tiles + temporaries


def _softplus100(x, bf16_eup):
    # torch.nn.Softplus(beta=100, threshold=20): (1/beta) * log1p(exp(beta*x)),
    # with the linear branch when beta*x > threshold.
    bx = 100.0 * x
    safe = jnp.minimum(bx, 20.0)
    if bf16_eup:
        # v6e/v7x: bf16 EUP for the two transcendentals (~2x EUP throughput);
        # threshold compare/select and the *0.01 rescale stay in f32.
        sp = jnp.log1p(jnp.exp(safe.astype(jnp.bfloat16))).astype(jnp.float32)
    else:
        sp = jnp.log1p(jnp.exp(safe))
    return jnp.where(bx > 20.0, x, sp * 0.01)


def geometry_kernel(x_ref, p2_ref, phase_ref,
                    w_in_x_ref, w_in_sc_ref, b_in_ref,
                    w_hid_ref, b_hid_ref,
                    w_sdf_ref, b_sdf_ref, w_feat_ref, b_feat_ref,
                    sdf_ref, feat_ref, *, n_loop, bf16_eup):
    x = x_ref[...]                                              # [tm, in_dim] f32

    # Positional-encoding phases via a tiny f32 matmul (no lane concat), with
    # p2/phase zero-padded to a 128-lane multiple so xp/sincos are lane-dense:
    #   xp[:, f*in_dim+d]        = x[:, d] * freqs[f]
    #   xp[:, proj + f*in_dim+d] = x[:, d] * freqs[f] + pi/2
    # One jnp.sin gives [sin(x_proj), cos(x_proj)] in a single EUP stream.
    xp = (jnp.dot(x, p2_ref[...], preferred_element_type=jnp.float32)
          + phase_ref[...])                                     # [tm, proj2_pad]
    sincos = jnp.sin(xp)

    # First layer: enc @ W_in as x-part (f32, K=3, tiny) + sincos-part (bf16).
    h = (jnp.dot(x, w_in_x_ref[...], preferred_element_type=jnp.float32)
         + jnp.dot(sincos.astype(jnp.bfloat16), w_in_sc_ref[...],
                   preferred_element_type=jnp.float32)
         + b_in_ref[...])
    h = _softplus100(h, bf16_eup)

    # Hidden layers (Softplus beta=100): bf16 MXU operands, f32 accumulation.
    for i in range(n_loop):
        h = _softplus100(
            jnp.dot(h.astype(jnp.bfloat16), w_hid_ref[i],
                    preferred_element_type=jnp.float32) + b_hid_ref[i],
            bf16_eup)

    # Output layer in f32 (tiny), split into the sdf column (VPU lane-reduce)
    # and the feature block; outputs are out_dim-wide (not 128-padded) so the
    # HBM writeback is ~14x smaller than the previous padded slab.
    sdf_ref[...] = (jnp.sum(h * w_sdf_ref[...], axis=1, keepdims=True)
                    + b_sdf_ref[...])
    feat_ref[...] = (jnp.dot(h, w_feat_ref[...],
                             preferred_element_type=jnp.float32)
                     + b_feat_ref[...])


@functools.lru_cache(maxsize=None)
def _eup_bf16_supported():
    """bf16 transcendentals only on v6e / v7x; f32 on v5e and unknown chips."""
    try:
        kind = jax.devices()[0].device_kind.lower()
    except Exception:
        return False
    return any(tag in kind for tag in ("v6", "v7", "tpu7"))


def prepare_geometry_params(params, in_dim):
    """One-time re-layout of GeometryNet parameters into the kernel's format."""
    freqs = params["freqs"].astype(jnp.float32)               # [num_freqs]
    num_freqs = freqs.shape[0]
    proj_dim = num_freqs * in_dim
    proj2 = 2 * proj_dim
    proj2_pad = pl.cdiv(proj2, _LANE) * _LANE

    # P[d, f*in_dim + e] = freqs[f] * delta(d, e)  (matches the PyTorch
    # x[..., None, :] * freqs[..., None] -> reshape ordering f*in_dim + d).
    eye = jnp.eye(in_dim, dtype=jnp.float32)
    P = jnp.einsum("f,de->dfe", freqs, eye).reshape(in_dim, proj_dim)
    p2 = jnp.zeros((in_dim, proj2_pad), jnp.float32)
    p2 = p2.at[:, :proj_dim].set(P)
    p2 = p2.at[:, proj_dim:proj2].set(P)                        # [in_dim, pad]
    phase = jnp.zeros((1, proj2_pad), jnp.float32)
    phase = phase.at[0, proj_dim:proj2].set(0.5 * math.pi)

    w_in = params["w_in"].astype(jnp.float32)                  # [enc_dim, H]
    hidden_dim = w_in.shape[1]
    w_in_x = w_in[:in_dim, :]                                   # f32 [in_dim, H]
    w_in_sc = jnp.zeros((proj2_pad, hidden_dim), jnp.float32)
    w_in_sc = w_in_sc.at[:proj2, :].set(w_in[in_dim:, :]).astype(jnp.bfloat16)
    b_in = params["b_in"].astype(jnp.float32)                   # [1, H]

    w_hid = params["w_hid"].astype(jnp.bfloat16)                # [nh, H, H]
    b_hid = params["b_hid"].astype(jnp.float32)                 # [nh, 1, H]

    w_out = params["w_out"].astype(jnp.float32)                 # [H, out_dim]
    b_out = params["b_out"].astype(jnp.float32)                 # [1, out_dim]
    w_sdf = w_out[:, 0][None, :]                                # [1, H] (VPU reduce)
    b_sdf = b_out[:, 0:1]                                       # [1, 1]
    w_feat = w_out[:, 1:]                                       # [H, out_dim-1]
    b_feat = b_out[:, 1:]                                       # [1, out_dim-1]

    return dict(p2=p2, phase=phase,
                w_in_x=w_in_x, w_in_sc=w_in_sc, b_in=b_in,
                w_hid=w_hid, b_hid=b_hid,
                w_sdf=w_sdf, b_sdf=b_sdf, w_feat=w_feat, b_feat=b_feat)


@functools.partial(jax.jit, static_argnums=(2, 3, 4, 5))
def _geometry_forward(x, prepared, num_hidden, out_dim, tm, bf16_eup):
    B, N, in_dim = x.shape
    M = B * N
    hidden_dim = prepared["b_in"].shape[1]
    proj2_pad = prepared["p2"].shape[1]
    n_hid = prepared["w_hid"].shape[0]
    feat_dim = out_dim - 1

    # ---- Row-tile sizing ---------------------------------------------------
    # Big tiles amortize the ~0.35us/step grid cost; the VMEM-derived cap
    # (scaled by hidden_dim) keeps per-step tiles inside v7x's 64 MiB VMEM, and
    # capping at half the rows keeps >= 2 grid steps so the "parallel" axis can
    # be split across v7x's two TensorCores.
    hpad = pl.cdiv(hidden_dim, _LANE) * _LANE
    bytes_per_row = (
        3 * 2 * _LANE * 4        # x / sdf / feat tiles (double-buffered, lane-padded)
        + 2 * proj2_pad * 4      # xp + sincos temporaries
        + 4 * hpad * 4           # h (f32) + bf16 copy + softplus temporaries
    )
    tm_vmem_cap = max(256, (_TILE_VMEM_BUDGET // bytes_per_row) // 8 * 8)

    tm = max(8, (tm // 8) * 8)
    rows8 = pl.cdiv(M, 8) * 8
    half = max(8, (rows8 // 2) // 8 * 8)
    if half >= 512:                       # enough work: keep >= 2 grid steps
        tm_eff = min(tm, tm_vmem_cap, half)
    else:
        tm_eff = min(tm, tm_vmem_cap, rows8)
    tm_eff = max(tm_eff, 8)
    M_pad = pl.cdiv(M, tm_eff) * tm_eff

    x2d = x.reshape(M, in_dim).astype(jnp.float32)
    if M_pad != M:
        x2d = jnp.pad(x2d, ((0, M_pad - M), (0, 0)))  # padded rows -> junk, sliced off

    kernel = functools.partial(geometry_kernel, n_loop=num_hidden - 1,
                               bf16_eup=bf16_eup)

    # TODO(synk): mark the grid-invariant operand specs with
    # pipeline_mode=pl.Buffered(1) (single buffer) once that pipeline mode is
    # reliably plumbed through pallas_call; their index_maps are constant so
    # re-DMA is already skipped, this would only trim VMEM.
    sdf_out, feat_out = pl.pallas_call(
        kernel,
        out_shape=(jax.ShapeDtypeStruct((M_pad, 1), jnp.float32),
                   jax.ShapeDtypeStruct((M_pad, feat_dim), jnp.float32)),
        grid_spec=pltpu.PrefetchScalarGridSpec(
            num_scalar_prefetch=0,
            grid=(M_pad // tm_eff,),
            in_specs=[
                pl.BlockSpec((tm_eff, in_dim), lambda i: (i, 0)),
                # grid-invariant operands (same block every step):
                pl.BlockSpec((in_dim, proj2_pad), lambda i: (0, 0)),
                pl.BlockSpec((1, proj2_pad), lambda i: (0, 0)),
                pl.BlockSpec((in_dim, hidden_dim), lambda i: (0, 0)),
                pl.BlockSpec((proj2_pad, hidden_dim), lambda i: (0, 0)),
                pl.BlockSpec((1, hidden_dim), lambda i: (0, 0)),
                pl.BlockSpec((n_hid, hidden_dim, hidden_dim), lambda i: (0, 0, 0)),
                pl.BlockSpec((n_hid, 1, hidden_dim), lambda i: (0, 0, 0)),
                pl.BlockSpec((1, hidden_dim), lambda i: (0, 0)),
                pl.BlockSpec((1, 1), lambda i: (0, 0)),
                pl.BlockSpec((hidden_dim, feat_dim), lambda i: (0, 0)),
                pl.BlockSpec((1, feat_dim), lambda i: (0, 0)),
            ],
            out_specs=[
                pl.BlockSpec((tm_eff, 1), lambda i: (i, 0)),
                pl.BlockSpec((tm_eff, feat_dim), lambda i: (i, 0)),
            ],
        ),
        compiler_params=pltpu.CompilerParams(
            dimension_semantics=("parallel",),
            vmem_limit_bytes=_VMEM_LIMIT_BYTES),
    )(x2d, prepared["p2"], prepared["phase"],
      prepared["w_in_x"], prepared["w_in_sc"], prepared["b_in"],
      prepared["w_hid"], prepared["b_hid"],
      prepared["w_sdf"], prepared["b_sdf"],
      prepared["w_feat"], prepared["b_feat"])

    sdf = sdf_out[:M, 0].reshape(B, N)
    geometric_feature = feat_out[:M, :].reshape(B, N, feat_dim)
    return sdf, geometric_feature


def geometry_net_forward(x, prepared, *, num_hidden, out_dim, tm=4096):
    """x: [B, N, in_dim] -> (sdf [B, N], geometric_feature [B, N, out_dim-1])."""
    return _geometry_forward(x, prepared, num_hidden, out_dim, tm,
                             _eup_bf16_supported())


def init_params(key, in_dim, hidden_dim, num_hidden, out_dim,
                max_freq, num_freqs, radius):
    """Deterministic synthetic init mirroring GeometryNet.__init__ (geometric init)."""
    enc_dim = in_dim + 2 * num_freqs * in_dim
    freqs = (2.0 ** jnp.linspace(0.0, max_freq, num_freqs)).astype(jnp.float32)

    k_in, k_hid, k_out = jax.random.split(key, 3)
    std = math.sqrt(2.0 / hidden_dim)

    # in-layer: bias 0; weight rows past in_dim are 0; first in_dim rows ~ N(0, std)
    w_in = jnp.zeros((enc_dim, hidden_dim), jnp.float32)
    w_in = w_in.at[:in_dim, :].set(
        std * jax.random.normal(k_in, (in_dim, hidden_dim), jnp.float32))
    b_in = jnp.zeros((1, hidden_dim), jnp.float32)

    n_hid = max(num_hidden - 1, 1)
    w_hid = std * jax.random.normal(k_hid, (n_hid, hidden_dim, hidden_dim), jnp.float32)
    b_hid = jnp.zeros((n_hid, 1, hidden_dim), jnp.float32)

    # out-layer: weight ~ N(sqrt(pi/out_dim), 1e-4); bias = -radius
    w_out = (math.sqrt(math.pi / out_dim)
             + 1e-4 * jax.random.normal(k_out, (hidden_dim, out_dim), jnp.float32))
    b_out = jnp.full((1, out_dim), -radius, jnp.float32)

    return dict(freqs=freqs, w_in=w_in, b_in=b_in, w_hid=w_hid, b_hid=b_hid,
                w_out=w_out, b_out=b_out)


def geometry_reference(x, params, num_hidden):
    """Pure-JAX f32 reference matching the PyTorch module (for validation)."""
    freqs = params["freqs"]
    xp = (x[..., None, :] * freqs[:, None]).reshape(*x.shape[:-1], -1)
    enc = jnp.concatenate([x, jnp.sin(xp), jnp.cos(xp)], axis=-1)

    def sp(v):
        bv = 100.0 * v
        return jnp.where(bv > 20.0, v,
                         jnp.log1p(jnp.exp(jnp.minimum(bv, 20.0))) * 0.01)

    h = sp(enc @ params["w_in"] + params["b_in"])
    for i in range(num_hidden - 1):
        h = sp(h @ params["w_hid"][i] + params["b_hid"][i])
    out = h @ params["w_out"] + params["b_out"]
    return out[..., 0], out[..., 1:]


# TODO(synk): GeometryNet.gradient (torch.autograd.grad of sdf w.r.t. x) is not a
# kernel concern here; use jax.grad around geometry_net_forward if needed.


if __name__ == "__main__":
    # Small shapes consistent with the module's forward signature.
    B, N, in_dim = 2, 64, 3
    hidden_dim, num_hidden, out_dim = 32, 3, 9
    max_freq, num_freqs, radius = 4.0, 6, 1.0

    key = jax.random.PRNGKey(0)
    kx, kp = jax.random.split(key)
    x = jax.random.normal(kx, (B, N, in_dim), dtype=jnp.float32)
    params = init_params(kp, in_dim, hidden_dim, num_hidden, out_dim,
                         max_freq, num_freqs, radius)
    prepared = prepare_geometry_params(params, in_dim)

    sdf, geometric_feature = geometry_net_forward(
        x, prepared, num_hidden=num_hidden, out_dim=out_dim)
    jax.block_until_ready((sdf, geometric_feature))

    assert sdf.shape == (B, N)
    assert geometric_feature.shape == (B, N, out_dim - 1)

    # Loose-tolerance check against the f32 reference (kernel uses bf16 MXU
    # operands for the wide matmuls, so allow ~percent-level deviation).
    sdf_ref, feat_ref = geometry_reference(x, params, num_hidden)
    assert bool(jnp.all(jnp.isfinite(sdf))) and bool(jnp.all(jnp.isfinite(geometric_feature)))
    assert bool(jnp.allclose(sdf, sdf_ref, atol=5e-2, rtol=5e-2))
    assert bool(jnp.allclose(geometric_feature, feat_ref, atol=5e-2, rtol=5e-2))

    print("KERNEL_OK")
</pallas_src>

<mosaic_0001>
module attributes {stable_mosaic.version = 11 : i64} {
  func.func @geometry_kernel(%arg0: i32, %arg1: memref<128x3xf32, #tpu.memory_space<vmem>>, %arg2: memref<3x128xf32, #tpu.memory_space<vmem>>, %arg3: memref<1x128xf32, #tpu.memory_space<vmem>>, %arg4: memref<3x32xf32, #tpu.memory_space<vmem>>, %arg5: memref<128x32xbf16, #tpu.memory_space<vmem>>, %arg6: memref<1x32xf32, #tpu.memory_space<vmem>>, %arg7: memref<2x32x32xbf16, #tpu.memory_space<vmem>>, %arg8: memref<2x1x32xf32, #tpu.memory_space<vmem>>, %arg9: memref<1x32xf32, #tpu.memory_space<vmem>>, %arg10: memref<1x1xf32, #tpu.memory_space<vmem>>, %arg11: memref<32x8xf32, #tpu.memory_space<vmem>>, %arg12: memref<1x8xf32, #tpu.memory_space<vmem>>, %arg13: memref<128x1xf32, #tpu.memory_space<vmem>>, %arg14: memref<128x8xf32, #tpu.memory_space<vmem>>) attributes {dimension_semantics = [#tpu.dimension_semantics<parallel>], iteration_bounds = array<i64: 1>, scalar_prefetch = 0 : i64, scratch_operands = 0 : i64, tpu.core_type = #tpu.core_type<tc>, window_params = [{transform_indices = @transform_0, window_bounds = array<i64: 128, 3>}, {pipeline_mode = #tpu.pipeline_mode<synchronous>, transform_indices = @transform_1, window_bounds = array<i64: 3, 128>}, {pipeline_mode = #tpu.pipeline_mode<synchronous>, transform_indices = @transform_2, window_bounds = array<i64: 1, 128>}, {pipeline_mode = #tpu.pipeline_mode<synchronous>, transform_indices = @transform_3, window_bounds = array<i64: 3, 32>}, {pipeline_mode = #tpu.pipeline_mode<synchronous>, transform_indices = @transform_4, window_bounds = array<i64: 128, 32>}, {pipeline_mode = #tpu.pipeline_mode<synchronous>, transform_indices = @transform_5, window_bounds = array<i64: 1, 32>}, {pipeline_mode = #tpu.pipeline_mode<synchronous>, transform_indices = @transform_6, window_bounds = array<i64: 2, 32, 32>}, {pipeline_mode = #tpu.pipeline_mode<synchronous>, transform_indices = @transform_7, window_bounds = array<i64: 2, 1, 32>}, {pipeline_mode = #tpu.pipeline_mode<synchronous>, transform_indices = @transform_8, window_bounds = array<i64: 1, 32>}, {pipeline_mode = #tpu.pipeline_mode<synchronous>, transform_indices = @transform_9, window_bounds = array<i64: 1, 1>}, {pipeline_mode = #tpu.pipeline_mode<synchronous>, transform_indices = @transform_10, window_bounds = array<i64: 32, 8>}, {pipeline_mode = #tpu.pipeline_mode<synchronous>, transform_indices = @transform_11, window_bounds = array<i64: 1, 8>}, {transform_indices = @transform_12, window_bounds = array<i64: 128, 1>}, {transform_indices = @transform_13, window_bounds = array<i64: 128, 8>}]} {
    %c0 = arith.constant 0 : index
    %c0_0 = arith.constant 0 : index
    %0 = vector.load %arg1[%c0, %c0_0] : memref<128x3xf32, #tpu.memory_space<vmem>>, vector<128x3xf32>
    %c0_1 = arith.constant 0 : index
    %c0_2 = arith.constant 0 : index
    %1 = vector.load %arg2[%c0_1, %c0_2] : memref<3x128xf32, #tpu.memory_space<vmem>>, vector<3x128xf32>
    %cst = arith.constant dense<0.000000e+00> : vector<128x128xf32>
    %2 = tpu.matmul %0, %1, %cst {dimension_numbers = #tpu.dot_dimension_numbers<[1], [0], [0], [1], [0, 0, 1, 1], [], []>} : vector<128x3xf32>, vector<3x128xf32>, vector<128x128xf32> -> vector<128x128xf32>
    %c0_3 = arith.constant 0 : index
    %c0_4 = arith.constant 0 : index
    %3 = vector.load %arg3[%c0_3, %c0_4] : memref<1x128xf32, #tpu.memory_space<vmem>>, vector<1x128xf32>
    %4 = vector.broadcast %3 : vector<1x128xf32> to vector<128x128xf32>
    %5 = arith.addf %2, %4 : vector<128x128xf32>
    %6 = math.sin %5 : vector<128x128xf32>
    %c0_5 = arith.constant 0 : index
    %c0_6 = arith.constant 0 : index
    %7 = vector.load %arg4[%c0_5, %c0_6] : memref<3x32xf32, #tpu.memory_space<vmem>>, vector<3x32xf32>
    %cst_7 = arith.constant dense<0.000000e+00> : vector<128x32xf32>
    %8 = tpu.matmul %0, %7, %cst_7 {dimension_numbers = #tpu.dot_dimension_numbers<[1], [0], [0], [1], [0, 0, 1, 1], [], []>} : vector<128x3xf32>, vector<3x32xf32>, vector<128x32xf32> -> vector<128x32xf32>
    %9 = arith.truncf %6 : vector<128x128xf32> to vector<128x128xbf16>
    %c0_8 = arith.constant 0 : index
    %c0_9 = arith.constant 0 : index
    %10 = vector.load %arg5[%c0_8, %c0_9] : memref<128x32xbf16, #tpu.memory_space<vmem>>, vector<128x32xbf16>
    %cst_10 = arith.constant dense<0.000000e+00> : vector<128x32xf32>
    %11 = tpu.matmul %9, %10, %cst_10 {dimension_numbers = #tpu.dot_dimension_numbers<[1], [0], [0], [1], [0, 0, 1, 1], [], []>} : vector<128x128xbf16>, vector<128x32xbf16>, vector<128x32xf32> -> vector<128x32xf32>
    %12 = arith.addf %8, %11 : vector<128x32xf32>
    %c0_11 = arith.constant 0 : index
    %c0_12 = arith.constant 0 : index
    %13 = vector.load %arg6[%c0_11, %c0_12] : memref<1x32xf32, #tpu.memory_space<vmem>>, vector<1x32xf32>
    %14 = vector.broadcast %13 : vector<1x32xf32> to vector<128x32xf32>
    %15 = arith.addf %12, %14 : vector<128x32xf32>
    %cst_13 = arith.constant 1.000000e+02 : f32
    %16 = vector.broadcast %cst_13 : f32 to vector<128x32xf32>
    %17 = arith.mulf %16, %15 : vector<128x32xf32>
    %cst_14 = arith.constant 2.000000e+01 : f32
    %18 = vector.broadcast %cst_14 : f32 to vector<128x32xf32>
    %19 = arith.minimumf %17, %18 : vector<128x32xf32>
    %20 = math.exp %19 : vector<128x32xf32>
    %21 = math.log1p %20 : vector<128x32xf32>
    %cst_15 = arith.constant 2.000000e+01 : f32
    %22 = vector.broadcast %cst_15 : f32 to vector<128x32xf32>
    %23 = arith.cmpf ogt, %17, %22 : vector<128x32xf32>
    %cst_16 = arith.constant 0.00999999977 : f32
    %24 = vector.broadcast %cst_16 : f32 to vector<128x32xf32>
    %25 = arith.mulf %21, %24 : vector<128x32xf32>
    %26 = arith.select %23, %15, %25 : vector<128x32xi1>, vector<128x32xf32>
    %27 = arith.truncf %26 : vector<128x32xf32> to vector<128x32xbf16>
    %c0_17 = arith.constant 0 : index
    %c0_18 = arith.constant 0 : index
    %c0_19 = arith.constant 0 : index
    %28 = vector.load %arg7[%c0_17, %c0_18, %c0_19] : memref<2x32x32xbf16, #tpu.memory_space<vmem>>, vector<1x32x32xbf16>
    %29 = vector.shape_cast %28 : vector<1x32x32xbf16> to vector<32x32xbf16>
    %cst_20 = arith.constant dense<0.000000e+00> : vector<128x32xf32>
    %30 = tpu.matmul %27, %29, %cst_20 {dimension_numbers = #tpu.dot_dimension_numbers<[1], [0], [0], [1], [0, 0, 1, 1], [], []>} : vector<128x32xbf16>, vector<32x32xbf16>, vector<128x32xf32> -> vector<128x32xf32>
    %c0_21 = arith.constant 0 : index
    %c0_22 = arith.constant 0 : index
    %c0_23 = arith.constant 0 : index
    %31 = vector.load %arg8[%c0_21, %c0_22, %c0_23] : memref<2x1x32xf32, #tpu.memory_space<vmem>>, vector<1x1x32xf32>
    %32 = vector.shape_cast %31 : vector<1x1x32xf32> to vector<1x32xf32>
    %33 = vector.broadcast %32 : vector<1x32xf32> to vector<128x32xf32>
    %34 = arith.addf %30, %33 : vector<128x32xf32>
    %cst_24 = arith.constant 1.000000e+02 : f32
    %35 = vector.broadcast %cst_24 : f32 to vector<128x32xf32>
    %36 = arith.mulf %35, %34 : vector<128x32xf32>
    %cst_25 = arith.constant 2.000000e+01 : f32
    %37 = vector.broadcast %cst_25 : f32 to vector<128x32xf32>
    %38 = arith.minimumf %36, %37 : vector<128x32xf32>
    %39 = math.exp %38 : vector<128x32xf32>
    %40 = math.log1p %39 : vector<128x32xf32>
    %cst_26 = arith.constant 2.000000e+01 : f32
    %41 = vector.broadcast %cst_26 : f32 to vector<128x32xf32>
    %42 = arith.cmpf ogt, %36, %41 : vector<128x32xf32>
    %cst_27 = arith.constant 0.00999999977 : f32
    %43 = vector.broadcast %cst_27 : f32 to vector<128x32xf32>
    %44 = arith.mulf %40, %43 : vector<128x32xf32>
    %45 = arith.select %42, %34, %44 : vector<128x32xi1>, vector<128x32xf32>
    %46 = arith.truncf %45 : vector<128x32xf32> to vector<128x32xbf16>
    %c1 = arith.constant 1 : index
    %c0_28 = arith.constant 0 : index
    %c0_29 = arith.constant 0 : index
    %47 = vector.load %arg7[%c1, %c0_28, %c0_29] : memref<2x32x32xbf16, #tpu.memory_space<vmem>>, vector<1x32x32xbf16>
    %48 = vector.shape_cast %47 : vector<1x32x32xbf16> to vector<32x32xbf16>
    %cst_30 = arith.constant dense<0.000000e+00> : vector<128x32xf32>
    %49 = tpu.matmul %46, %48, %cst_30 {dimension_numbers = #tpu.dot_dimension_numbers<[1], [0], [0], [1], [0, 0, 1, 1], [], []>} : vector<128x32xbf16>, vector<32x32xbf16>, vector<128x32xf32> -> vector<128x32xf32>
    %c1_31 = arith.constant 1 : index
    %c0_32 = arith.constant 0 : index
    %c0_33 = arith.constant 0 : index
    %50 = vector.load %arg8[%c1_31, %c0_32, %c0_33] : memref<2x1x32xf32, #tpu.memory_space<vmem>>, vector<1x1x32xf32>
    %51 = vector.shape_cast %50 : vector<1x1x32xf32> to vector<1x32xf32>
    %52 = vector.broadcast %51 : vector<1x32xf32> to vector<128x32xf32>
    %53 = arith.addf %49, %52 : vector<128x32xf32>
    %cst_34 = arith.constant 1.000000e+02 : f32
    %54 = vector.broadcast %cst_34 : f32 to vector<128x32xf32>
    %55 = arith.mulf %54, %53 : vector<128x32xf32>
    %cst_35 = arith.constant 2.000000e+01 : f32
    %56 = vector.broadcast %cst_35 : f32 to vector<128x32xf32>
    %57 = arith.minimumf %55, %56 : vector<128x32xf32>
    %58 = math.exp %57 : vector<128x32xf32>
    %59 = math.log1p %58 : vector<128x32xf32>
    %cst_36 = arith.constant 2.000000e+01 : f32
    %60 = vector.broadcast %cst_36 : f32 to vector<128x32xf32>
    %61 = arith.cmpf ogt, %55, %60 : vector<128x32xf32>
    %cst_37 = arith.constant 0.00999999977 : f32
    %62 = vector.broadcast %cst_37 : f32 to vector<128x32xf32>
    %63 = arith.mulf %59, %62 : vector<128x32xf32>
    %64 = arith.select %61, %53, %63 : vector<128x32xi1>, vector<128x32xf32>
    %c0_38 = arith.constant 0 : index
    %c0_39 = arith.constant 0 : index
    %65 = vector.load %arg9[%c0_38, %c0_39] : memref<1x32xf32, #tpu.memory_space<vmem>>, vector<1x32xf32>
    %66 = vector.broadcast %65 : vector<1x32xf32> to vector<128x32xf32>
    %67 = arith.mulf %64, %66 : vector<128x32xf32>
    %cst_40 = arith.constant dense<0.000000e+00> : vector<128xf32>
    %68 = vector.multi_reduction <add>, %67, %cst_40 [1] : vector<128x32xf32> to vector<128xf32>
    %69 = vector.shape_cast %68 : vector<128xf32> to vector<128x1xf32>
    %c0_41 = arith.constant 0 : index
    %c0_42 = arith.constant 0 : index
    %70 = vector.load %arg10[%c0_41, %c0_42] : memref<1x1xf32, #tpu.memory_space<vmem>>, vector<1x1xf32>
    %71 = vector.broadcast %70 : vector<1x1xf32> to vector<128x1xf32>
    %72 = arith.addf %69, %71 : vector<128x1xf32>
    %c0_43 = arith.constant 0 : index
    %c0_44 = arith.constant 0 : index
    %73 = vector.load %arg13[%c0_43, %c0_44] : memref<128x1xf32, #tpu.memory_space<vmem>>, vector<128x1xf32>
    tpu.vector_store %arg13[%c0_43, %c0_44], %72 {strides = array<i32>} : memref<128x1xf32, #tpu.memory_space<vmem>>, vector<128x1xf32>,
    %c0_45 = arith.constant 0 : index
    %c0_46 = arith.constant 0 : index
    %74 = vector.load %arg11[%c0_45, %c0_46] : memref<32x8xf32, #tpu.memory_space<vmem>>, vector<32x8xf32>
    %cst_47 = arith.constant dense<0.000000e+00> : vector<128x8xf32>
    %75 = tpu.matmul %64, %74, %cst_47 {dimension_numbers = #tpu.dot_dimension_numbers<[1], [0], [0], [1], [0, 0, 1, 1], [], []>} : vector<128x32xf32>, vector<32x8xf32>, vector<128x8xf32> -> vector<128x8xf32>
    %c0_48 = arith.constant 0 : index
    %c0_49 = arith.constant 0 : index
    %76 = vector.load %arg12[%c0_48, %c0_49] : memref<1x8xf32, #tpu.memory_space<vmem>>, vector<1x8xf32>
    %77 = vector.broadcast %76 : vector<1x8xf32> to vector<128x8xf32>
    %78 = arith.addf %75, %77 : vector<128x8xf32>
    %c0_50 = arith.constant 0 : index
    %c0_51 = arith.constant 0 : index
    %79 = vector.load %arg14[%c0_50, %c0_51] : memref<128x8xf32, #tpu.memory_space<vmem>>, vector<128x8xf32>
    tpu.vector_store %arg14[%c0_50, %c0_51], %78 {strides = array<i32>} : memref<128x8xf32, #tpu.memory_space<vmem>>, vector<128x8xf32>,
    return
  }
  func.func @transform_0(%arg0: i32) -> (i32, i32) {
    %c0_i32 = arith.constant 0 : i32
    %c0_i32_0 = arith.constant 0 : i32
    return %arg0, %c0_i32 : i32, i32
  }
  func.func @transform_1(%arg0: i32) -> (i32, i32) {
    %c0_i32 = arith.constant 0 : i32
    %c0_i32_0 = arith.constant 0 : i32
    %c0_i32_1 = arith.constant 0 : i32
    return %c0_i32, %c0_i32_0 : i32, i32
  }
  func.func @transform_2(%arg0: i32) -> (i32, i32) {
    %c0_i32 = arith.constant 0 : i32
    %c0_i32_0 = arith.constant 0 : i32
    %c0_i32_1 = arith.constant 0 : i32
    return %c0_i32, %c0_i32_0 : i32, i32
  }
  func.func @transform_3(%arg0: i32) -> (i32, i32) {
    %c0_i32 = arith.constant 0 : i32
    %c0_i32_0 = arith.constant 0 : i32
    %c0_i32_1 = arith.constant 0 : i32
    return %c0_i32, %c0_i32_0 : i32, i32
  }
  func.func @transform_4(%arg0: i32) -> (i32, i32) {
    %c0_i32 = arith.constant 0 : i32
    %c0_i32_0 = arith.constant 0 : i32
    %c0_i32_1 = arith.constant 0 : i32
    return %c0_i32, %c0_i32_0 : i32, i32
  }
  func.func @transform_5(%arg0: i32) -> (i32, i32) {
    %c0_i32 = arith.constant 0 : i32
    %c0_i32_0 = arith.constant 0 : i32
    %c0_i32_1 = arith.constant 0 : i32
    return %c0_i32, %c0_i32_0 : i32, i32
  }
  func.func @transform_6(%arg0: i32) -> (i32, i32, i32) {
    %c0_i32 = arith.constant 0 : i32
    %c0_i32_0 = arith.constant 0 : i32
    %c0_i32_1 = arith.constant 0 : i32
    %c0_i32_2 = arith.constant 0 : i32
    return %c0_i32, %c0_i32_0, %c0_i32_1 : i32, i32, i32
  }
  func.func @transform_7(%arg0: i32) -> (i32, i32, i32) {
    %c0_i32 = arith.constant 0 : i32
    %c0_i32_0 = arith.constant 0 : i32
    %c0_i32_1 = arith.constant 0 : i32
    %c0_i32_2 = arith.constant 0 : i32
    return %c0_i32, %c0_i32_0, %c0_i32_1 : i32, i32, i32
  }
  func.func @transform_8(%arg0: i32) -> (i32, i32) {
    %c0_i32 = arith.constant 0 : i32
    %c0_i32_0 = arith.constant 0 : i32
    %c0_i32_1 = arith.constant 0 : i32
    return %c0_i32, %c0_i32_0 : i32, i32
  }
  func.func @transform_9(%arg0: i32) -> (i32, i32) {
    %c0_i32 = arith.constant 0 : i32
    %c0_i32_0 = arith.constant 0 : i32
    %c0_i32_1 = arith.constant 0 : i32
    return %c0_i32, %c0_i32_0 : i32, i32
  }
  func.func @transform_10(%arg0: i32) -> (i32, i32) {
    %c0_i32 = arith.constant 0 : i32
    %c0_i32_0 = arith.constant 0 : i32
    %c0_i32_1 = arith.constant 0 : i32
    return %c0_i32, %c0_i32_0 : i32, i32
  }
  func.func @transform_11(%arg0: i32) -> (i32, i32) {
    %c0_i32 = arith.constant 0 : i32
    %c0_i32_0 = arith.constant 0 : i32
    %c0_i32_1 = arith.constant 0 : i32
    return %c0_i32, %c0_i32_0 : i32, i32
  }
  func.func @transform_12(%arg0: i32) -> (i32, i32) {
    %c0_i32 = arith.constant 0 : i32
    %c0_i32_0 = arith.constant 0 : i32
    return %arg0, %c0_i32 : i32, i32
  }
  func.func @transform_13(%arg0: i32) -> (i32, i32) {
    %c0_i32 = arith.constant 0 : i32
    %c0_i32_0 = arith.constant 0 : i32
    return %arg0, %c0_i32 : i32, i32
  }
}

</mosaic_0001>

<llo_original>
// kernel: squeeze.1
$region0: #{squeeze.1}
  %s0 = inlined_call_operand.vmem [shape: f32[128], index: 0, kind: input, shape index: {}]
  %s1 = inlined_call_operand.hbm [shape: f32[2,64], index: 1, kind: output, shape index: {}]
  $region1: #{squeeze.1} parent=0
    #allocation0 [shape = 'u8[1024]{0}', space=vmem, size = 0x400, scoped, tag = 'operand span for operand 1']
    #allocation1 [shape = 's32[1]{0}', space=sflag, size = 0x4, scoped, tag = 'scoped memory for squeeze.1']
    #allocation2 [shape = 'u8[4096]{0}', space=vmem, size = 0x1000, scoped, tag = 'scoped mem for output reshape']
    #allocation3 [shape = 'u8[4096]{0}', space=vmem, size = 0x1000, scoped, tag = 'scoped mem for input reshape']
    %2 = vsyncpa [#allocation1], 0
    %s4 = ssub.s32 2, 1
    %v5 = vld [vmem:[%s0] sm:%s4]
    %6 = vst [vmem:[#allocation3] sm:%s4] %v5
    %v7 = vld [vmem:[#allocation3] sm:$0x1]
    %vm8 = vcmask 523264
    %9 = vst.msk [vmem:[#allocation2] sm:$0x1] %vm8, %v7
    %v10 = vld [vmem:[#allocation3] sm:$0x1]
    %11 = vrot.lane.b32.xlu0 %v10, 64
    %v12 = vpop.permute.xlu0 %11
    %vm13 = vcmask 523264
    %s14 = scalar_lea.vmem [#allocation2], 1
    %15 = vst.msk [vmem:[%s14] sm:$0x1] %vm13, %v12
    %s17 = ssub.s32 4, 1
    %v18 = vld [vmem:[#allocation2] sm:%s17]
    %s20 = ssub.s32 4, 1
    %21 = vst [vmem:[#allocation0] sm:%s20] %v18
    %23 = vsyncadd [#allocation1], 0
    %s25 = sshll.u32 [#allocation0], 4
    %s26 = int_to_ptr.vmem [resolvable:$true] %s25
    %s27 = sshll.u32 %s1, 4
    %s28 = int_to_ptr.hbm [resolvable:$true] %s27
    %30 = dma.vmem_to_hbm [thread:$0]  %s26, 32, %s28, [#allocation1]
    %32 = dma.done [#allocation1], 32
    %33 = vsyncpa [#allocation1], 1

// kernel: _geometry_forward.1
$region0: #{_geometry_forward.1}
  #allocation0 [shape = 'u32[]', space=smem, size = 0x4, offset = 0x4, fixed_abs, tag = 'smem constant byte address 0x4 - core index']
  #allocation1 [shape = 'u32[72,128]{1,0:T(1,128)}', space=vmem, size = 0x9000, scoped, tag = 'internal scratch']
  #allocation2 [shape = 'f32[1,1]{1,0:T(1,128)S(1)}', space=vmem, size = 0x200, scoped, tag = 'scoped memory for _geometry_forward.1']
  %s0 = inlined_call_operand.vmem [shape: f32[128,3], index: 0, kind: input, shape index: {}]
  %s1 = inlined_call_operand.vmem [shape: f32[3,128], index: 1, kind: input, shape index: {}]
  %s2 = inlined_call_operand.vmem [shape: f32[1,128], index: 2, kind: input, shape index: {}]
  %s3 = inlined_call_operand.vmem [shape: f32[3,32], index: 3, kind: input, shape index: {}]
  %s4 = inlined_call_operand.vmem [shape: bf16[128,32], index: 4, kind: input, shape index: {}]
  %s5 = inlined_call_operand.vmem [shape: f32[1,32], index: 5, kind: input, shape index: {}]
  %s6 = inlined_call_operand.vmem [shape: bf16[2,32,32], index: 6, kind: input, shape index: {}]
  %s7 = inlined_call_operand.vmem [shape: f32[2,1,32], index: 7, kind: input, shape index: {}]
  %s8 = inlined_call_operand.vmem [shape: f32[1,32], index: 8, kind: input, shape index: {}]
  %s9 = inlined_call_operand.<no memory space> [shape: f32[1,1], index: 9, kind: input, shape index: {}]
  %s10 = inlined_call_operand.vmem [shape: f32[32,8], index: 10, kind: input, shape index: {}]
  %s11 = inlined_call_operand.vmem [shape: f32[1,8], index: 11, kind: input, shape index: {}]
  %s12 = inlined_call_operand.vmem [shape: f32[128,1], index: 12, kind: output, shape index: {0}]
  %s13 = inlined_call_operand.vmem [shape: f32[128,8], index: 13, kind: output, shape index: {1}]
  %14 = xla_tuple %s12, %s13
  %s15 = sld [smem:[#allocation0]]
  $region66: #{_geometry_forward.1} parent=0
    _
  %s17 = ssub.s32 1, %s15
  %s18 = scalar_select 0, %s17, %s15
  %v19 = vstv %s9
  %20 = vst [vmem:[#allocation2] sm:$0x1] %v19
  // Predicated region
  $region2: #{_geometry_forward.1} parent=0 // pred_check
    _
  $region3: #{_geometry_forward.1} parent=0 // pred_check_branch
    %22 = sbr.rel (0) target = $region5
  $region4: #{_geometry_forward.1} parent=0 // pred_region
    _
  $region5: #{_geometry_forward.1} parent=0 // pred_fallthru
    _
  // Predicated region
  $region6: #{_geometry_forward.1} parent=0 // pred_check
    _
  $region7: #{_geometry_forward.1} parent=0 // pred_check_branch
    %24 = sbr.rel (0) target = $region9
  $region8: #{_geometry_forward.1} parent=0 // pred_region
    _
  $region9: #{_geometry_forward.1} parent=0 // pred_fallthru
    _
  // Predicated region
  $region10: #{_geometry_forward.1} parent=0 // pred_check
    _
  $region11: #{_geometry_forward.1} parent=0 // pred_check_branch
    %26 = sbr.rel (0) target = $region13
  $region12: #{_geometry_forward.1} parent=0 // pred_region
    _
  $region13: #{_geometry_forward.1} parent=0 // pred_fallthru
    _
  // Predicated region
  $region14: #{_geometry_forward.1} parent=0 // pred_check
    _
  $region15: #{_geometry_forward.1} parent=0 // pred_check_branch
    %28 = sbr.rel (0) target = $region17
  $region16: #{_geometry_forward.1} parent=0 // pred_region
    _
  $region17: #{_geometry_forward.1} parent=0 // pred_fallthru
    _
  // Predicated region
  $region18: #{_geometry_forward.1} parent=0 // pred_check
    _
  $region19: #{_geometry_forward.1} parent=0 // pred_check_branch
    %30 = sbr.rel (0) target = $region21
  $region20: #{_geometry_forward.1} parent=0 // pred_region
    _
  $region21: #{_geometry_forward.1} parent=0 // pred_fallthru
    _
  // Predicated region
  $region22: #{_geometry_forward.1} parent=0 // pred_check
    _
  $region23: #{_geometry_forward.1} parent=0 // pred_check_branch
    %32 = sbr.rel (0) target = $region25
  $region24: #{_geometry_forward.1} parent=0 // pred_region
    _
  $region25: #{_geometry_forward.1} parent=0 // pred_fallthru
    _
  // Predicated region
  $region26: #{_geometry_forward.1} parent=0 // pred_check
    _
  $region27: #{_geometry_forward.1} parent=0 // pred_check_branch
    %34 = sbr.rel (0) target = $region29
  $region28: #{_geometry_forward.1} parent=0 // pred_region
    _
  $region29: #{_geometry_forward.1} parent=0 // pred_fallthru
    _
  // Predicated region
  $region30: #{_geometry_forward.1} parent=0 // pred_check
    _
  $region31: #{_geometry_forward.1} parent=0 // pred_check_branch
    %36 = sbr.rel (0) target = $region33
  $region32: #{_geometry_forward.1} parent=0 // pred_region
    _
  $region33: #{_geometry_forward.1} parent=0 // pred_fallthru
    _
  // Predicated region
  $region34: #{_geometry_forward.1} parent=0 // pred_check
    _
  $region35: #{_geometry_forward.1} parent=0 // pred_check_branch
    %38 = sbr.rel (0) target = $region37
  $region36: #{_geometry_forward.1} parent=0 // pred_region
    _
  $region37: #{_geometry_forward.1} parent=0 // pred_fallthru
    _
  // Predicated region
  $region38: #{_geometry_forward.1} parent=0 // pred_check
    _
  $region39: #{_geometry_forward.1} parent=0 // pred_check_branch
    %40 = sbr.rel (0) target = $region41
  $region40: #{_geometry_forward.1} parent=0 // pred_region
    _
  $region41: #{_geometry_forward.1} parent=0 // pred_fallthru
    _
  // Predicated region
  $region42: #{_geometry_forward.1} parent=0 // pred_check
    _
  $region43: #{_geometry_forward.1} parent=0 // pred_check_branch
    %42 = sbr.rel (0) target = $region45
  $region44: #{_geometry_forward.1} parent=0 // pred_region
    _
  $region45: #{_geometry_forward.1} parent=0 // pred_fallthru
    _
  // Predicated region
  $region46: #{_geometry_forward.1} parent=0 // pred_check
    _
  $region47: #{_geometry_forward.1} parent=0 // pred_check_branch
    %44 = sbr.rel (0) target = $region49
  $region48: #{_geometry_forward.1} parent=0 // pred_region
    _
  $region49: #{_geometry_forward.1} parent=0 // pred_fallthru
    _
  %v46 = vld [vmem:[%s0] sm:$0xff]
  %v47 = vld [vmem:[%s0 + $0x8] sm:$0xff]
  %v48 = vld [vmem:[%s0 + $0x10] sm:$0xff]
  %v49 = vld [vmem:[%s0 + $0x18] sm:$0xff]
  %v50 = vld [vmem:[%s0 + $0x20] sm:$0xff]
  %v51 = vld [vmem:[%s0 + $0x28] sm:$0xff]
  %v52 = vld [vmem:[%s0 + $0x30] sm:$0xff]
  %v53 = vld [vmem:[%s0 + $0x38] sm:$0xff]
  %v54 = vld [vmem:[%s0 + $0x40] sm:$0xff]
  %v55 = vld [vmem:[%s0 + $0x48] sm:$0xff]
  %v56 = vld [vmem:[%s0 + $0x50] sm:$0xff]
  %v57 = vld [vmem:[%s0 + $0x58] sm:$0xff]
  %v58 = vld [vmem:[%s0 + $0x60] sm:$0xff]
  %v59 = vld [vmem:[%s0 + $0x68] sm:$0xff]
  %v60 = vld [vmem:[%s0 + $0x70] sm:$0xff]
  %v61 = vld [vmem:[%s0 + $0x78] sm:$0xff]
  %v62 = vld [vmem:[%s1] sm:$0x7]
  %v63 = vld [vmem:[%s2] sm:$0x1]
  %v65 = vperm.slane %v63, 0
  %vm67 = vcmask 23552
  %v69 = vsel %vm67, %v46, 0
  %v72 = vsel %vm67, %v47, 0
  %v75 = vsel %vm67, %v48, 0
  %v78 = vsel %vm67, %v49, 0
  %v81 = vsel %vm67, %v50, 0
  %v84 = vsel %vm67, %v51, 0
  %v87 = vsel %vm67, %v52, 0
  %v90 = vsel %vm67, %v53, 0
  %v93 = vsel %vm67, %v54, 0
  %v96 = vsel %vm67, %v55, 0
  %v99 = vsel %vm67, %v56, 0
  %v102 = vsel %vm67, %v57, 0
  %v105 = vsel %vm67, %v58, 0
  %v108 = vsel %vm67, %v59, 0
  %v111 = vsel %vm67, %v60, 0
  %v114 = vsel %vm67, %v61, 0
  %vm116 = vcmask 1042432
  %v118 = vsel %vm116, %v62, 0
  %120 = vmatpush.msra.mxu0 0.0
  %121 = vmatpush.msra.mxu0 0.0
  %122 = vmatpush.msra.mxu0 0.0
  %123 = vmatpush.msra.mxu0 0.0
  %124 = vmatpush.msra.mxu0 0.0
  %125 = vmatpush.msra.mxu0 0.0
  %126 = vmatpush.msra.mxu0 0.0
  %127 = vmatpush.msra.mxu0 0.0
  %128 = vmatpush.msra.mxu0 0.0
  %129 = vmatpush.msra.mxu0 0.0
  %130 = vmatpush.msra.mxu0 0.0
  %131 = vmatpush.msra.mxu0 0.0
  %132 = vmatpush.msra.mxu0 0.0
  %133 = vmatpush.msra.mxu0 0.0
  %134 = vmatpush.msra.mxu0 0.0
  %135 = vmatpush.msra.mxu0 %v118
  %136 = vmatmul.f32.gmra.mxu0 %v69
  %v137 = vpop.f32.mrf.mxu0
  %v138 = vadd.f32 %v65, %v137
  %139 = vmatmul.f32.gmra.mxu0 %v72
  %v140 = vpop.f32.mrf.mxu0
  %v141 = vadd.f32 %v65, %v140
  %142 = vmatmul.f32.gmra.mxu0 %v75
  %v143 = vpop.f32.mrf.mxu0
  %v144 = vadd.f32 %v65, %v143
  %145 = vmatmul.f32.gmra.mxu0 %v78
  %v146 = vpop.f32.mrf.mxu0
  %v147 = vadd.f32 %v65, %v146
  %148 = vmatmul.f32.gmra.mxu0 %v81
  %v149 = vpop.f32.mrf.mxu0
  %v150 = vadd.f32 %v65, %v149
  %151 = vmatmul.f32.gmra.mxu0 %v84
  %v152 = vpop.f32.mrf.mxu0
  %v153 = vadd.f32 %v65, %v152
  %154 = vmatmul.f32.gmra.mxu0 %v87
  %v155 = vpop.f32.mrf.mxu0
  %v156 = vadd.f32 %v65, %v155
  %157 = vmatmul.f32.gmra.mxu0 %v90
  %v158 = vpop.f32.mrf.mxu0
  %v159 = vadd.f32 %v65, %v158
  %160 = vmatmul.f32.gmra.mxu0 %v93
  %v161 = vpop.f32.mrf.mxu0
  %v162 = vadd.f32 %v65, %v161
  %163 = vmatmul.f32.gmra.mxu0 %v96
  %v164 = vpop.f32.mrf.mxu0
  %v165 = vadd.f32 %v65, %v164
  %166 = vmatmul.f32.gmra.mxu0 %v99
  %v167 = vpop.f32.mrf.mxu0
  %v168 = vadd.f32 %v65, %v167
  %169 = vmatmul.f32.gmra.mxu0 %v102
  %v170 = vpop.f32.mrf.mxu0
  %v171 = vadd.f32 %v65, %v170
  %172 = vmatmul.f32.gmra.mxu0 %v105
  %v173 = vpop.f32.mrf.mxu0
  %v174 = vadd.f32 %v65, %v173
  %175 = vmatmul.f32.gmra.mxu0 %v108
  %v176 = vpop.f32.mrf.mxu0
  %v177 = vadd.f32 %v65, %v176
  %178 = vmatmul.f32.gmra.mxu0 %v111
  %v179 = vpop.f32.mrf.mxu0
  %v180 = vadd.f32 %v65, %v179
  %181 = vmatmul.f32.gmra.mxu0 %v114
  %v182 = vpop.f32.mrf.mxu0
  %v183 = vadd.f32 %v65, %v182
  %184 = vdwg.mxu0
  %v185 = vand.u32 2147483647, %v138
  %vm186 = vcmp.le.f32.partialorder %v185, 0.7853982
  %vm187 = vcmp.lt.s32.totalorder %v138, 0
  %v188 = vand.u32 %v138, 2139095040
  %v189 = vshrl.u32 %v188, 23
  %v190 = vsub.s32 %v189, 127
  %v191 = vand.u32 2147483647, %v138
  %v192 = vand.u32 %v191, 8388607
  %v193 = vor.u32 %v192, 8388608
  %v194 = vsub.s32 0, %v193
  %v195 = vadd.s32 %v190, 1
  %vm196 = vcmp.gt.s32.totalorder %v195, 0
  %v197 = vsel %vm196, %v195, 0
  %v198 = vshrl.u32 %v197, 5
  %v199 = vand.u32 %v197, 31
  %v200 = vsub.s32 32, %v199
  %v201 = vshrl.u32 683565275, %v200
  %v202 = vshll.u32 683565275, %v199
  %v203 = vshrl.u32 2475754826, %v200
  %v204 = vor.u32 %v202, %v203
  %v205 = vshll.u32 2475754826, %v199
  %v206 = vshrl.u32 2131351028, %v200
  %v207 = vor.u32 %v205, %v206
  %v208 = vshll.u32 2131351028, %v199
  %v209 = vshrl.u32 2102212464, %v200
  %v210 = vor.u32 %v208, %v209
  %v211 = vshll.u32 2102212464, %v199
  %v212 = vshrl.u32 920167782, %v200
  %v213 = vor.u32 %v211, %v212
  %v214 = vshll.u32 920167782, %v199
  %v215 = vshrl.u32 1326507024, %v200
  %v216 = vor.u32 %v214, %v215
  %vm217 = vcmp.lt.s32.totalorder %v198, 1
  %vm218 = vcmp.lt.s32.totalorder %v198, 2
  %vm219 = vcmp.lt.s32.totalorder %v198, 3
  %vm220 = vcmp.lt.s32.totalorder %v198, 4
  %v221 = vsel %vm217, %v201, %v204
  %v222 = vsel %vm220, %v210, 2102212464
  %v223 = vsel %vm219, %v207, %v222
  %v224 = vsel %vm218, %v221, %v223
  %v225 = vsel %vm217, %v204, %v207
  %v226 = vsel %vm220, %v213, 920167782
  %v227 = vsel %vm219, %v210, %v226
  %v228 = vsel %vm218, %v225, %v227
  %v229 = vsel %vm217, %v207, %v210
  %v230 = vsel %vm220, %v216, 1326507024
  %v231 = vsel %vm219, %v213, %v230
  %v232 = vsel %vm218, %v229, %v231
  %v233 = vshll.u32 %v193, 8
  %v234 = vand.u32 %v233, 65535
  %v235 = vshrl.u32 %v233, 16
  %v236 = vand.u32 %v232, 65535
  %v237 = vshrl.u32 %v232, 16
  %v238 = vmul.u32 %v234, %v236
  %v239 = vmul.u32 %v234, %v237
  %v240 = vmul.u32 %v235, %v236
  %v241 = vmul.u32 %v235, %v237
  %v242 = vshll.u32 %v239, 16
  %v243 = vshrl.u32 %v239, 16
  %v244 = vshll.u32 %v240, 16
  %v245 = vshrl.u32 %v240, 16
  %vm246 = vc.u32 %v238, %v242
  %v247 = vsel %vm246, 1, 0
  %v248 = vadd.s32 %v238, %v242
  %v249 = vadd.s32 %v241, %v247
  %vm250 = vc.u32 %v248, %v244
  %v251 = vsel %vm250, 1, 0
  %v252 = vadd.s32 %v248, %v244
  %v253 = vadd.s32 %v249, %v251
  %v254 = vadd.s32 %v253, %v243
  %v255 = vadd.s32 %v254, %v245
  %v256 = vand.u32 %v233, 65535
  %v257 = vshrl.u32 %v233, 16
  %v258 = vand.u32 %v228, 65535
  %v259 = vshrl.u32 %v228, 16
  %v260 = vmul.u32 %v256, %v258
  %v261 = vmul.u32 %v256, %v259
  %v262 = vmul.u32 %v257, %v258
  %v263 = vmul.u32 %v257, %v259
  %v264 = vshll.u32 %v261, 16
  %v265 = vshrl.u32 %v261, 16
  %v266 = vshll.u32 %v262, 16
  %v267 = vshrl.u32 %v262, 16
  %vm268 = vc.u32 %v260, %v264
  %v269 = vsel %vm268, 1, 0
  %v270 = vadd.s32 %v260, %v264
  %v271 = vadd.s32 %v263, %v269
  %vm272 = vc.u32 %v270, %v266
  %v273 = vsel %vm272, 1, 0
  %v274 = vadd.s32 %v270, %v266
  %v275 = vadd.s32 %v271, %v273
  %v276 = vadd.s32 %v275, %v265
  %v277 = vadd.s32 %v276, %v267
  %v278 = vmul.u32 %v233, %v224
  %v279 = vadd.s32 %v255, %v274
  %vm280 = vc.u32 %v255, %v274
  %v281 = vadd.s32 %v277, 1
  %v282 = vsel %vm280, %v281, %v277
  %v283 = vadd.s32 %v278, %v282
  %v284 = vadd.s32 %v283, 536870912
  %v285 = vshrl.u32 %v284, 30
  %v286 = vshll.u32 %v285, 30
  %v287 = vsub.s32 %v283, %v286
  %vm288 = vcmp.lt.s32.totalorder %v287, 0
  %v289 = vsub.s32 0, %v287
  %v290 = vsel %vm288, %v289, %v287
  %v291 = vclz %v290
  %v292 = vsub.s32 %v291, 2
  %vm293 = vcmp.gt.s32.totalorder 0, %v292
  %v294 = vsel %vm293, 0, %v292
  %v295 = vsub.s32 32, %v294
  %v296 = vshll.u32 %v287, %v294
  %v297 = vshrl.u32 %v279, %v295
  %v298 = vor.u32 %v296, %v297
  %v299 = vsub.s32 4294967266, %v294
  %v300 = vadd.s32 %v299, 127
  %v301 = vshll.u32 %v300, 23
  %v302 = vor.u32 4788187, %v301
  %v303 = vand.u32 2147483647, %v302
  %v305 = vcvt.s32.f32 %v298
  %v306 = vmul.f32 %v305, %v303
  %v307 = vxor.u32 %v306, 2147483648
  %v308 = vsel %vm187, %v307, %v306
  %v309 = vsub.s32 4, %v285
  %v310 = vsel %vm187, %v309, %v285
  %v311 = vsel %vm186, %v138, %v308
  %v312 = vsel %vm186, 0, %v310
  %v313 = vmul.f32 %v311, %v311
  %v314 = vmul.f32 %v313, -0.001358992
  %v315 = vadd.f32 %v314, 0.041655596
  %v316 = vmul.f32 %v313, %v315
  %v317 = vadd.f32 %v316, -0.4999988
  %v318 = vmul.f32 %v313, %v317
  %v319 = vadd.f32 1.0, %v318
  %v320 = vmul.f32 %v311, %v311
  %v321 = vmul.f32 %v320, -0.00019511016
  %v322 = vadd.f32 %v321, 0.008332121
  %v323 = vmul.f32 %v320, %v322
  %v324 = vadd.f32 %v323, -0.16666654
  %v325 = vmul.f32 %v320, %v324
  %v326 = vadd.f32 %v325, 1.0
  %v327 = vmul.f32 %v326, %v311
  %vm328 = vweird.f32 %v138
  %v329 = vadd.s32 %v312, 3
  %v330 = vand.u32 %v329, 3
  %vm331 = vcmp.lt.s32.totalorder %v330, 2
  %vm332 = vcmp.eq.s32.totalorder %v330, 0
  %v333 = vxor.u32 %v327, 2147483648
  %v334 = vsel %vm332, %v319, %v333
  %vm335 = vcmp.eq.s32.totalorder %v330, 2
  %v336 = vxor.u32 %v319, 2147483648
  %v337 = vsel %vm335, %v336, %v327
  %v338 = vsel %vm331, %v334, %v337
  %v339 = vsel %vm328, nan, %v338
  %v340 = vand.u32 2147483647, %v141
  %vm341 = vcmp.le.f32.partialorder %v340, 0.7853982
  %vm342 = vcmp.lt.s32.totalorder %v141, 0
  %v343 = vand.u32 %v141, 2139095040
  %v344 = vshrl.u32 %v343, 23
  %v345 = vsub.s32 %v344, 127
  %v346 = vand.u32 2147483647, %v141
  %v347 = vand.u32 %v346, 8388607
  %v348 = vor.u32 %v347, 8388608
  %v349 = vsub.s32 0, %v348
  %v350 = vadd.s32 %v345, 1
  %vm351 = vcmp.gt.s32.totalorder %v350, 0
  %v352 = vsel %vm351, %v350, 0
  %v353 = vshrl.u32 %v352, 5
  %v354 = vand.u32 %v352, 31
  %v355 = vsub.s32 32, %v354
  %v356 = vshrl.u32 683565275, %v355
  %v357 = vshll.u32 683565275, %v354
  %v358 = vshrl.u32 2475754826, %v355
  %v359 = vor.u32 %v357, %v358
  %v360 = vshll.u32 2475754826, %v354
  %v361 = vshrl.u32 2131351028, %v355
  %v362 = vor.u32 %v360, %v361
  %v363 = vshll.u32 2131351028, %v354
  %v364 = vshrl.u32 2102212464, %v355
  %v365 = vor.u32 %v363, %v364
  %v366 = vshll.u32 2102212464, %v354
  %v367 = vshrl.u32 920167782, %v355
  %v368 = vor.u32 %v366, %v367
  %v369 = vshll.u32 920167782, %v354
  %v370 = vshrl.u32 1326507024, %v355
  %v371 = vor.u32 %v369, %v370
  %vm372 = vcmp.lt.s32.totalorder %v353, 1
  %vm373 = vcmp.lt.s32.totalorder %v353, 2
  %vm374 = vcmp.lt.s32.totalorder %v353, 3
  %vm375 = vcmp.lt.s32.totalorder %v353, 4
  %v376 = vsel %vm372, %v356, %v359
  %v377 = vsel %vm375, %v365, 2102212464
  %v378 = vsel %vm374, %v362, %v377
  %v379 = vsel %vm373, %v376, %v378
  %v380 = vsel %vm372, %v359, %v362
  %v381 = vsel %vm375, %v368, 920167782
  %v382 = vsel %vm374, %v365, %v381
  %v383 = vsel %vm373, %v380, %v382
  %v384 = vsel %vm372, %v362, %v365
  %v385 = vsel %vm375, %v371, 1326507024
  %v386 = vsel %vm374, %v368, %v385
  %v387 = vsel %vm373, %v384, %v386
  %v388 = vshll.u32 %v348, 8
  %v389 = vand.u32 %v388, 65535
  %v390 = vshrl.u32 %v388, 16
  %v391 = vand.u32 %v387, 65535
  %v392 = vshrl.u32 %v387, 16
  %v393 = vmul.u32 %v389, %v391
  %v394 = vmul.u32 %v389, %v392
  %v395 = vmul.u32 %v390, %v391
  %v396 = vmul.u32 %v390, %v392
  %v397 = vshll.u32 %v394, 16
  %v398 = vshrl.u32 %v394, 16
  %v399 = vshll.u32 %v395, 16
  %v400 = vshrl.u32 %v395, 16
  %vm401 = vc.u32 %v393, %v397
  %v402 = vsel %vm401, 1, 0
  %v403 = vadd.s32 %v393, %v397
  %v404 = vadd.s32 %v396, %v402
  %vm405 = vc.u32 %v403, %v399
  %v406 = vsel %vm405, 1, 0
  %v407 = vadd.s32 %v403, %v399
  %v408 = vadd.s32 %v404, %v406
  %v409 = vadd.s32 %v408, %v398
  %v410 = vadd.s32 %v409, %v400
  %v411 = vand.u32 %v388, 65535
  %v412 = vshrl.u32 %v388, 16
  %v413 = vand.u32 %v383, 65535
  %v414 = vshrl.u32 %v383, 16
  %v415 = vmul.u32 %v411, %v413
  %v416 = vmul.u32 %v411, %v414
  %v417 = vmul.u32 %v412, %v413
  %v418 = vmul.u32 %v412, %v414
  %v419 = vshll.u32 %v416, 16
  %v420 = vshrl.u32 %v416, 16
  %v421 = vshll.u32 %v417, 16
  %v422 = vshrl.u32 %v417, 16
  %vm423 = vc.u32 %v415, %v419
  %v424 = vsel %vm423, 1, 0
  %v425 = vadd.s32 %v415, %v419
  %v426 = vadd.s32 %v418, %v424
  %vm427 = vc.u32 %v425, %v421
  %v428 = vsel %vm427, 1, 0
  %v429 = vadd.s32 %v425, %v421
  %v430 = vadd.s32 %v426, %v428
  %v431 = vadd.s32 %v430, %v420
  %v432 = vadd.s32 %v431, %v422
  %v433 = vmul.u32 %v388, %v379
  %v434 = vadd.s32 %v410, %v429
  %vm435 = vc.u32 %v410, %v429
  %v436 = vadd.s32 %v432, 1
  %v437 = vsel %vm435, %v436, %v432
  %v438 = vadd.s32 %v433, %v437
  %v439 = vadd.s32 %v438, 536870912
  %v440 = vshrl.u32 %v439, 30
  %v441 = vshll.u32 %v440, 30
  %v442 = vsub.s32 %v438, %v441
  %vm443 = vcmp.lt.s32.totalorder %v442, 0
  %v444 = vsub.s32 0, %v442
  %v445 = vsel %vm443, %v444, %v442
  %v446 = vclz %v445
  %v447 = vsub.s32 %v446, 2
  %vm448 = vcmp.gt.s32.totalorder 0, %v447
  %v449 = vsel %vm448, 0, %v447
  %v450 = vsub.s32 32, %v449
  %v451 = vshll.u32 %v442, %v449
  %v452 = vshrl.u32 %v434, %v450
  %v453 = vor.u32 %v451, %v452
  %v454 = vsub.s32 4294967266, %v449
  %v455 = vadd.s32 %v454, 127
  %v456 = vshll.u32 %v455, 23
  %v457 = vor.u32 4788187, %v456
  %v458 = vand.u32 2147483647, %v457
  %v460 = vcvt.s32.f32 %v453
  %v461 = vmul.f32 %v460, %v458
  %v462 = vxor.u32 %v461, 2147483648
  %v463 = vsel %vm342, %v462, %v461
  %v464 = vsub.s32 4, %v440
  %v465 = vsel %vm342, %v464, %v440
  %v466 = vsel %vm341, %v141, %v463
  %v467 = vsel %vm341, 0, %v465
  %v468 = vmul.f32 %v466, %v466
  %v469 = vmul.f32 %v468, -0.001358992
  %v470 = vadd.f32 %v469, 0.041655596
  %v471 = vmul.f32 %v468, %v470
  %v472 = vadd.f32 %v471, -0.4999988
  %v473 = vmul.f32 %v468, %v472
  %v474 = vadd.f32 1.0, %v473
  %v475 = vmul.f32 %v466, %v466
  %v476 = vmul.f32 %v475, -0.00019511016
  %v477 = vadd.f32 %v476, 0.008332121
  %v478 = vmul.f32 %v475, %v477
  %v479 = vadd.f32 %v478, -0.16666654
  %v480 = vmul.f32 %v475, %v479
  %v481 = vadd.f32 %v480, 1.0
  %v482 = vmul.f32 %v481, %v466
  %vm483 = vweird.f32 %v141
  %v484 = vadd.s32 %v467, 3
  %v485 = vand.u32 %v484, 3
  %vm486 = vcmp.lt.s32.totalorder %v485, 2
  %vm487 = vcmp.eq.s32.totalorder %v485, 0
  %v488 = vxor.u32 %v482, 2147483648
  %v489 = vsel %vm487, %v474, %v488
  %vm490 = vcmp.eq.s32.totalorder %v485, 2
  %v491 = vxor.u32 %v474, 2147483648
  %v492 = vsel %vm490, %v491, %v482
  %v493 = vsel %vm486, %v489, %v492
  %v494 = vsel %vm483, nan, %v493
  %v495 = vand.u32 2147483647, %v144
  %vm496 = vcmp.le.f32.partialorder %v495, 0.7853982
  %vm497 = vcmp.lt.s32.totalorder %v144, 0
  %v498 = vand.u32 %v144, 2139095040
  %v499 = vshrl.u32 %v498, 23
  %v500 = vsub.s32 %v499, 127
  %v501 = vand.u32 2147483647, %v144
  %v502 = vand.u32 %v501, 8388607
  %v503 = vor.u32 %v502, 8388608
  %v504 = vsub.s32 0, %v503
  %v505 = vadd.s32 %v500, 1
  %vm506 = vcmp.gt.s32.totalorder %v505, 0
  %v507 = vsel %vm506, %v505, 0
  %v508 = vshrl.u32 %v507, 5
  %v509 = vand.u32 %v507, 31
  %v510 = vsub.s32 32, %v509
  %v511 = vshrl.u32 683565275, %v510
  %v512 = vshll.u32 683565275, %v509
  %v513 = vshrl.u32 2475754826, %v510
  %v514 = vor.u32 %v512, %v513
  %v515 = vshll.u32 2475754826, %v509
  %v516 = vshrl.u32 2131351028, %v510
  %v517 = vor.u32 %v515, %v516
  %v518 = vshll.u32 2131351028, %v509
  %v519 = vshrl.u32 2102212464, %v510
  %v520 = vor.u32 %v518, %v519
  %v521 = vshll.u32 2102212464, %v509
  %v522 = vshrl.u32 920167782, %v510
  %v523 = vor.u32 %v521, %v522
  %v524 = vshll.u32 920167782, %v509
  %v525 = vshrl.u32 1326507024, %v510
  %v526 = vor.u32 %v524, %v525
  %vm527 = vcmp.lt.s32.totalorder %v508, 1
  %vm528 = vcmp.lt.s32.totalorder %v508, 2
  %vm529 = vcmp.lt.s32.totalorder %v508, 3
  %vm530 = vcmp.lt.s32.totalorder %v508, 4
  %v531 = vsel %vm527, %v511, %v514
  %v532 = vsel %vm530, %v520, 2102212464
  %v533 = vsel %vm529, %v517, %v532
  %v534 = vsel %vm528, %v531, %v533
  %v535 = vsel %vm527, %v514, %v517
  %v536 = vsel %vm530, %v523, 920167782
  %v537 = vsel %vm529, %v520, %v536
  %v538 = vsel %vm528, %v535, %v537
  %v539 = vsel %vm527, %v517, %v520
  %v540 = vsel %vm530, %v526, 1326507024
  %v541 = vsel %vm529, %v523, %v540
  %v542 = vsel %vm528, %v539, %v541
  %v543 = vshll.u32 %v503, 8
  %v544 = vand.u32 %v543, 65535
  %v545 = vshrl.u32 %v543, 16
  %v546 = vand.u32 %v542, 65535
  %v547 = vshrl.u32 %v542, 16
  %v548 = vmul.u32 %v544, %v546
  %v549 = vmul.u32 %v544, %v547
  %v550 = vmul.u32 %v545, %v546
  %v551 = vmul.u32 %v545, %v547
  %v552 = vshll.u32 %v549, 16
  %v553 = vshrl.u32 %v549, 16
  %v554 = vshll.u32 %v550, 16
  %v555 = vshrl.u32 %v550, 16
  %vm556 = vc.u32 %v548, %v552
  %v557 = vsel %vm556, 1, 0
  %v558 = vadd.s32 %v548, %v552
  %v559 = vadd.s32 %v551, %v557
  %vm560 = vc.u32 %v558, %v554
  %v561 = vsel %vm560, 1, 0
  %v562 = vadd.s32 %v558, %v554
  %v563 = vadd.s32 %v559, %v561
  %v564 = vadd.s32 %v563, %v553
  %v565 = vadd.s32 %v564, %v555
  %v566 = vand.u32 %v543, 65535
  %v567 = vshrl.u32 %v543, 16
  %v568 = vand.u32 %v538, 65535
  %v569 = vshrl.u32 %v538, 16
  %v570 = vmul.u32 %v566, %v568
  %v571 = vmul.u32 %v566, %v569
  %v572 = vmul.u32 %v567, %v568
  %v573 = vmul.u32 %v567, %v569
  %v574 = vshll.u32 %v571, 16
  %v575 = vshrl.u32 %v571, 16
  %v576 = vshll.u32 %v572, 16
  %v577 = vshrl.u32 %v572, 16
  %vm578 = vc.u32 %v570, %v574
  %v579 = vsel %vm578, 1, 0
  %v580 = vadd.s32 %v570, %v574
  %v581 = vadd.s32 %v573, %v579
  %vm582 = vc.u32 %v580, %v576
  %v583 = vsel %vm582, 1, 0
  %v584 = vadd.s32 %v580, %v576
  %v585 = vadd.s32 %v581, %v583
  %v586 = vadd.s32 %v585, %v575
  %v587 = vadd.s32 %v586, %v577
  %v588 = vmul.u32 %v543, %v534
  %v589 = vadd.s32 %v565, %v584
  %vm590 = vc.u32 %v565, %v584
  %v591 = vadd.s32 %v587, 1
  %v592 = vsel %vm590, %v591, %v587
  %v593 = vadd.s32 %v588, %v592
  %v594 = vadd.s32 %v593, 536870912
  %v595 = vshrl.u32 %v594, 30
  %v596 = vshll.u32 %v595, 30
  %v597 = vsub.s32 %v593, %v596
  %vm598 = vcmp.lt.s32.totalorder %v597, 0
  %v599 = vsub.s32 0, %v597
  %v600 = vsel %vm598, %v599, %v597
  %v601 = vclz %v600
  %v602 = vsub.s32 %v601, 2
  %vm603 = vcmp.gt.s32.totalorder 0, %v602
  %v604 = vsel %vm603, 0, %v602
  %v605 = vsub.s32 32, %v604
  %v606 = vshll.u32 %v597, %v604
  %v607 = vshrl.u32 %v589, %v605
  %v608 = vor.u32 %v606, %v607
  %v609 = vsub.s32 4294967266, %v604
  %v610 = vadd.s32 %v609, 127
  %v611 = vshll.u32 %v610, 23
  %v612 = vor.u32 4788187, %v611
  %v613 = vand.u32 2147483647, %v612
  %v615 = vcvt.s32.f32 %v608
  %v616 = vmul.f32 %v615, %v613
  %v617 = vxor.u32 %v616, 2147483648
  %v618 = vsel %vm497, %v617, %v616
  %v619 = vsub.s32 4, %v595
  %v620 = vsel %vm497, %v619, %v595
  %v621 = vsel %vm496, %v144, %v618
  %v622 = vsel %vm496, 0, %v620
  %v623 = vmul.f32 %v621, %v621
  %v624 = vmul.f32 %v623, -0.001358992
  %v625 = vadd.f32 %v624, 0.041655596
  %v626 = vmul.f32 %v623, %v625
  %v627 = vadd.f32 %v626, -0.4999988
  %v628 = vmul.f32 %v623, %v627
  %v629 = vadd.f32 1.0, %v628
  %v630 = vmul.f32 %v621, %v621
  %v631 = vmul.f32 %v630, -0.00019511016
  %v632 = vadd.f32 %v631, 0.008332121
  %v633 = vmul.f32 %v630, %v632
  %v634 = vadd.f32 %v633, -0.16666654
  %v635 = vmul.f32 %v630, %v634
  %v636 = vadd.f32 %v635, 1.0
  %v637 = vmul.f32 %v636, %v621
  %vm638 = vweird.f32 %v144
  %v639 = vadd.s32 %v622, 3
  %v640 = vand.u32 %v639, 3
  %vm641 = vcmp.lt.s32.totalorder %v640, 2
  %vm642 = vcmp.eq.s32.totalorder %v640, 0
  %v643 = vxor.u32 %v637, 2147483648
  %v644 = vsel %vm642, %v629, %v643
  %vm645 = vcmp.eq.s32.totalorder %v640, 2
  %v646 = vxor.u32 %v629, 2147483648
  %v647 = vsel %vm645, %v646, %v637
  %v648 = vsel %vm641, %v644, %v647
  %v649 = vsel %vm638, nan, %v648
  %v650 = vand.u32 2147483647, %v147
  %vm651 = vcmp.le.f32.partialorder %v650, 0.7853982
  %vm652 = vcmp.lt.s32.totalorder %v147, 0
  %v653 = vand.u32 %v147, 2139095040
  %v654 = vshrl.u32 %v653, 23
  %v655 = vsub.s32 %v654, 127
  %v656 = vand.u32 2147483647, %v147
  %v657 = vand.u32 %v656, 8388607
  %v658 = vor.u32 %v657, 8388608
  %v659 = vsub.s32 0, %v658
  %v660 = vadd.s32 %v655, 1
  %vm661 = vcmp.gt.s32.totalorder %v660, 0
  %v662 = vsel %vm661, %v660, 0
  %v663 = vshrl.u32 %v662, 5
  %v664 = vand.u32 %v662, 31
  %v665 = vsub.s32 32, %v664
  %v666 = vshrl.u32 683565275, %v665
  %v667 = vshll.u32 683565275, %v664
  %v668 = vshrl.u32 2475754826, %v665
  %v669 = vor.u32 %v667, %v668
  %v670 = vshll.u32 2475754826, %v664
  %v671 = vshrl.u32 2131351028, %v665
  %v672 = vor.u32 %v670, %v671
  %v673 = vshll.u32 2131351028, %v664
  %v674 = vshrl.u32 2102212464, %v665
  %v675 = vor.u32 %v673, %v674
  %v676 = vshll.u32 2102212464, %v664
  %v677 = vshrl.u32 920167782, %v665
  %v678 = vor.u32 %v676, %v677
  %v679 = vshll.u32 920167782, %v664
  %v680 = vshrl.u32 1326507024, %v665
  %v681 = vor.u32 %v679, %v680
  %vm682 = vcmp.lt.s32.totalorder %v663, 1
  %vm683 = vcmp.lt.s32.totalorder %v663, 2
  %vm684 = vcmp.lt.s32.totalorder %v663, 3
  %vm685 = vcmp.lt.s32.totalorder %v663, 4
  %v686 = vsel %vm682, %v666, %v669
  %v687 = vsel %vm685, %v675, 2102212464
  %v688 = vsel %vm684, %v672, %v687
  %v689 = vsel %vm683, %v686, %v688
  %v690 = vsel %vm682, %v669, %v672
  %v691 = vsel %vm685, %v678, 920167782
  %v692 = vsel %vm684, %v675, %v691
  %v693 = vsel %vm683, %v690, %v692
  %v694 = vsel %vm682, %v672, %v675
  %v695 = vsel %vm685, %v681, 1326507024
  %v696 = vsel %vm684, %v678, %v695
  %v697 = vsel %vm683, %v694, %v696
  %v698 = vshll.u32 %v658, 8
  %v699 = vand.u32 %v698, 65535
  %v700 = vshrl.u32 %v698, 16
  %v701 = vand.u32 %v697, 65535
  %v702 = vshrl.u32 %v697, 16
  %v703 = vmul.u32 %v699, %v701
  %v704 = vmul.u32 %v699, %v702
  %v705 = vmul.u32 %v700, %v701
  %v706 = vmul.u32 %v700, %v702
  %v707 = vshll.u32 %v704, 16
  %v708 = vshrl.u32 %v704, 16
  %v709 = vshll.u32 %v705, 16
  %v710 = vshrl.u32 %v705, 16
  %vm711 = vc.u32 %v703, %v707
  %v712 = vsel %vm711, 1, 0
  %v713 = vadd.s32 %v703, %v707
  %v714 = vadd.s32 %v706, %v712
  %vm715 = vc.u32 %v713, %v709
  %v716 = vsel %vm715, 1, 0
  %v717 = vadd.s32 %v713, %v709
  %v718 = vadd.s32 %v714, %v716
  %v719 = vadd.s32 %v718, %v708
  %v720 = vadd.s32 %v719, %v710
  %v721 = vand.u32 %v698, 65535
  %v722 = vshrl.u32 %v698, 16
  %v723 = vand.u32 %v693, 65535
  %v724 = vshrl.u32 %v693, 16
  %v725 = vmul.u32 %v721, %v723
  %v726 = vmul.u32 %v721, %v724
  %v727 = vmul.u32 %v722, %v723
  %v728 = vmul.u32 %v722, %v724
  %v729 = vshll.u32 %v726, 16
  %v730 = vshrl.u32 %v726, 16
  %v731 = vshll.u32 %v727, 16
  %v732 = vshrl.u32 %v727, 16
  %vm733 = vc.u32 %v725, %v729
  %v734 = vsel %vm733, 1, 0
  %v735 = vadd.s32 %v725, %v729
  %v736 = vadd.s32 %v728, %v734
  %vm737 = vc.u32 %v735, %v731
  %v738 = vsel %vm737, 1, 0
  %v739 = vadd.s32 %v735, %v731
  %v740 = vadd.s32 %v736, %v738
  %v741 = vadd.s32 %v740, %v730
  %v742 = vadd.s32 %v741, %v732
  %v743 = vmul.u32 %v698, %v689
  %v744 = vadd.s32 %v720, %v739
  %vm745 = vc.u32 %v720, %v739
  %v746 = vadd.s32 %v742, 1
  %v747 = vsel %vm745, %v746, %v742
  %v748 = vadd.s32 %v743, %v747
  %v749 = vadd.s32 %v748, 536870912
  %v750 = vshrl.u32 %v749, 30
  %v751 = vshll.u32 %v750, 30
  %v752 = vsub.s32 %v748, %v751
  %vm753 = vcmp.lt.s32.totalorder %v752, 0
  %v754 = vsub.s32 0, %v752
  %v755 = vsel %vm753, %v754, %v752
  %v756 = vclz %v755
  %v757 = vsub.s32 %v756, 2
  %vm758 = vcmp.gt.s32.totalorder 0, %v757
  %v759 = vsel %vm758, 0, %v757
  %v760 = vsub.s32 32, %v759
  %v761 = vshll.u32 %v752, %v759
  %v762 = vshrl.u32 %v744, %v760
  %v763 = vor.u32 %v761, %v762
  %v764 = vsub.s32 4294967266, %v759
  %v765 = vadd.s32 %v764, 127
  %v766 = vshll.u32 %v765, 23
  %v767 = vor.u32 4788187, %v766
  %v768 = vand.u32 2147483647, %v767
  %v770 = vcvt.s32.f32 %v763
  %v771 = vmul.f32 %v770, %v768
  %v772 = vxor.u32 %v771, 2147483648
  %v773 = vsel %vm652, %v772, %v771
  %v774 = vsub.s32 4, %v750
  %v775 = vsel %vm652, %v774, %v750
  %v776 = vsel %vm651, %v147, %v773
  %v777 = vsel %vm651, 0, %v775
  %v778 = vmul.f32 %v776, %v776
  %v779 = vmul.f32 %v778, -0.001358992
  %v780 = vadd.f32 %v779, 0.041655596
  %v781 = vmul.f32 %v778, %v780
  %v782 = vadd.f32 %v781, -0.4999988
  %v783 = vmul.f32 %v778, %v782
  %v784 = vadd.f32 1.0, %v783
  %v785 = vmul.f32 %v776, %v776
  %v786 = vmul.f32 %v785, -0.00019511016
  %v787 = vadd.f32 %v786, 0.008332121
  %v788 = vmul.f32 %v785, %v787
  %v789 = vadd.f32 %v788, -0.16666654
  %v790 = vmul.f32 %v785, %v789
  %v791 = vadd.f32 %v790, 1.0
  %v792 = vmul.f32 %v791, %v776
  %vm793 = vweird.f32 %v147
  %v794 = vadd.s32 %v777, 3
  %v795 = vand.u32 %v794, 3
  %vm796 = vcmp.lt.s32.totalorder %v795, 2
  %vm797 = vcmp.eq.s32.totalorder %v795, 0
  %v798 = vxor.u32 %v792, 2147483648
  %v799 = vsel %vm797, %v784, %v798
  %vm800 = vcmp.eq.s32.totalorder %v795, 2
  %v801 = vxor.u32 %v784, 2147483648
  %v802 = vsel %vm800, %v801, %v792
  %v803 = vsel %vm796, %v799, %v802
  %v804 = vsel %vm793, nan, %v803
  %v805 = vand.u32 2147483647, %v150
  %vm806 = vcmp.le.f32.partialorder %v805, 0.7853982
  %vm807 = vcmp.lt.s32.totalorder %v150, 0
  %v808 = vand.u32 %v150, 2139095040
  %v809 = vshrl.u32 %v808, 23
  %v810 = vsub.s32 %v809, 127
  %v811 = vand.u32 2147483647, %v150
  %v812 = vand.u32 %v811, 8388607
  %v813 = vor.u32 %v812, 8388608
  %v814 = vsub.s32 0, %v813
  %v815 = vadd.s32 %v810, 1
  %vm816 = vcmp.gt.s32.totalorder %v815, 0
  %v817 = vsel %vm816, %v815, 0
  %v818 = vshrl.u32 %v817, 5
  %v819 = vand.u32 %v817, 31
  %v820 = vsub.s32 32, %v819
  %v821 = vshrl.u32 683565275, %v820
  %v822 = vshll.u32 683565275, %v819
  %v823 = vshrl.u32 2475754826, %v820
  %v824 = vor.u32 %v822, %v823
  %v825 = vshll.u32 2475754826, %v819
  %v826 = vshrl.u32 2131351028, %v820
  %v827 = vor.u32 %v825, %v826
  %v828 = vshll.u32 2131351028, %v819
  %v829 = vshrl.u32 2102212464, %v820
  %v830 = vor.u32 %v828, %v829
  %v831 = vshll.u32 2102212464, %v819
  %v832 = vshrl.u32 920167782, %v820
  %v833 = vor.u32 %v831, %v832
  %v834 = vshll.u32 920167782, %v819
  %v835 = vshrl.u32 1326507024, %v820
  %v836 = vor.u32 %v834, %v835
  %vm837 = vcmp.lt.s32.totalorder %v818, 1
  %vm838 = vcmp.lt.s32.totalorder %v818, 2
  %vm839 = vcmp.lt.s32.totalorder %v818, 3
  %vm840 = vcmp.lt.s32.totalorder %v818, 4
  %v841 = vsel %vm837, %v821, %v824
  %v842 = vsel %vm840, %v830, 2102212464
  %v843 = vsel %vm839, %v827, %v842
  %v844 = vsel %vm838, %v841, %v843
  %v845 = vsel %vm837, %v824, %v827
  %v846 = vsel %vm840, %v833, 920167782
  %v847 = vsel %vm839, %v830, %v846
  %v848 = vsel %vm838, %v845, %v847
  %v849 = vsel %vm837, %v827, %v830
  %v850 = vsel %vm840, %v836, 1326507024
  %v851 = vsel %vm839, %v833, %v850
  %v852 = vsel %vm838, %v849, %v851
  %v853 = vshll.u32 %v813, 8
  %v854 = vand.u32 %v853, 65535
  %v855 = vshrl.u32 %v853, 16
  %v856 = vand.u32 %v852, 65535
  %v857 = vshrl.u32 %v852, 16
  %v858 = vmul.u32 %v854, %v856
  %v859 = vmul.u32 %v854, %v857
  %v860 = vmul.u32 %v855, %v856
  %v861 = vmul.u32 %v855, %v857
  %v862 = vshll.u32 %v859, 16
  %v863 = vshrl.u32 %v859, 16
  %v864 = vshll.u32 %v860, 16
  %v865 = vshrl.u32 %v860, 16
  %vm866 = vc.u32 %v858, %v862
  %v867 = vsel %vm866, 1, 0
  %v868 = vadd.s32 %v858, %v862
  %v869 = vadd.s32 %v861, %v867
  %vm870 = vc.u32 %v868, %v864
  %v871 = vsel %vm870, 1, 0
  %v872 = vadd.s32 %v868, %v864
  %v873 = vadd.s32 %v869, %v871
  %v874 = vadd.s32 %v873, %v863
  %v875 = vadd.s32 %v874, %v865
  %v876 = vand.u32 %v853, 65535
  %v877 = vshrl.u32 %v853, 16
  %v878 = vand.u32 %v848, 65535
  %v879 = vshrl.u32 %v848, 16
  %v880 = vmul.u32 %v876, %v878
  %v881 = vmul.u32 %v876, %v879
  %v882 = vmul.u32 %v877, %v878
  %v883 = vmul.u32 %v877, %v879
  %v884 = vshll.u32 %v881, 16
  %v885 = vshrl.u32 %v881, 16
  %v886 = vshll.u32 %v882, 16
  %v887 = vshrl.u32 %v882, 16
  %vm888 = vc.u32 %v880, %v884
  %v889 = vsel %vm888, 1, 0
  %v890 = vadd.s32 %v880, %v884
  %v891 = vadd.s32 %v883, %v889
  %vm892 = vc.u32 %v890, %v886
  %v893 = vsel %vm892, 1, 0
  %v894 = vadd.s32 %v890, %v886
  %v895 = vadd.s32 %v891, %v893
  %v896 = vadd.s32 %v895, %v885
  %v897 = vadd.s32 %v896, %v887
  %v898 = vmul.u32 %v853, %v844
  %v899 = vadd.s32 %v875, %v894
  %vm900 = vc.u32 %v875, %v894
  %v901 = vadd.s32 %v897, 1
  %v902 = vsel %vm900, %v901, %v897
  %v903 = vadd.s32 %v898, %v902
  %v904 = vadd.s32 %v903, 536870912
  %v905 = vshrl.u32 %v904, 30
  %v906 = vshll.u32 %v905, 30
  %v907 = vsub.s32 %v903, %v906
  %vm908 = vcmp.lt.s32.totalorder %v907, 0
  %v909 = vsub.s32 0, %v907
  %v910 = vsel %vm908, %v909, %v907
  %v911 = vclz %v910
  %v912 = vsub.s32 %v911, 2
  %vm913 = vcmp.gt.s32.totalorder 0, %v912
  %v914 = vsel %vm913, 0, %v912
  %v915 = vsub.s32 32, %v914
  %v916 = vshll.u32 %v907, %v914
  %v917 = vshrl.u32 %v899, %v915
  %v918 = vor.u32 %v916, %v917
  %v919 = vsub.s32 4294967266, %v914
  %v920 = vadd.s32 %v919, 127
  %v921 = vshll.u32 %v920, 23
  %v922 = vor.u32 4788187, %v921
  %v923 = vand.u32 2147483647, %v922
  %v925 = vcvt.s32.f32 %v918
  %v926 = vmul.f32 %v925, %v923
  %v927 = vxor.u32 %v926, 2147483648
  %v928 = vsel %vm807, %v927, %v926
  %v929 = vsub.s32 4, %v905
  %v930 = vsel %vm807, %v929, %v905
  %v931 = vsel %vm806, %v150, %v928
  %v932 = vsel %vm806, 0, %v930
  %v933 = vmul.f32 %v931, %v931
  %v934 = vmul.f32 %v933, -0.001358992
  %v935 = vadd.f32 %v934, 0.041655596
  %v936 = vmul.f32 %v933, %v935
  %v937 = vadd.f32 %v936, -0.4999988
  %v938 = vmul.f32 %v933, %v937
  %v939 = vadd.f32 1.0, %v938
  %v940 = vmul.f32 %v931, %v931
  %v941 = vmul.f32 %v940, -0.00019511016
  %v942 = vadd.f32 %v941, 0.008332121
  %v943 = vmul.f32 %v940, %v942
  %v944 = vadd.f32 %v943, -0.16666654
  %v945 = vmul.f32 %v940, %v944
  %v946 = vadd.f32 %v945, 1.0
  %v947 = vmul.f32 %v946, %v931
  %vm948 = vweird.f32 %v150
  %v949 = vadd.s32 %v932, 3
  %v950 = vand.u32 %v949, 3
  %vm951 = vcmp.lt.s32.totalorder %v950, 2
  %vm952 = vcmp.eq.s32.totalorder %v950, 0
  %v953 = vxor.u32 %v947, 2147483648
  %v954 = vsel %vm952, %v939, %v953
  %vm955 = vcmp.eq.s32.totalorder %v950, 2
  %v956 = vxor.u32 %v939, 2147483648
  %v957 = vsel %vm955, %v956, %v947
  %v958 = vsel %vm951, %v954, %v957
  %v959 = vsel %vm948, nan, %v958
  %v960 = vand.u32 2147483647, %v153
  %vm961 = vcmp.le.f32.partialorder %v960, 0.7853982
  %vm962 = vcmp.lt.s32.totalorder %v153, 0
  %v963 = vand.u32 %v153, 2139095040
  %v964 = vshrl.u32 %v963, 23
  %v965 = vsub.s32 %v964, 127
  %v966 = vand.u32 2147483647, %v153
  %v967 = vand.u32 %v966, 8388607
  %v968 = vor.u32 %v967, 8388608
  %v969 = vsub.s32 0, %v968
  %v970 = vadd.s32 %v965, 1
  %vm971 = vcmp.gt.s32.totalorder %v970, 0
  %v972 = vsel %vm971, %v970, 0
  %v973 = vshrl.u32 %v972, 5
  %v974 = vand.u32 %v972, 31
  %v975 = vsub.s32 32, %v974
  %v976 = vshrl.u32 683565275, %v975
  %v977 = vshll.u32 683565275, %v974
  %v978 = vshrl.u32 2475754826, %v975
  %v979 = vor.u32 %v977, %v978
  %v980 = vshll.u32 2475754826, %v974
  %v981 = vshrl.u32 2131351028, %v975
  %v982 = vor.u32 %v980, %v981
  %v983 = vshll.u32 2131351028, %v974
  %v984 = vshrl.u32 2102212464, %v975
  %v985 = vor.u32 %v983, %v984
  %v986 = vshll.u32 2102212464, %v974
  %v987 = vshrl.u32 920167782, %v975
  %v988 = vor.u32 %v986, %v987
  %v989 = vshll.u32 920167782, %v974
  %v990 = vshrl.u32 1326507024, %v975
  %v991 = vor.u32 %v989, %v990
  %vm992 = vcmp.lt.s32.totalorder %v973, 1
  %vm993 = vcmp.lt.s32.totalorder %v973, 2
  %vm994 = vcmp.lt.s32.totalorder %v973, 3
  %vm995 = vcmp.lt.s32.totalorder %v973, 4
  %v996 = vsel %vm992, %v976, %v979
  %v997 = vsel %vm995, %v985, 2102212464
  %v998 = vsel %vm994, %v982, %v997
  %v999 = vsel %vm993, %v996, %v998
  %v1000 = vsel %vm992, %v979, %v982
  %v1001 = vsel %vm995, %v988, 920167782
  %v1002 = vsel %vm994, %v985, %v1001
  %v1003 = vsel %vm993, %v1000, %v1002
  %v1004 = vsel %vm992, %v982, %v985
  %v1005 = vsel %vm995, %v991, 1326507024
  %v1006 = vsel %vm994, %v988, %v1005
  %v1007 = vsel %vm993, %v1004, %v1006
  %v1008 = vshll.u32 %v968, 8
  %v1009 = vand.u32 %v1008, 65535
  %v1010 = vshrl.u32 %v1008, 16
  %v1011 = vand.u32 %v1007, 65535
  %v1012 = vshrl.u32 %v1007, 16
  %v1013 = vmul.u32 %v1009, %v1011
  %v1014 = vmul.u32 %v1009, %v1012
  %v1015 = vmul.u32 %v1010, %v1011
  %v1016 = vmul.u32 %v1010, %v1012
  %v1017 = vshll.u32 %v1014, 16
  %v1018 = vshrl.u32 %v1014, 16
  %v1019 = vshll.u32 %v1015, 16
  %v1020 = vshrl.u32 %v1015, 16
  %vm1021 = vc.u32 %v1013, %v1017
  %v1022 = vsel %vm1021, 1, 0
  %v1023 = vadd.s32 %v1013, %v1017
  %v1024 = vadd.s32 %v1016, %v1022
  %vm1025 = vc.u32 %v1023, %v1019
  %v1026 = vsel %vm1025, 1, 0
  %v1027 = vadd.s32 %v1023, %v1019
  %v1028 = vadd.s32 %v1024, %v1026
  %v1029 = vadd.s32 %v1028, %v1018
  %v1030 = vadd.s32 %v1029, %v1020
  %v1031 = vand.u32 %v1008, 65535
  %v1032 = vshrl.u32 %v1008, 16
  %v1033 = vand.u32 %v1003, 65535
  %v1034 = vshrl.u32 %v1003, 16
  %v1035 = vmul.u32 %v1031, %v1033
  %v1036 = vmul.u32 %v1031, %v1034
  %v1037 = vmul.u32 %v1032, %v1033
  %v1038 = vmul.u32 %v1032, %v1034
  %v1039 = vshll.u32 %v1036, 16
  %v1040 = vshrl.u32 %v1036, 16
  %v1041 = vshll.u32 %v1037, 16
  %v1042 = vshrl.u32 %v1037, 16
  %vm1043 = vc.u32 %v1035, %v1039
  %v1044 = vsel %vm1043, 1, 0
  %v1045 = vadd.s32 %v1035, %v1039
  %v1046 = vadd.s32 %v1038, %v1044
  %vm1047 = vc.u32 %v1045, %v1041
  %v1048 = vsel %vm1047, 1, 0
  %v1049 = vadd.s32 %v1045, %v1041
  %v1050 = vadd.s32 %v1046, %v1048
  %v1051 = vadd.s32 %v1050, %v1040
  %v1052 = vadd.s32 %v1051, %v1042
  %v1053 = vmul.u32 %v1008, %v999
  %v1054 = vadd.s32 %v1030, %v1049
  %vm1055 = vc.u32 %v1030, %v1049
  %v1056 = vadd.s32 %v1052, 1
  %v1057 = vsel %vm1055, %v1056, %v1052
  %v1058 = vadd.s32 %v1053, %v1057
  %v1059 = vadd.s32 %v1058, 536870912
  %v1060 = vshrl.u32 %v1059, 30
  %v1061 = vshll.u32 %v1060, 30
  %v1062 = vsub.s32 %v1058, %v1061
  %vm1063 = vcmp.lt.s32.totalorder %v1062, 0
  %v1064 = vsub.s32 0, %v1062
  %v1065 = vsel %vm1063, %v1064, %v1062
  %v1066 = vclz %v1065
  %v1067 = vsub.s32 %v1066, 2
  %vm1068 = vcmp.gt.s32.totalorder 0, %v1067
  %v1069 = vsel %vm1068, 0, %v1067
  %v1070 = vsub.s32 32, %v1069
  %v1071 = vshll.u32 %v1062, %v1069
  %v1072 = vshrl.u32 %v1054, %v1070
  %v1073 = vor.u32 %v1071, %v1072
  %v1074 = vsub.s32 4294967266, %v1069
  %v1075 = vadd.s32 %v1074, 127
  %v1076 = vshll.u32 %v1075, 23
  %v1077 = vor.u32 4788187, %v1076
  %v1078 = vand.u32 2147483647, %v1077
  %v1080 = vcvt.s32.f32 %v1073
  %v1081 = vmul.f32 %v1080, %v1078
  %v1082 = vxor.u32 %v1081, 2147483648
  %v1083 = vsel %vm962, %v1082, %v1081
  %v1084 = vsub.s32 4, %v1060
  %v1085 = vsel %vm962, %v1084, %v1060
  %v1086 = vsel %vm961, %v153, %v1083
  %v1087 = vsel %vm961, 0, %v1085
  %v1088 = vmul.f32 %v1086, %v1086
  %v1089 = vmul.f32 %v1088, -0.001358992
  %v1090 = vadd.f32 %v1089, 0.041655596
  %v1091 = vmul.f32 %v1088, %v1090
  %v1092 = vadd.f32 %v1091, -0.4999988
  %v1093 = vmul.f32 %v1088, %v1092
  %v1094 = vadd.f32 1.0, %v1093
  %v1095 = vmul.f32 %v1086, %v1086
  %v1096 = vmul.f32 %v1095, -0.00019511016
  %v1097 = vadd.f32 %v1096, 0.008332121
  %v1098 = vmul.f32 %v1095, %v1097
  %v1099 = vadd.f32 %v1098, -0.16666654
  %v1100 = vmul.f32 %v1095, %v1099
  %v1101 = vadd.f32 %v1100, 1.0
  %v1102 = vmul.f32 %v1101, %v1086
  %vm1103 = vweird.f32 %v153
  %v1104 = vadd.s32 %v1087, 3
  %v1105 = vand.u32 %v1104, 3
  %vm1106 = vcmp.lt.s32.totalorder %v1105, 2
  %vm1107 = vcmp.eq.s32.totalorder %v1105, 0
  %v1108 = vxor.u32 %v1102, 2147483648
  %v1109 = vsel %vm1107, %v1094, %v1108
  %vm1110 = vcmp.eq.s32.totalorder %v1105, 2
  %v1111 = vxor.u32 %v1094, 2147483648
  %v1112 = vsel %vm1110, %v1111, %v1102
  %v1113 = vsel %vm1106, %v1109, %v1112
  %v1114 = vsel %vm1103, nan, %v1113
  %v1115 = vand.u32 2147483647, %v156
  %vm1116 = vcmp.le.f32.partialorder %v1115, 0.7853982
  %vm1117 = vcmp.lt.s32.totalorder %v156, 0
  %v1118 = vand.u32 %v156, 2139095040
  %v1119 = vshrl.u32 %v1118, 23
  %v1120 = vsub.s32 %v1119, 127
  %v1121 = vand.u32 2147483647, %v156
  %v1122 = vand.u32 %v1121, 8388607
  %v1123 = vor.u32 %v1122, 8388608
  %v1124 = vsub.s32 0, %v1123
  %v1125 = vadd.s32 %v1120, 1
  %vm1126 = vcmp.gt.s32.totalorder %v1125, 0
  %v1127 = vsel %vm1126, %v1125, 0
  %v1128 = vshrl.u32 %v1127, 5
  %v1129 = vand.u32 %v1127, 31
  %v1130 = vsub.s32 32, %v1129
  %v1131 = vshrl.u32 683565275, %v1130
  %v1132 = vshll.u32 683565275, %v1129
  %v1133 = vshrl.u32 2475754826, %v1130
  %v1134 = vor.u32 %v1132, %v1133
  %v1135 = vshll.u32 2475754826, %v1129
  %v1136 = vshrl.u32 2131351028, %v1130
  %v1137 = vor.u32 %v1135, %v1136
  %v1138 = vshll.u32 2131351028, %v1129
  %v1139 = vshrl.u32 2102212464, %v1130
  %v1140 = vor.u32 %v1138, %v1139
  %v1141 = vshll.u32 2102212464, %v1129
  %v1142 = vshrl.u32 920167782, %v1130
  %v1143 = vor.u32 %v1141, %v1142
  %v1144 = vshll.u32 920167782, %v1129
  %v1145 = vshrl.u32 1326507024, %v1130
  %v1146 = vor.u32 %v1144, %v1145
  %vm1147 = vcmp.lt.s32.totalorder %v1128, 1
  %vm1148 = vcmp.lt.s32.totalorder %v1128, 2
  %vm1149 = vcmp.lt.s32.totalorder %v1128, 3
  %vm1150 = vcmp.lt.s32.totalorder %v1128, 4
  %v1151 = vsel %vm1147, %v1131, %v1134
  %v1152 = vsel %vm1150, %v1140, 2102212464
  %v1153 = vsel %vm1149, %v1137, %v1152
  %v1154 = vsel %vm1148, %v1151, %v1153
  %v1155 = vsel %vm1147, %v1134, %v1137
  %v1156 = vsel %vm1150, %v1143, 920167782
  %v1157 = vsel %vm1149, %v1140, %v1156
  %v1158 = vsel %vm1148, %v1155, %v1157
  %v1159 = vsel %vm1147, %v1137, %v1140
  %v1160 = vsel %vm1150, %v1146, 1326507024
  %v1161 = vsel %vm1149, %v1143, %v1160
  %v1162 = vsel %vm1148, %v1159, %v1161
  %v1163 = vshll.u32 %v1123, 8
  %v1164 = vand.u32 %v1163, 65535
  %v1165 = vshrl.u32 %v1163, 16
  %v1166 = vand.u32 %v1162, 65535
  %v1167 = vshrl.u32 %v1162, 16
  %v1168 = vmul.u32 %v1164, %v1166
  %v1169 = vmul.u32 %v1164, %v1167
  %v1170 = vmul.u32 %v1165, %v1166
  %v1171 = vmul.u32 %v1165, %v1167
  %v1172 = vshll.u32 %v1169, 16
  %v1173 = vshrl.u32 %v1169, 16
  %v1174 = vshll.u32 %v1170, 16
  %v1175 = vshrl.u32 %v1170, 16
  %vm1176 = vc.u32 %v1168, %v1172
  %v1177 = vsel %vm1176, 1, 0
  %v1178 = vadd.s32 %v1168, %v1172
  %v1179 = vadd.s32 %v1171, %v1177
  %vm1180 = vc.u32 %v1178, %v1174
  %v1181 = vsel %vm1180, 1, 0
  %v1182 = vadd.s32 %v1178, %v1174
  %v1183 = vadd.s32 %v1179, %v1181
  %v1184 = vadd.s32 %v1183, %v1173
  %v1185 = vadd.s32 %v1184, %v1175
  %v1186 = vand.u32 %v1163, 65535
  %v1187 = vshrl.u32 %v1163, 16
  %v1188 = vand.u32 %v1158, 65535
  %v1189 = vshrl.u32 %v1158, 16
  %v1190 = vmul.u32 %v1186, %v1188
  %v1191 = vmul.u32 %v1186, %v1189
  %v1192 = vmul.u32 %v1187, %v1188
  %v1193 = vmul.u32 %v1187, %v1189
  %v1194 = vshll.u32 %v1191, 16
  %v1195 = vshrl.u32 %v1191, 16
  %v1196 = vshll.u32 %v1192, 16
  %v1197 = vshrl.u32 %v1192, 16
  %vm1198 = vc.u32 %v1190, %v1194
  %v1199 = vsel %vm1198, 1, 0
  %v1200 = vadd.s32 %v1190, %v1194
  %v1201 = vadd.s32 %v1193, %v1199
  %vm1202 = vc.u32 %v1200, %v1196
  %v1203 = vsel %vm1202, 1, 0
  %v1204 = vadd.s32 %v1200, %v1196
  %v1205 = vadd.s32 %v1201, %v1203
  %v1206 = vadd.s32 %v1205, %v1195
  %v1207 = vadd.s32 %v1206, %v1197
  %v1208 = vmul.u32 %v1163, %v1154
  %v1209 = vadd.s32 %v1185, %v1204
  %vm1210 = vc.u32 %v1185, %v1204
  %v1211 = vadd.s32 %v1207, 1
  %v1212 = vsel %vm1210, %v1211, %v1207
  %v1213 = vadd.s32 %v1208, %v1212
  %v1214 = vadd.s32 %v1213, 536870912
  %v1215 = vshrl.u32 %v1214, 30
  %v1216 = vshll.u32 %v1215, 30
  %v1217 = vsub.s32 %v1213, %v1216
  %vm1218 = vcmp.lt.s32.totalorder %v1217, 0
  %v1219 = vsub.s32 0, %v1217
  %v1220 = vsel %vm1218, %v1219, %v1217
  %v1221 = vclz %v1220
  %v1222 = vsub.s32 %v1221, 2
  %vm1223 = vcmp.gt.s32.totalorder 0, %v1222
  %v1224 = vsel %vm1223, 0, %v1222
  %v1225 = vsub.s32 32, %v1224
  %v1226 = vshll.u32 %v1217, %v1224
  %v1227 = vshrl.u32 %v1209, %v1225
  %v1228 = vor.u32 %v1226, %v1227
  %v1229 = vsub.s32 4294967266, %v1224
  %v1230 = vadd.s32 %v1229, 127
  %v1231 = vshll.u32 %v1230, 23
  %v1232 = vor.u32 4788187, %v1231
  %v1233 = vand.u32 2147483647, %v1232
  %v1235 = vcvt.s32.f32 %v1228
  %v1236 = vmul.f32 %v1235, %v1233
  %v1237 = vxor.u32 %v1236, 2147483648
  %v1238 = vsel %vm1117, %v1237, %v1236
  %v1239 = vsub.s32 4, %v1215
  %v1240 = vsel %vm1117, %v1239, %v1215
  %v1241 = vsel %vm1116, %v156, %v1238
  %v1242 = vsel %vm1116, 0, %v1240
  %v1243 = vmul.f32 %v1241, %v1241
  %v1244 = vmul.f32 %v1243, -0.001358992
  %v1245 = vadd.f32 %v1244, 0.041655596
  %v1246 = vmul.f32 %v1243, %v1245
  %v1247 = vadd.f32 %v1246, -0.4999988
  %v1248 = vmul.f32 %v1243, %v1247
  %v1249 = vadd.f32 1.0, %v1248
  %v1250 = vmul.f32 %v1241, %v1241
  %v1251 = vmul.f32 %v1250, -0.00019511016
  %v1252 = vadd.f32 %v1251, 0.008332121
  %v1253 = vmul.f32 %v1250, %v1252
  %v1254 = vadd.f32 %v1253, -0.16666654
  %v1255 = vmul.f32 %v1250, %v1254
  %v1256 = vadd.f32 %v1255, 1.0
  %v1257 = vmul.f32 %v1256, %v1241
  %vm1258 = vweird.f32 %v156
  %v1259 = vadd.s32 %v1242, 3
  %v1260 = vand.u32 %v1259, 3
  %vm1261 = vcmp.lt.s32.totalorder %v1260, 2
  %vm1262 = vcmp.eq.s32.totalorder %v1260, 0
  %v1263 = vxor.u32 %v1257, 2147483648
  %v1264 = vsel %vm1262, %v1249, %v1263
  %vm1265 = vcmp.eq.s32.totalorder %v1260, 2
  %v1266 = vxor.u32 %v1249, 2147483648
  %v1267 = vsel %vm1265, %v1266, %v1257
  %v1268 = vsel %vm1261, %v1264, %v1267
  %v1269 = vsel %vm1258, nan, %v1268
  %v1270 = vand.u32 2147483647, %v159
  %vm1271 = vcmp.le.f32.partialorder %v1270, 0.7853982
  %vm1272 = vcmp.lt.s32.totalorder %v159, 0
  %v1273 = vand.u32 %v159, 2139095040
  %v1274 = vshrl.u32 %v1273, 23
  %v1275 = vsub.s32 %v1274, 127
  %v1276 = vand.u32 2147483647, %v159
  %v1277 = vand.u32 %v1276, 8388607
  %v1278 = vor.u32 %v1277, 8388608
  %v1279 = vsub.s32 0, %v1278
  %v1280 = vadd.s32 %v1275, 1
  %vm1281 = vcmp.gt.s32.totalorder %v1280, 0
  %v1282 = vsel %vm1281, %v1280, 0
  %v1283 = vshrl.u32 %v1282, 5
  %v1284 = vand.u32 %v1282, 31
  %v1285 = vsub.s32 32, %v1284
  %v1286 = vshrl.u32 683565275, %v1285
  %v1287 = vshll.u32 683565275, %v1284
  %v1288 = vshrl.u32 2475754826, %v1285
  %v1289 = vor.u32 %v1287, %v1288
  %v1290 = vshll.u32 2475754826, %v1284
  %v1291 = vshrl.u32 2131351028, %v1285
  %v1292 = vor.u32 %v1290, %v1291
  %v1293 = vshll.u32 2131351028, %v1284
  %v1294 = vshrl.u32 2102212464, %v1285
  %v1295 = vor.u32 %v1293, %v1294
  %v1296 = vshll.u32 2102212464, %v1284
  %v1297 = vshrl.u32 920167782, %v1285
  %v1298 = vor.u32 %v1296, %v1297
  %v1299 = vshll.u32 920167782, %v1284
  %v1300 = vshrl.u32 1326507024, %v1285
  %v1301 = vor.u32 %v1299, %v1300
  %vm1302 = vcmp.lt.s32.totalorder %v1283, 1
  %vm1303 = vcmp.lt.s32.totalorder %v1283, 2
  %vm1304 = vcmp.lt.s32.totalorder %v1283, 3
  %vm1305 = vcmp.lt.s32.totalorder %v1283, 4
  %v1306 = vsel %vm1302, %v1286, %v1289
  %v1307 = vsel %vm1305, %v1295, 2102212464
  %v1308 = vsel %vm1304, %v1292, %v1307
  %v1309 = vsel %vm1303, %v1306, %v1308
  %v1310 = vsel %vm1302, %v1289, %v1292
  %v1311 = vsel %vm1305, %v1298, 920167782
  %v1312 = vsel %vm1304, %v1295, %v1311
  %v1313 = vsel %vm1303, %v1310, %v1312
  %v1314 = vsel %vm1302, %v1292, %v1295
  %v1315 = vsel %vm1305, %v1301, 1326507024
  %v1316 = vsel %vm1304, %v1298, %v1315
  %v1317 = vsel %vm1303, %v1314, %v1316
  %v1318 = vshll.u32 %v1278, 8
  %v1319 = vand.u32 %v1318, 65535
  %v1320 = vshrl.u32 %v1318, 16
  %v1321 = vand.u32 %v1317, 65535
  %v1322 = vshrl.u32 %v1317, 16
  %v1323 = vmul.u32 %v1319, %v1321
  %v1324 = vmul.u32 %v1319, %v1322
  %v1325 = vmul.u32 %v1320, %v1321
  %v1326 = vmul.u32 %v1320, %v1322
  %v1327 = vshll.u32 %v1324, 16
  %v1328 = vshrl.u32 %v1324, 16
  %v1329 = vshll.u32 %v1325, 16
  %v1330 = vshrl.u32 %v1325, 16
  %vm1331 = vc.u32 %v1323, %v1327
  %v1332 = vsel %vm1331, 1, 0
  %v1333 = vadd.s32 %v1323, %v1327
  %v1334 = vadd.s32 %v1326, %v1332
  %vm1335 = vc.u32 %v1333, %v1329
  %v1336 = vsel %vm1335, 1, 0
  %v1337 = vadd.s32 %v1333, %v1329
  %v1338 = vadd.s32 %v1334, %v1336
  %v1339 = vadd.s32 %v1338, %v1328
  %v1340 = vadd.s32 %v1339, %v1330
  %v1341 = vand.u32 %v1318, 65535
  %v1342 = vshrl.u32 %v1318, 16
  %v1343 = vand.u32 %v1313, 65535
  %v1344 = vshrl.u32 %v1313, 16
  %v1345 = vmul.u32 %v1341, %v1343
  %v1346 = vmul.u32 %v1341, %v1344
  %v1347 = vmul.u32 %v1342, %v1343
  %v1348 = vmul.u32 %v1342, %v1344
  %v1349 = vshll.u32 %v1346, 16
  %v1350 = vshrl.u32 %v1346, 16
  %v1351 = vshll.u32 %v1347, 16
  %v1352 = vshrl.u32 %v1347, 16
  %vm1353 = vc.u32 %v1345, %v1349
  %v1354 = vsel %vm1353, 1, 0
  %v1355 = vadd.s32 %v1345, %v1349
  %v1356 = vadd.s32 %v1348, %v1354
  %vm1357 = vc.u32 %v1355, %v1351
  %v1358 = vsel %vm1357, 1, 0
  %v1359 = vadd.s32 %v1355, %v1351
  %v1360 = vadd.s32 %v1356, %v1358
  %v1361 = vadd.s32 %v1360, %v1350
  %v1362 = vadd.s32 %v1361, %v1352
  %v1363 = vmul.u32 %v1318, %v1309
  %v1364 = vadd.s32 %v1340, %v1359
  %vm1365 = vc.u32 %v1340, %v1359
  %v1366 = vadd.s32 %v1362, 1
  %v1367 = vsel %vm1365, %v1366, %v1362
  %v1368 = vadd.s32 %v1363, %v1367
  %v1369 = vadd.s32 %v1368, 536870912
  %v1370 = vshrl.u32 %v1369, 30
  %v1371 = vshll.u32 %v1370, 30
  %v1372 = vsub.s32 %v1368, %v1371
  %vm1373 = vcmp.lt.s32.totalorder %v1372, 0
  %v1374 = vsub.s32 0, %v1372
  %v1375 = vsel %vm1373, %v1374, %v1372
  %v1376 = vclz %v1375
  %v1377 = vsub.s32 %v1376, 2
  %vm1378 = vcmp.gt.s32.totalorder 0, %v1377
  %v1379 = vsel %vm1378, 0, %v1377
  %v1380 = vsub.s32 32, %v1379
  %v1381 = vshll.u32 %v1372, %v1379
  %v1382 = vshrl.u32 %v1364, %v1380
  %v1383 = vor.u32 %v1381, %v1382
  %v1384 = vsub.s32 4294967266, %v1379
  %v1385 = vadd.s32 %v1384, 127
  %v1386 = vshll.u32 %v1385, 23
  %v1387 = vor.u32 4788187, %v1386
  %v1388 = vand.u32 2147483647, %v1387
  %v1390 = vcvt.s32.f32 %v1383
  %v1391 = vmul.f32 %v1390, %v1388
  %v1392 = vxor.u32 %v1391, 2147483648
  %v1393 = vsel %vm1272, %v1392, %v1391
  %v1394 = vsub.s32 4, %v1370
  %v1395 = vsel %vm1272, %v1394, %v1370
  %v1396 = vsel %vm1271, %v159, %v1393
  %v1397 = vsel %vm1271, 0, %v1395
  %v1398 = vmul.f32 %v1396, %v1396
  %v1399 = vmul.f32 %v1398, -0.001358992
  %v1400 = vadd.f32 %v1399, 0.041655596
  %v1401 = vmul.f32 %v1398, %v1400
  %v1402 = vadd.f32 %v1401, -0.4999988
  %v1403 = vmul.f32 %v1398, %v1402
  %v1404 = vadd.f32 1.0, %v1403
  %v1405 = vmul.f32 %v1396, %v1396
  %v1406 = vmul.f32 %v1405, -0.00019511016
  %v1407 = vadd.f32 %v1406, 0.008332121
  %v1408 = vmul.f32 %v1405, %v1407
  %v1409 = vadd.f32 %v1408, -0.16666654
  %v1410 = vmul.f32 %v1405, %v1409
  %v1411 = vadd.f32 %v1410, 1.0
  %v1412 = vmul.f32 %v1411, %v1396
  %vm1413 = vweird.f32 %v159
  %v1414 = vadd.s32 %v1397, 3
  %v1415 = vand.u32 %v1414, 3
  %vm1416 = vcmp.lt.s32.totalorder %v1415, 2
  %vm1417 = vcmp.eq.s32.totalorder %v1415, 0
  %v1418 = vxor.u32 %v1412, 2147483648
  %v1419 = vsel %vm1417, %v1404, %v1418
  %vm1420 = vcmp.eq.s32.totalorder %v1415, 2
  %v1421 = vxor.u32 %v1404, 2147483648
  %v1422 = vsel %vm1420, %v1421, %v1412
  %v1423 = vsel %vm1416, %v1419, %v1422
  %v1424 = vsel %vm1413, nan, %v1423
  %v1425 = vand.u32 2147483647, %v162
  %vm1426 = vcmp.le.f32.partialorder %v1425, 0.7853982
  %vm1427 = vcmp.lt.s32.totalorder %v162, 0
  %v1428 = vand.u32 %v162, 2139095040
  %v1429 = vshrl.u32 %v1428, 23
  %v1430 = vsub.s32 %v1429, 127
  %v1431 = vand.u32 2147483647, %v162
  %v1432 = vand.u32 %v1431, 8388607
  %v1433 = vor.u32 %v1432, 8388608
  %v1434 = vsub.s32 0, %v1433
  %v1435 = vadd.s32 %v1430, 1
  %vm1436 = vcmp.gt.s32.totalorder %v1435, 0
  %v1437 = vsel %vm1436, %v1435, 0
  %v1438 = vshrl.u32 %v1437, 5
  %v1439 = vand.u32 %v1437, 31
  %v1440 = vsub.s32 32, %v1439
  %v1441 = vshrl.u32 683565275, %v1440
  %v1442 = vshll.u32 683565275, %v1439
  %v1443 = vshrl.u32 2475754826, %v1440
  %v1444 = vor.u32 %v1442, %v1443
  %v1445 = vshll.u32 2475754826, %v1439
  %v1446 = vshrl.u32 2131351028, %v1440
  %v1447 = vor.u32 %v1445, %v1446
  %v1448 = vshll.u32 2131351028, %v1439
  %v1449 = vshrl.u32 2102212464, %v1440
  %v1450 = vor.u32 %v1448, %v1449
  %v1451 = vshll.u32 2102212464, %v1439
  %v1452 = vshrl.u32 920167782, %v1440
  %v1453 = vor.u32 %v1451, %v1452
  %v1454 = vshll.u32 920167782, %v1439
  %v1455 = vshrl.u32 1326507024, %v1440
  %v1456 = vor.u32 %v1454, %v1455
  %vm1457 = vcmp.lt.s32.totalorder %v1438, 1
  %vm1458 = vcmp.lt.s32.totalorder %v1438, 2
  %vm1459 = vcmp.lt.s32.totalorder %v1438, 3
  %vm1460 = vcmp.lt.s32.totalorder %v1438, 4
  %v1461 = vsel %vm1457, %v1441, %v1444
  %v1462 = vsel %vm1460, %v1450, 2102212464
  %v1463 = vsel %vm1459, %v1447, %v1462
  %v1464 = vsel %vm1458, %v1461, %v1463
  %v1465 = vsel %vm1457, %v1444, %v1447
  %v1466 = vsel %vm1460, %v1453, 920167782
  %v1467 = vsel %vm1459, %v1450, %v1466
  %v1468 = vsel %vm1458, %v1465, %v1467
  %v1469 = vsel %vm1457, %v1447, %v1450
  %v1470 = vsel %vm1460, %v1456, 1326507024
  %v1471 = vsel %vm1459, %v1453, %v1470
  %v1472 = vsel %vm1458, %v1469, %v1471
  %v1473 = vshll.u32 %v1433, 8
  %v1474 = vand.u32 %v1473, 65535
  %v1475 = vshrl.u32 %v1473, 16
  %v1476 = vand.u32 %v1472, 65535
  %v1477 = vshrl.u32 %v1472, 16
  %v1478 = vmul.u32 %v1474, %v1476
  %v1479 = vmul.u32 %v1474, %v1477
  %v1480 = vmul.u32 %v1475, %v1476
  %v1481 = vmul.u32 %v1475, %v1477
  %v1482 = vshll.u32 %v1479, 16
  %v1483 = vshrl.u32 %v1479, 16
  %v1484 = vshll.u32 %v1480, 16
  %v1485 = vshrl.u32 %v1480, 16
  %vm1486 = vc.u32 %v1478, %v1482
  %v1487 = vsel %vm1486, 1, 0
  %v1488 = vadd.s32 %v1478, %v1482
  %v1489 = vadd.s32 %v1481, %v1487
  %vm1490 = vc.u32 %v1488, %v1484
  %v1491 = vsel %vm1490, 1, 0
  %v1492 = vadd.s32 %v1488, %v1484
  %v1493 = vadd.s32 %v1489, %v1491
  %v1494 = vadd.s32 %v1493, %v1483
  %v1495 = vadd.s32 %v1494, %v1485
  %v1496 = vand.u32 %v1473, 65535
  %v1497 = vshrl.u32 %v1473, 16
  %v1498 = vand.u32 %v1468, 65535
  %v1499 = vshrl.u32 %v1468, 16
  %v1500 = vmul.u32 %v1496, %v1498
  %v1501 = vmul.u32 %v1496, %v1499
  %v1502 = vmul.u32 %v1497, %v1498
  %v1503 = vmul.u32 %v1497, %v1499
  %v1504 = vshll.u32 %v1501, 16
  %v1505 = vshrl.u32 %v1501, 16
  %v1506 = vshll.u32 %v1502, 16
  %v1507 = vshrl.u32 %v1502, 16
  %vm1508 = vc.u32 %v1500, %v1504
  %v1509 = vsel %vm1508, 1, 0
  %v1510 = vadd.s32 %v1500, %v1504
  %v1511 = vadd.s32 %v1503, %v1509
  %vm1512 = vc.u32 %v1510, %v1506
  %v1513 = vsel %vm1512, 1, 0
  %v1514 = vadd.s32 %v1510, %v1506
  %v1515 = vadd.s32 %v1511, %v1513
  %v1516 = vadd.s32 %v1515, %v1505
  %v1517 = vadd.s32 %v1516, %v1507
  %v1518 = vmul.u32 %v1473, %v1464
  %v1519 = vadd.s32 %v1495, %v1514
  %vm1520 = vc.u32 %v1495, %v1514
  %v1521 = vadd.s32 %v1517, 1
  %v1522 = vsel %vm1520, %v1521, %v1517
  %v1523 = vadd.s32 %v1518, %v1522
  %v1524 = vadd.s32 %v1523, 536870912
  %v1525 = vshrl.u32 %v1524, 30
  %v1526 = vshll.u32 %v1525, 30
  %v1527 = vsub.s32 %v1523, %v1526
  %vm1528 = vcmp.lt.s32.totalorder %v1527, 0
  %v1529 = vsub.s32 0, %v1527
  %v1530 = vsel %vm1528, %v1529, %v1527
  %v1531 = vclz %v1530
  %v1532 = vsub.s32 %v1531, 2
  %vm1533 = vcmp.gt.s32.totalorder 0, %v1532
  %v1534 = vsel %vm1533, 0, %v1532
  %v1535 = vsub.s32 32, %v1534
  %v1536 = vshll.u32 %v1527, %v1534
  %v1537 = vshrl.u32 %v1519, %v1535
  %v1538 = vor.u32 %v1536, %v1537
  %v1539 = vsub.s32 4294967266, %v1534
  %v1540 = vadd.s32 %v1539, 127
  %v1541 = vshll.u32 %v1540, 23
  %v1542 = vor.u32 4788187, %v1541
  %v1543 = vand.u32 2147483647, %v1542
  %v1545 = vcvt.s32.f32 %v1538
  %v1546 = vmul.f32 %v1545, %v1543
  %v1547 = vxor.u32 %v1546, 2147483648
  %v1548 = vsel %vm1427, %v1547, %v1546
  %v1549 = vsub.s32 4, %v1525
  %v1550 = vsel %vm1427, %v1549, %v1525
  %v1551 = vsel %vm1426, %v162, %v1548
  %v1552 = vsel %vm1426, 0, %v1550
  %v1553 = vmul.f32 %v1551, %v1551
  %v1554 = vmul.f32 %v1553, -0.001358992
  %v1555 = vadd.f32 %v1554, 0.041655596
  %v1556 = vmul.f32 %v1553, %v1555
  %v1557 = vadd.f32 %v1556, -0.4999988
  %v1558 = vmul.f32 %v1553, %v1557
  %v1559 = vadd.f32 1.0, %v1558
  %v1560 = vmul.f32 %v1551, %v1551
  %v1561 = vmul.f32 %v1560, -0.00019511016
  %v1562 = vadd.f32 %v1561, 0.008332121
  %v1563 = vmul.f32 %v1560, %v1562
  %v1564 = vadd.f32 %v1563, -0.16666654
  %v1565 = vmul.f32 %v1560, %v1564
  %v1566 = vadd.f32 %v1565, 1.0
  %v1567 = vmul.f32 %v1566, %v1551
  %vm1568 = vweird.f32 %v162
  %v1569 = vadd.s32 %v1552, 3
  %v1570 = vand.u32 %v1569, 3
  %vm1571 = vcmp.lt.s32.totalorder %v1570, 2
  %vm1572 = vcmp.eq.s32.totalorder %v1570, 0
  %v1573 = vxor.u32 %v1567, 2147483648
  %v1574 = vsel %vm1572, %v1559, %v1573
  %vm1575 = vcmp.eq.s32.totalorder %v1570, 2
  %v1576 = vxor.u32 %v1559, 2147483648
  %v1577 = vsel %vm1575, %v1576, %v1567
  %v1578 = vsel %vm1571, %v1574, %v1577
  %v1579 = vsel %vm1568, nan, %v1578
  %v1580 = vand.u32 2147483647, %v165
  %vm1581 = vcmp.le.f32.partialorder %v1580, 0.7853982
  %vm1582 = vcmp.lt.s32.totalorder %v165, 0
  %v1583 = vand.u32 %v165, 2139095040
  %v1584 = vshrl.u32 %v1583, 23
  %v1585 = vsub.s32 %v1584, 127
  %v1586 = vand.u32 2147483647, %v165
  %v1587 = vand.u32 %v1586, 8388607
  %v1588 = vor.u32 %v1587, 8388608
  %v1589 = vsub.s32 0, %v1588
  %v1590 = vadd.s32 %v1585, 1
  %vm1591 = vcmp.gt.s32.totalorder %v1590, 0
  %v1592 = vsel %vm1591, %v1590, 0
  %v1593 = vshrl.u32 %v1592, 5
  %v1594 = vand.u32 %v1592, 31
  %v1595 = vsub.s32 32, %v1594
  %v1596 = vshrl.u32 683565275, %v1595
  %v1597 = vshll.u32 683565275, %v1594
  %v1598 = vshrl.u32 2475754826, %v1595
  %v1599 = vor.u32 %v1597, %v1598
  %v1600 = vshll.u32 2475754826, %v1594
  %v1601 = vshrl.u32 2131351028, %v1595
  %v1602 = vor.u32 %v1600, %v1601
  %v1603 = vshll.u32 2131351028, %v1594
  %v1604 = vshrl.u32 2102212464, %v1595
  %v1605 = vor.u32 %v1603, %v1604
  %v1606 = vshll.u32 2102212464, %v1594
  %v1607 = vshrl.u32 920167782, %v1595
  %v1608 = vor.u32 %v1606, %v1607
  %v1609 = vshll.u32 920167782, %v1594
  %v1610 = vshrl.u32 1326507024, %v1595
  %v1611 = vor.u32 %v1609, %v1610
  %vm1612 = vcmp.lt.s32.totalorder %v1593, 1
  %vm1613 = vcmp.lt.s32.totalorder %v1593, 2
  %vm1614 = vcmp.lt.s32.totalorder %v1593, 3
  %vm1615 = vcmp.lt.s32.totalorder %v1593, 4
  %v1616 = vsel %vm1612, %v1596, %v1599
  %v1617 = vsel %vm1615, %v1605, 2102212464
  %v1618 = vsel %vm1614, %v1602, %v1617
  %v1619 = vsel %vm1613, %v1616, %v1618
  %v1620 = vsel %vm1612, %v1599, %v1602
  %v1621 = vsel %vm1615, %v1608, 920167782
  %v1622 = vsel %vm1614, %v1605, %v1621
  %v1623 = vsel %vm1613, %v1620, %v1622
  %v1624 = vsel %vm1612, %v1602, %v1605
  %v1625 = vsel %vm1615, %v1611, 1326507024
  %v1626 = vsel %vm1614, %v1608, %v1625
  %v1627 = vsel %vm1613, %v1624, %v1626
  %v1628 = vshll.u32 %v1588, 8
  %v1629 = vand.u32 %v1628, 65535
  %v1630 = vshrl.u32 %v1628, 16
  %v1631 = vand.u32 %v1627, 65535
  %v1632 = vshrl.u32 %v1627, 16
  %v1633 = vmul.u32 %v1629, %v1631
  %v1634 = vmul.u32 %v1629, %v1632
  %v1635 = vmul.u32 %v1630, %v1631
  %v1636 = vmul.u32 %v1630, %v1632
  %v1637 = vshll.u32 %v1634, 16
  %v1638 = vshrl.u32 %v1634, 16
  %v1639 = vshll.u32 %v1635, 16
  %v1640 = vshrl.u32 %v1635, 16
  %vm1641 = vc.u32 %v1633, %v1637
  %v1642 = vsel %vm1641, 1, 0
  %v1643 = vadd.s32 %v1633, %v1637
  %v1644 = vadd.s32 %v1636, %v1642
  %vm1645 = vc.u32 %v1643, %v1639
  %v1646 = vsel %vm1645, 1, 0
  %v1647 = vadd.s32 %v1643, %v1639
  %v1648 = vadd.s32 %v1644, %v1646
  %v1649 = vadd.s32 %v1648, %v1638
  %v1650 = vadd.s32 %v1649, %v1640
  %v1651 = vand.u32 %v1628, 65535
  %v1652 = vshrl.u32 %v1628, 16
  %v1653 = vand.u32 %v1623, 65535
  %v1654 = vshrl.u32 %v1623, 16
  %v1655 = vmul.u32 %v1651, %v1653
  %v1656 = vmul.u32 %v1651, %v1654
  %v1657 = vmul.u32 %v1652, %v1653
  %v1658 = vmul.u32 %v1652, %v1654
  %v1659 = vshll.u32 %v1656, 16
  %v1660 = vshrl.u32 %v1656, 16
  %v1661 = vshll.u32 %v1657, 16
  %v1662 = vshrl.u32 %v1657, 16
  %vm1663 = vc.u32 %v1655, %v1659
  %v1664 = vsel %vm1663, 1, 0
  %v1665 = vadd.s32 %v1655, %v1659
  %v1666 = vadd.s32 %v1658, %v1664
  %vm1667 = vc.u32 %v1665, %v1661
  %v1668 = vsel %vm1667, 1, 0
  %v1669 = vadd.s32 %v1665, %v1661
  %v1670 = vadd.s32 %v1666, %v1668
  %v1671 = vadd.s32 %v1670, %v1660
  %v1672 = vadd.s32 %v1671, %v1662
  %v1673 = vmul.u32 %v1628, %v1619
  %v1674 = vadd.s32 %v1650, %v1669
  %vm1675 = vc.u32 %v1650, %v1669
  %v1676 = vadd.s32 %v1672, 1
  %v1677 = vsel %vm1675, %v1676, %v1672
  %v1678 = vadd.s32 %v1673, %v1677
  %v1679 = vadd.s32 %v1678, 536870912
  %v1680 = vshrl.u32 %v1679, 30
  %v1681 = vshll.u32 %v1680, 30
  %v1682 = vsub.s32 %v1678, %v1681
  %vm1683 = vcmp.lt.s32.totalorder %v1682, 0
  %v1684 = vsub.s32 0, %v1682
  %v1685 = vsel %vm1683, %v1684, %v1682
  %v1686 = vclz %v1685
  %v1687 = vsub.s32 %v1686, 2
  %vm1688 = vcmp.gt.s32.totalorder 0, %v1687
  %v1689 = vsel %vm1688, 0, %v1687
  %v1690 = vsub.s32 32, %v1689
  %v1691 = vshll.u32 %v1682, %v1689
  %v1692 = vshrl.u32 %v1674, %v1690
  %v1693 = vor.u32 %v1691, %v1692
  %v1694 = vsub.s32 4294967266, %v1689
  %v1695 = vadd.s32 %v1694, 127
  %v1696 = vshll.u32 %v1695, 23
  %v1697 = vor.u32 4788187, %v1696
  %v1698 = vand.u32 2147483647, %v1697
  %v1700 = vcvt.s32.f32 %v1693
  %v1701 = vmul.f32 %v1700, %v1698
  %v1702 = vxor.u32 %v1701, 2147483648
  %v1703 = vsel %vm1582, %v1702, %v1701
  %v1704 = vsub.s32 4, %v1680
  %v1705 = vsel %vm1582, %v1704, %v1680
  %v1706 = vsel %vm1581, %v165, %v1703
  %v1707 = vsel %vm1581, 0, %v1705
  %v1708 = vmul.f32 %v1706, %v1706
  %v1709 = vmul.f32 %v1708, -0.001358992
  %v1710 = vadd.f32 %v1709, 0.041655596
  %v1711 = vmul.f32 %v1708, %v1710
  %v1712 = vadd.f32 %v1711, -0.4999988
  %v1713 = vmul.f32 %v1708, %v1712
  %v1714 = vadd.f32 1.0, %v1713
  %v1715 = vmul.f32 %v1706, %v1706
  %v1716 = vmul.f32 %v1715, -0.00019511016
  %v1717 = vadd.f32 %v1716, 0.008332121
  %v1718 = vmul.f32 %v1715, %v1717
  %v1719 = vadd.f32 %v1718, -0.16666654
  %v1720 = vmul.f32 %v1715, %v1719
  %v1721 = vadd.f32 %v1720, 1.0
  %v1722 = vmul.f32 %v1721, %v1706
  %vm1723 = vweird.f32 %v165
  %v1724 = vadd.s32 %v1707, 3
  %v1725 = vand.u32 %v1724, 3
  %vm1726 = vcmp.lt.s32.totalorder %v1725, 2
  %vm1727 = vcmp.eq.s32.totalorder %v1725, 0
  %v1728 = vxor.u32 %v1722, 2147483648
  %v1729 = vsel %vm1727, %v1714, %v1728
  %vm1730 = vcmp.eq.s32.totalorder %v1725, 2
  %v1731 = vxor.u32 %v1714, 2147483648
  %v1732 = vsel %vm1730, %v1731, %v1722
  %v1733 = vsel %vm1726, %v1729, %v1732
  %v1734 = vsel %vm1723, nan, %v1733
  %v1735 = vand.u32 2147483647, %v168
  %vm1736 = vcmp.le.f32.partialorder %v1735, 0.7853982
  %vm1737 = vcmp.lt.s32.totalorder %v168, 0
  %v1738 = vand.u32 %v168, 2139095040
  %v1739 = vshrl.u32 %v1738, 23
  %v1740 = vsub.s32 %v1739, 127
  %v1741 = vand.u32 2147483647, %v168
  %v1742 = vand.u32 %v1741, 8388607
  %v1743 = vor.u32 %v1742, 8388608
  %v1744 = vsub.s32 0, %v1743
  %v1745 = vadd.s32 %v1740, 1
  %vm1746 = vcmp.gt.s32.totalorder %v1745, 0
  %v1747 = vsel %vm1746, %v1745, 0
  %v1748 = vshrl.u32 %v1747, 5
  %v1749 = vand.u32 %v1747, 31
  %v1750 = vsub.s32 32, %v1749
  %v1751 = vshrl.u32 683565275, %v1750
  %v1752 = vshll.u32 683565275, %v1749
  %v1753 = vshrl.u32 2475754826, %v1750
  %v1754 = vor.u32 %v1752, %v1753
  %v1755 = vshll.u32 2475754826, %v1749
  %v1756 = vshrl.u32 2131351028, %v1750
  %v1757 = vor.u32 %v1755, %v1756
  %v1758 = vshll.u32 2131351028, %v1749
  %v1759 = vshrl.u32 2102212464, %v1750
  %v1760 = vor.u32 %v1758, %v1759
  %v1761 = vshll.u32 2102212464, %v1749
  %v1762 = vshrl.u32 920167782, %v1750
  %v1763 = vor.u32 %v1761, %v1762
  %v1764 = vshll.u32 920167782, %v1749
  %v1765 = vshrl.u32 1326507024, %v1750
  %v1766 = vor.u32 %v1764, %v1765
  %vm1767 = vcmp.lt.s32.totalorder %v1748, 1
  %vm1768 = vcmp.lt.s32.totalorder %v1748, 2
  %vm1769 = vcmp.lt.s32.totalorder %v1748, 3
  %vm1770 = vcmp.lt.s32.totalorder %v1748, 4
  %v1771 = vsel %vm1767, %v1751, %v1754
  %v1772 = vsel %vm1770, %v1760, 2102212464
  %v1773 = vsel %vm1769, %v1757, %v1772
  %v1774 = vsel %vm1768, %v1771, %v1773
  %v1775 = vsel %vm1767, %v1754, %v1757
  %v1776 = vsel %vm1770, %v1763, 920167782
  %v1777 = vsel %vm1769, %v1760, %v1776
  %v1778 = vsel %vm1768, %v1775, %v1777
  %v1779 = vsel %vm1767, %v1757, %v1760
  %v1780 = vsel %vm1770, %v1766, 1326507024
  %v1781 = vsel %vm1769, %v1763, %v1780
  %v1782 = vsel %vm1768, %v1779, %v1781
  %v1783 = vshll.u32 %v1743, 8
  %v1784 = vand.u32 %v1783, 65535
  %v1785 = vshrl.u32 %v1783, 16
  %v1786 = vand.u32 %v1782, 65535
  %v1787 = vshrl.u32 %v1782, 16
  %v1788 = vmul.u32 %v1784, %v1786
  %v1789 = vmul.u32 %v1784, %v1787
  %v1790 = vmul.u32 %v1785, %v1786
  %v1791 = vmul.u32 %v1785, %v1787
  %v1792 = vshll.u32 %v1789, 16
  %v1793 = vshrl.u32 %v1789, 16
  %v1794 = vshll.u32 %v1790, 16
  %v1795 = vshrl.u32 %v1790, 16
  %vm1796 = vc.u32 %v1788, %v1792
  %v1797 = vsel %vm1796, 1, 0
  %v1798 = vadd.s32 %v1788, %v1792
  %v1799 = vadd.s32 %v1791, %v1797
  %vm1800 = vc.u32 %v1798, %v1794
  %v1801 = vsel %vm1800, 1, 0
  %v1802 = vadd.s32 %v1798, %v1794
  %v1803 = vadd.s32 %v1799, %v1801
  %v1804 = vadd.s32 %v1803, %v1793
  %v1805 = vadd.s32 %v1804, %v1795
  %v1806 = vand.u32 %v1783, 65535
  %v1807 = vshrl.u32 %v1783, 16
  %v1808 = vand.u32 %v1778, 65535
  %v1809 = vshrl.u32 %v1778, 16
  %v1810 = vmul.u32 %v1806, %v1808
  %v1811 = vmul.u32 %v1806, %v1809
  %v1812 = vmul.u32 %v1807, %v1808
  %v1813 = vmul.u32 %v1807, %v1809
  %v1814 = vshll.u32 %v1811, 16
  %v1815 = vshrl.u32 %v1811, 16
  %v1816 = vshll.u32 %v1812, 16
  %v1817 = vshrl.u32 %v1812, 16
  %vm1818 = vc.u32 %v1810, %v1814
  %v1819 = vsel %vm1818, 1, 0
  %v1820 = vadd.s32 %v1810, %v1814
  %v1821 = vadd.s32 %v1813, %v1819
  %vm1822 = vc.u32 %v1820, %v1816
  %v1823 = vsel %vm1822, 1, 0
  %v1824 = vadd.s32 %v1820, %v1816
  %v1825 = vadd.s32 %v1821, %v1823
  %v1826 = vadd.s32 %v1825, %v1815
  %v1827 = vadd.s32 %v1826, %v1817
  %v1828 = vmul.u32 %v1783, %v1774
  %v1829 = vadd.s32 %v1805, %v1824
  %vm1830 = vc.u32 %v1805, %v1824
  %v1831 = vadd.s32 %v1827, 1
  %v1832 = vsel %vm1830, %v1831, %v1827
  %v1833 = vadd.s32 %v1828, %v1832
  %v1834 = vadd.s32 %v1833, 536870912
  %v1835 = vshrl.u32 %v1834, 30
  %v1836 = vshll.u32 %v1835, 30
  %v1837 = vsub.s32 %v1833, %v1836
  %vm1838 = vcmp.lt.s32.totalorder %v1837, 0
  %v1839 = vsub.s32 0, %v1837
  %v1840 = vsel %vm1838, %v1839, %v1837
  %v1841 = vclz %v1840
  %v1842 = vsub.s32 %v1841, 2
  %vm1843 = vcmp.gt.s32.totalorder 0, %v1842
  %v1844 = vsel %vm1843, 0, %v1842
  %v1845 = vsub.s32 32, %v1844
  %v1846 = vshll.u32 %v1837, %v1844
  %v1847 = vshrl.u32 %v1829, %v1845
  %v1848 = vor.u32 %v1846, %v1847
  %v1849 = vsub.s32 4294967266, %v1844
  %v1850 = vadd.s32 %v1849, 127
  %v1851 = vshll.u32 %v1850, 23
  %v1852 = vor.u32 4788187, %v1851
  %v1853 = vand.u32 2147483647, %v1852
  %v1855 = vcvt.s32.f32 %v1848
  %v1856 = vmul.f32 %v1855, %v1853
  %v1857 = vxor.u32 %v1856, 2147483648
  %v1858 = vsel %vm1737, %v1857, %v1856
  %v1859 = vsub.s32 4, %v1835
  %v1860 = vsel %vm1737, %v1859, %v1835
  %v1861 = vsel %vm1736, %v168, %v1858
  %v1862 = vsel %vm1736, 0, %v1860
  %v1863 = vmul.f32 %v1861, %v1861
  %v1864 = vmul.f32 %v1863, -0.001358992
  %v1865 = vadd.f32 %v1864, 0.041655596
  %v1866 = vmul.f32 %v1863, %v1865
  %v1867 = vadd.f32 %v1866, -0.4999988
  %v1868 = vmul.f32 %v1863, %v1867
  %v1869 = vadd.f32 1.0, %v1868
  %v1870 = vmul.f32 %v1861, %v1861
  %v1871 = vmul.f32 %v1870, -0.00019511016
  %v1872 = vadd.f32 %v1871, 0.008332121
  %v1873 = vmul.f32 %v1870, %v1872
  %v1874 = vadd.f32 %v1873, -0.16666654
  %v1875 = vmul.f32 %v1870, %v1874
  %v1876 = vadd.f32 %v1875, 1.0
  %v1877 = vmul.f32 %v1876, %v1861
  %vm1878 = vweird.f32 %v168
  %v1879 = vadd.s32 %v1862, 3
  %v1880 = vand.u32 %v1879, 3
  %vm1881 = vcmp.lt.s32.totalorder %v1880, 2
  %vm1882 = vcmp.eq.s32.totalorder %v1880, 0
  %v1883 = vxor.u32 %v1877, 2147483648
  %v1884 = vsel %vm1882, %v1869, %v1883
  %vm1885 = vcmp.eq.s32.totalorder %v1880, 2
  %v1886 = vxor.u32 %v1869, 2147483648
  %v1887 = vsel %vm1885, %v1886, %v1877
  %v1888 = vsel %vm1881, %v1884, %v1887
  %v1889 = vsel %vm1878, nan, %v1888
  %v1890 = vand.u32 2147483647, %v171
  %vm1891 = vcmp.le.f32.partialorder %v1890, 0.7853982
  %vm1892 = vcmp.lt.s32.totalorder %v171, 0
  %v1893 = vand.u32 %v171, 2139095040
  %v1894 = vshrl.u32 %v1893, 23
  %v1895 = vsub.s32 %v1894, 127
  %v1896 = vand.u32 2147483647, %v171
  %v1897 = vand.u32 %v1896, 8388607
  %v1898 = vor.u32 %v1897, 8388608
  %v1899 = vsub.s32 0, %v1898
  %v1900 = vadd.s32 %v1895, 1
  %vm1901 = vcmp.gt.s32.totalorder %v1900, 0
  %v1902 = vsel %vm1901, %v1900, 0
  %v1903 = vshrl.u32 %v1902, 5
  %v1904 = vand.u32 %v1902, 31
  %v1905 = vsub.s32 32, %v1904
  %v1906 = vshrl.u32 683565275, %v1905
  %v1907 = vshll.u32 683565275, %v1904
  %v1908 = vshrl.u32 2475754826, %v1905
  %v1909 = vor.u32 %v1907, %v1908
  %v1910 = vshll.u32 2475754826, %v1904
  %v1911 = vshrl.u32 2131351028, %v1905
  %v1912 = vor.u32 %v1910, %v1911
  %v1913 = vshll.u32 2131351028, %v1904
  %v1914 = vshrl.u32 2102212464, %v1905
  %v1915 = vor.u32 %v1913, %v1914
  %v1916 = vshll.u32 2102212464, %v1904
  %v1917 = vshrl.u32 920167782, %v1905
  %v1918 = vor.u32 %v1916, %v1917
  %v1919 = vshll.u32 920167782, %v1904
  %v1920 = vshrl.u32 1326507024, %v1905
  %v1921 = vor.u32 %v1919, %v1920
  %vm1922 = vcmp.lt.s32.totalorder %v1903, 1
  %vm1923 = vcmp.lt.s32.totalorder %v1903, 2
  %vm1924 = vcmp.lt.s32.totalorder %v1903, 3
  %vm1925 = vcmp.lt.s32.totalorder %v1903, 4
  %v1926 = vsel %vm1922, %v1906, %v1909
  %v1927 = vsel %vm1925, %v1915, 2102212464
  %v1928 = vsel %vm1924, %v1912, %v1927
  %v1929 = vsel %vm1923, %v1926, %v1928
  %v1930 = vsel %vm1922, %v1909, %v1912
  %v1931 = vsel %vm1925, %v1918, 920167782
  %v1932 = vsel %vm1924, %v1915, %v1931
  %v1933 = vsel %vm1923, %v1930, %v1932
  %v1934 = vsel %vm1922, %v1912, %v1915
  %v1935 = vsel %vm1925, %v1921, 1326507024
  %v1936 = vsel %vm1924, %v1918, %v1935
  %v1937 = vsel %vm1923, %v1934, %v1936
  %v1938 = vshll.u32 %v1898, 8
  %v1939 = vand.u32 %v1938, 65535
  %v1940 = vshrl.u32 %v1938, 16
  %v1941 = vand.u32 %v1937, 65535
  %v1942 = vshrl.u32 %v1937, 16
  %v1943 = vmul.u32 %v1939, %v1941
  %v1944 = vmul.u32 %v1939, %v1942
  %v1945 = vmul.u32 %v1940, %v1941
  %v1946 = vmul.u32 %v1940, %v1942
  %v1947 = vshll.u32 %v1944, 16
  %v1948 = vshrl.u32 %v1944, 16
  %v1949 = vshll.u32 %v1945, 16
  %v1950 = vshrl.u32 %v1945, 16
  %vm1951 = vc.u32 %v1943, %v1947
  %v1952 = vsel %vm1951, 1, 0
  %v1953 = vadd.s32 %v1943, %v1947
  %v1954 = vadd.s32 %v1946, %v1952
  %vm1955 = vc.u32 %v1953, %v1949
  %v1956 = vsel %vm1955, 1, 0
  %v1957 = vadd.s32 %v1953, %v1949
  %v1958 = vadd.s32 %v1954, %v1956
  %v1959 = vadd.s32 %v1958, %v1948
  %v1960 = vadd.s32 %v1959, %v1950
  %v1961 = vand.u32 %v1938, 65535
  %v1962 = vshrl.u32 %v1938, 16
  %v1963 = vand.u32 %v1933, 65535
  %v1964 = vshrl.u32 %v1933, 16
  %v1965 = vmul.u32 %v1961, %v1963
  %v1966 = vmul.u32 %v1961, %v1964
  %v1967 = vmul.u32 %v1962, %v1963
  %v1968 = vmul.u32 %v1962, %v1964
  %v1969 = vshll.u32 %v1966, 16
  %v1970 = vshrl.u32 %v1966, 16
  %v1971 = vshll.u32 %v1967, 16
  %v1972 = vshrl.u32 %v1967, 16
  %vm1973 = vc.u32 %v1965, %v1969
  %v1974 = vsel %vm1973, 1, 0
  %v1975 = vadd.s32 %v1965, %v1969
  %v1976 = vadd.s32 %v1968, %v1974
  %vm1977 = vc.u32 %v1975, %v1971
  %v1978 = vsel %vm1977, 1, 0
  %v1979 = vadd.s32 %v1975, %v1971
  %v1980 = vadd.s32 %v1976, %v1978
  %v1981 = vadd.s32 %v1980, %v1970
  %v1982 = vadd.s32 %v1981, %v1972
  %v1983 = vmul.u32 %v1938, %v1929
  %v1984 = vadd.s32 %v1960, %v1979
  %vm1985 = vc.u32 %v1960, %v1979
  %v1986 = vadd.s32 %v1982, 1
  %v1987 = vsel %vm1985, %v1986, %v1982
  %v1988 = vadd.s32 %v1983, %v1987
  %v1989 = vadd.s32 %v1988, 536870912
  %v1990 = vshrl.u32 %v1989, 30
  %v1991 = vshll.u32 %v1990, 30
  %v1992 = vsub.s32 %v1988, %v1991
  %vm1993 = vcmp.lt.s32.totalorder %v1992, 0
  %v1994 = vsub.s32 0, %v1992
  %v1995 = vsel %vm1993, %v1994, %v1992
  %v1996 = vclz %v1995
  %v1997 = vsub.s32 %v1996, 2
  %vm1998 = vcmp.gt.s32.totalorder 0, %v1997
  %v1999 = vsel %vm1998, 0, %v1997
  %v2000 = vsub.s32 32, %v1999
  %v2001 = vshll.u32 %v1992, %v1999
  %v2002 = vshrl.u32 %v1984, %v2000
  %v2003 = vor.u32 %v2001, %v2002
  %v2004 = vsub.s32 4294967266, %v1999
  %v2005 = vadd.s32 %v2004, 127
  %v2006 = vshll.u32 %v2005, 23
  %v2007 = vor.u32 4788187, %v2006
  %v2008 = vand.u32 2147483647, %v2007
  %v2010 = vcvt.s32.f32 %v2003
  %v2011 = vmul.f32 %v2010, %v2008
  %v2012 = vxor.u32 %v2011, 2147483648
  %v2013 = vsel %vm1892, %v2012, %v2011
  %v2014 = vsub.s32 4, %v1990
  %v2015 = vsel %vm1892, %v2014, %v1990
  %v2016 = vsel %vm1891, %v171, %v2013
  %v2017 = vsel %vm1891, 0, %v2015
  %v2018 = vmul.f32 %v2016, %v2016
  %v2019 = vmul.f32 %v2018, -0.001358992
  %v2020 = vadd.f32 %v2019, 0.041655596
  %v2021 = vmul.f32 %v2018, %v2020
  %v2022 = vadd.f32 %v2021, -0.4999988
  %v2023 = vmul.f32 %v2018, %v2022
  %v2024 = vadd.f32 1.0, %v2023
  %v2025 = vmul.f32 %v2016, %v2016
  %v2026 = vmul.f32 %v2025, -0.00019511016
  %v2027 = vadd.f32 %v2026, 0.008332121
  %v2028 = vmul.f32 %v2025, %v2027
  %v2029 = vadd.f32 %v2028, -0.16666654
  %v2030 = vmul.f32 %v2025, %v2029
  %v2031 = vadd.f32 %v2030, 1.0
  %v2032 = vmul.f32 %v2031, %v2016
  %vm2033 = vweird.f32 %v171
  %v2034 = vadd.s32 %v2017, 3
  %v2035 = vand.u32 %v2034, 3
  %vm2036 = vcmp.lt.s32.totalorder %v2035, 2
  %vm2037 = vcmp.eq.s32.totalorder %v2035, 0
  %v2038 = vxor.u32 %v2032, 2147483648
  %v2039 = vsel %vm2037, %v2024, %v2038
  %vm2040 = vcmp.eq.s32.totalorder %v2035, 2
  %v2041 = vxor.u32 %v2024, 2147483648
  %v2042 = vsel %vm2040, %v2041, %v2032
  %v2043 = vsel %vm2036, %v2039, %v2042
  %v2044 = vsel %vm2033, nan, %v2043
  %v2045 = vand.u32 2147483647, %v174
  %vm2046 = vcmp.le.f32.partialorder %v2045, 0.7853982
  %vm2047 = vcmp.lt.s32.totalorder %v174, 0
  %v2048 = vand.u32 %v174, 2139095040
  %v2049 = vshrl.u32 %v2048, 23
  %v2050 = vsub.s32 %v2049, 127
  %v2051 = vand.u32 2147483647, %v174
  %v2052 = vand.u32 %v2051, 8388607
  %v2053 = vor.u32 %v2052, 8388608
  %v2054 = vsub.s32 0, %v2053
  %v2055 = vadd.s32 %v2050, 1
  %vm2056 = vcmp.gt.s32.totalorder %v2055, 0
  %v2057 = vsel %vm2056, %v2055, 0
  %v2058 = vshrl.u32 %v2057, 5
  %v2059 = vand.u32 %v2057, 31
  %v2060 = vsub.s32 32, %v2059
  %v2061 = vshrl.u32 683565275, %v2060
  %v2062 = vshll.u32 683565275, %v2059
  %v2063 = vshrl.u32 2475754826, %v2060
  %v2064 = vor.u32 %v2062, %v2063
  %v2065 = vshll.u32 2475754826, %v2059
  %v2066 = vshrl.u32 2131351028, %v2060
  %v2067 = vor.u32 %v2065, %v2066
  %v2068 = vshll.u32 2131351028, %v2059
  %v2069 = vshrl.u32 2102212464, %v2060
  %v2070 = vor.u32 %v2068, %v2069
  %v2071 = vshll.u32 2102212464, %v2059
  %v2072 = vshrl.u32 920167782, %v2060
  %v2073 = vor.u32 %v2071, %v2072
  %v2074 = vshll.u32 920167782, %v2059
  %v2075 = vshrl.u32 1326507024, %v2060
  %v2076 = vor.u32 %v2074, %v2075
  %vm2077 = vcmp.lt.s32.totalorder %v2058, 1
  %vm2078 = vcmp.lt.s32.totalorder %v2058, 2
  %vm2079 = vcmp.lt.s32.totalorder %v2058, 3
  %vm2080 = vcmp.lt.s32.totalorder %v2058, 4
  %v2081 = vsel %vm2077, %v2061, %v2064
  %v2082 = vsel %vm2080, %v2070, 2102212464
  %v2083 = vsel %vm2079, %v2067, %v2082
  %v2084 = vsel %vm2078, %v2081, %v2083
  %v2085 = vsel %vm2077, %v2064, %v2067
  %v2086 = vsel %vm2080, %v2073, 920167782
  %v2087 = vsel %vm2079, %v2070, %v2086
  %v2088 = vsel %vm2078, %v2085, %v2087
  %v2089 = vsel %vm2077, %v2067, %v2070
  %v2090 = vsel %vm2080, %v2076, 1326507024
  %v2091 = vsel %vm2079, %v2073, %v2090
  %v2092 = vsel %vm2078, %v2089, %v2091
  %v2093 = vshll.u32 %v2053, 8
  %v2094 = vand.u32 %v2093, 65535
  %v2095 = vshrl.u32 %v2093, 16
  %v2096 = vand.u32 %v2092, 65535
  %v2097 = vshrl.u32 %v2092, 16
  %v2098 = vmul.u32 %v2094, %v2096
  %v2099 = vmul.u32 %v2094, %v2097
  %v2100 = vmul.u32 %v2095, %v2096
  %v2101 = vmul.u32 %v2095, %v2097
  %v2102 = vshll.u32 %v2099, 16
  %v2103 = vshrl.u32 %v2099, 16
  %v2104 = vshll.u32 %v2100, 16
  %v2105 = vshrl.u32 %v2100, 16
  %vm2106 = vc.u32 %v2098, %v2102
  %v2107 = vsel %vm2106, 1, 0
  %v2108 = vadd.s32 %v2098, %v2102
  %v2109 = vadd.s32 %v2101, %v2107
  %vm2110 = vc.u32 %v2108, %v2104
  %v2111 = vsel %vm2110, 1, 0
  %v2112 = vadd.s32 %v2108, %v2104
  %v2113 = vadd.s32 %v2109, %v2111
  %v2114 = vadd.s32 %v2113, %v2103
  %v2115 = vadd.s32 %v2114, %v2105
  %v2116 = vand.u32 %v2093, 65535
  %v2117 = vshrl.u32 %v2093, 16
  %v2118 = vand.u32 %v2088, 65535
  %v2119 = vshrl.u32 %v2088, 16
  %v2120 = vmul.u32 %v2116, %v2118
  %v2121 = vmul.u32 %v2116, %v2119
  %v2122 = vmul.u32 %v2117, %v2118
  %v2123 = vmul.u32 %v2117, %v2119
  %v2124 = vshll.u32 %v2121, 16
  %v2125 = vshrl.u32 %v2121, 16
  %v2126 = vshll.u32 %v2122, 16
  %v2127 = vshrl.u32 %v2122, 16
  %vm2128 = vc.u32 %v2120, %v2124
  %v2129 = vsel %vm2128, 1, 0
  %v2130 = vadd.s32 %v2120, %v2124
  %v2131 = vadd.s32 %v2123, %v2129
  %vm2132 = vc.u32 %v2130, %v2126
  %v2133 = vsel %vm2132, 1, 0
  %v2134 = vadd.s32 %v2130, %v2126
  %v2135 = vadd.s32 %v2131, %v2133
  %v2136 = vadd.s32 %v2135, %v2125
  %v2137 = vadd.s32 %v2136, %v2127
  %v2138 = vmul.u32 %v2093, %v2084
  %v2139 = vadd.s32 %v2115, %v2134
  %vm2140 = vc.u32 %v2115, %v2134
  %v2141 = vadd.s32 %v2137, 1
  %v2142 = vsel %vm2140, %v2141, %v2137
  %v2143 = vadd.s32 %v2138, %v2142
  %v2144 = vadd.s32 %v2143, 536870912
  %v2145 = vshrl.u32 %v2144, 30
  %v2146 = vshll.u32 %v2145, 30
  %v2147 = vsub.s32 %v2143, %v2146
  %vm2148 = vcmp.lt.s32.totalorder %v2147, 0
  %v2149 = vsub.s32 0, %v2147
  %v2150 = vsel %vm2148, %v2149, %v2147
  %v2151 = vclz %v2150
  %v2152 = vsub.s32 %v2151, 2
  %vm2153 = vcmp.gt.s32.totalorder 0, %v2152
  %v2154 = vsel %vm2153, 0, %v2152
  %v2155 = vsub.s32 32, %v2154
  %v2156 = vshll.u32 %v2147, %v2154
  %v2157 = vshrl.u32 %v2139, %v2155
  %v2158 = vor.u32 %v2156, %v2157
  %v2159 = vsub.s32 4294967266, %v2154
  %v2160 = vadd.s32 %v2159, 127
  %v2161 = vshll.u32 %v2160, 23
  %v2162 = vor.u32 4788187, %v2161
  %v2163 = vand.u32 2147483647, %v2162
  %v2165 = vcvt.s32.f32 %v2158
  %v2166 = vmul.f32 %v2165, %v2163
  %v2167 = vxor.u32 %v2166, 2147483648
  %v2168 = vsel %vm2047, %v2167, %v2166
  %v2169 = vsub.s32 4, %v2145
  %v2170 = vsel %vm2047, %v2169, %v2145
  %v2171 = vsel %vm2046, %v174, %v2168
  %v2172 = vsel %vm2046, 0, %v2170
  %v2173 = vmul.f32 %v2171, %v2171
  %v2174 = vmul.f32 %v2173, -0.001358992
  %v2175 = vadd.f32 %v2174, 0.041655596
  %v2176 = vmul.f32 %v2173, %v2175
  %v2177 = vadd.f32 %v2176, -0.4999988
  %v2178 = vmul.f32 %v2173, %v2177
  %v2179 = vadd.f32 1.0, %v2178
  %v2180 = vmul.f32 %v2171, %v2171
  %v2181 = vmul.f32 %v2180, -0.00019511016
  %v2182 = vadd.f32 %v2181, 0.008332121
  %v2183 = vmul.f32 %v2180, %v2182
  %v2184 = vadd.f32 %v2183, -0.16666654
  %v2185 = vmul.f32 %v2180, %v2184
  %v2186 = vadd.f32 %v2185, 1.0
  %v2187 = vmul.f32 %v2186, %v2171
  %vm2188 = vweird.f32 %v174
  %v2189 = vadd.s32 %v2172, 3
  %v2190 = vand.u32 %v2189, 3
  %vm2191 = vcmp.lt.s32.totalorder %v2190, 2
  %vm2192 = vcmp.eq.s32.totalorder %v2190, 0
  %v2193 = vxor.u32 %v2187, 2147483648
  %v2194 = vsel %vm2192, %v2179, %v2193
  %vm2195 = vcmp.eq.s32.totalorder %v2190, 2
  %v2196 = vxor.u32 %v2179, 2147483648
  %v2197 = vsel %vm2195, %v2196, %v2187
  %v2198 = vsel %vm2191, %v2194, %v2197
  %v2199 = vsel %vm2188, nan, %v2198
  %v2200 = vand.u32 2147483647, %v177
  %vm2201 = vcmp.le.f32.partialorder %v2200, 0.7853982
  %vm2202 = vcmp.lt.s32.totalorder %v177, 0
  %v2203 = vand.u32 %v177, 2139095040
  %v2204 = vshrl.u32 %v2203, 23
  %v2205 = vsub.s32 %v2204, 127
  %v2206 = vand.u32 2147483647, %v177
  %v2207 = vand.u32 %v2206, 8388607
  %v2208 = vor.u32 %v2207, 8388608
  %v2209 = vsub.s32 0, %v2208
  %v2210 = vadd.s32 %v2205, 1
  %vm2211 = vcmp.gt.s32.totalorder %v2210, 0
  %v2212 = vsel %vm2211, %v2210, 0
  %v2213 = vshrl.u32 %v2212, 5
  %v2214 = vand.u32 %v2212, 31
  %v2215 = vsub.s32 32, %v2214
  %v2216 = vshrl.u32 683565275, %v2215
  %v2217 = vshll.u32 683565275, %v2214
  %v2218 = vshrl.u32 2475754826, %v2215
  %v2219 = vor.u32 %v2217, %v2218
  %v2220 = vshll.u32 2475754826, %v2214
  %v2221 = vshrl.u32 2131351028, %v2215
  %v2222 = vor.u32 %v2220, %v2221
  %v2223 = vshll.u32 2131351028, %v2214
  %v2224 = vshrl.u32 2102212464, %v2215
  %v2225 = vor.u32 %v2223, %v2224
  %v2226 = vshll.u32 2102212464, %v2214
  %v2227 = vshrl.u32 920167782, %v2215
  %v2228 = vor.u32 %v2226, %v2227
  %v2229 = vshll.u32 920167782, %v2214
  %v2230 = vshrl.u32 1326507024, %v2215
  %v2231 = vor.u32 %v2229, %v2230
  %vm2232 = vcmp.lt.s32.totalorder %v2213, 1
  %vm2233 = vcmp.lt.s32.totalorder %v2213, 2
  %vm2234 = vcmp.lt.s32.totalorder %v2213, 3
  %vm2235 = vcmp.lt.s32.totalorder %v2213, 4
  %v2236 = vsel %vm2232, %v2216, %v2219
  %v2237 = vsel %vm2235, %v2225, 2102212464
  %v2238 = vsel %vm2234, %v2222, %v2237
  %v2239 = vsel %vm2233, %v2236, %v2238
  %v2240 = vsel %vm2232, %v2219, %v2222
  %v2241 = vsel %vm2235, %v2228, 920167782
  %v2242 = vsel %vm2234, %v2225, %v2241
  %v2243 = vsel %vm2233, %v2240, %v2242
  %v2244 = vsel %vm2232, %v2222, %v2225
  %v2245 = vsel %vm2235, %v2231, 1326507024
  %v2246 = vsel %vm2234, %v2228, %v2245
  %v2247 = vsel %vm2233, %v2244, %v2246
  %v2248 = vshll.u32 %v2208, 8
  %v2249 = vand.u32 %v2248, 65535
  %v2250 = vshrl.u32 %v2248, 16
  %v2251 = vand.u32 %v2247, 65535
  %v2252 = vshrl.u32 %v2247, 16
  %v2253 = vmul.u32 %v2249, %v2251
  %v2254 = vmul.u32 %v2249, %v2252
  %v2255 = vmul.u32 %v2250, %v2251
  %v2256 = vmul.u32 %v2250, %v2252
  %v2257 = vshll.u32 %v2254, 16
  %v2258 = vshrl.u32 %v2254, 16
  %v2259 = vshll.u32 %v2255, 16
  %v2260 = vshrl.u32 %v2255, 16
  %vm2261 = vc.u32 %v2253, %v2257
  %v2262 = vsel %vm2261, 1, 0
  %v2263 = vadd.s32 %v2253, %v2257
  %v2264 = vadd.s32 %v2256, %v2262
  %vm2265 = vc.u32 %v2263, %v2259
  %v2266 = vsel %vm2265, 1, 0
  %v2267 = vadd.s32 %v2263, %v2259
  %v2268 = vadd.s32 %v2264, %v2266
  %v2269 = vadd.s32 %v2268, %v2258
  %v2270 = vadd.s32 %v2269, %v2260
  %v2271 = vand.u32 %v2248, 65535
  %v2272 = vshrl.u32 %v2248, 16
  %v2273 = vand.u32 %v2243, 65535
  %v2274 = vshrl.u32 %v2243, 16
  %v2275 = vmul.u32 %v2271, %v2273
  %v2276 = vmul.u32 %v2271, %v2274
  %v2277 = vmul.u32 %v2272, %v2273
  %v2278 = vmul.u32 %v2272, %v2274
  %v2279 = vshll.u32 %v2276, 16
  %v2280 = vshrl.u32 %v2276, 16
  %v2281 = vshll.u32 %v2277, 16
  %v2282 = vshrl.u32 %v2277, 16
  %vm2283 = vc.u32 %v2275, %v2279
  %v2284 = vsel %vm2283, 1, 0
  %v2285 = vadd.s32 %v2275, %v2279
  %v2286 = vadd.s32 %v2278, %v2284
  %vm2287 = vc.u32 %v2285, %v2281
  %v2288 = vsel %vm2287, 1, 0
  %v2289 = vadd.s32 %v2285, %v2281
  %v2290 = vadd.s32 %v2286, %v2288
  %v2291 = vadd.s32 %v2290, %v2280
  %v2292 = vadd.s32 %v2291, %v2282
  %v2293 = vmul.u32 %v2248, %v2239
  %v2294 = vadd.s32 %v2270, %v2289
  %vm2295 = vc.u32 %v2270, %v2289
  %v2296 = vadd.s32 %v2292, 1
  %v2297 = vsel %vm2295, %v2296, %v2292
  %v2298 = vadd.s32 %v2293, %v2297
  %v2299 = vadd.s32 %v2298, 536870912
  %v2300 = vshrl.u32 %v2299, 30
  %v2301 = vshll.u32 %v2300, 30
  %v2302 = vsub.s32 %v2298, %v2301
  %vm2303 = vcmp.lt.s32.totalorder %v2302, 0
  %v2304 = vsub.s32 0, %v2302
  %v2305 = vsel %vm2303, %v2304, %v2302
  %v2306 = vclz %v2305
  %v2307 = vsub.s32 %v2306, 2
  %vm2308 = vcmp.gt.s32.totalorder 0, %v2307
  %v2309 = vsel %vm2308, 0, %v2307
  %v2310 = vsub.s32 32, %v2309
  %v2311 = vshll.u32 %v2302, %v2309
  %v2312 = vshrl.u32 %v2294, %v2310
  %v2313 = vor.u32 %v2311, %v2312
  %v2314 = vsub.s32 4294967266, %v2309
  %v2315 = vadd.s32 %v2314, 127
  %v2316 = vshll.u32 %v2315, 23
  %v2317 = vor.u32 4788187, %v2316
  %v2318 = vand.u32 2147483647, %v2317
  %v2320 = vcvt.s32.f32 %v2313
  %v2321 = vmul.f32 %v2320, %v2318
  %v2322 = vxor.u32 %v2321, 2147483648
  %v2323 = vsel %vm2202, %v2322, %v2321
  %v2324 = vsub.s32 4, %v2300
  %v2325 = vsel %vm2202, %v2324, %v2300
  %v2326 = vsel %vm2201, %v177, %v2323
  %v2327 = vsel %vm2201, 0, %v2325
  %v2328 = vmul.f32 %v2326, %v2326
  %v2329 = vmul.f32 %v2328, -0.001358992
  %v2330 = vadd.f32 %v2329, 0.041655596
  %v2331 = vmul.f32 %v2328, %v2330
  %v2332 = vadd.f32 %v2331, -0.4999988
  %v2333 = vmul.f32 %v2328, %v2332
  %v2334 = vadd.f32 1.0, %v2333
  %v2335 = vmul.f32 %v2326, %v2326
  %v2336 = vmul.f32 %v2335, -0.00019511016
  %v2337 = vadd.f32 %v2336, 0.008332121
  %v2338 = vmul.f32 %v2335, %v2337
  %v2339 = vadd.f32 %v2338, -0.16666654
  %v2340 = vmul.f32 %v2335, %v2339
  %v2341 = vadd.f32 %v2340, 1.0
  %v2342 = vmul.f32 %v2341, %v2326
  %vm2343 = vweird.f32 %v177
  %v2344 = vadd.s32 %v2327, 3
  %v2345 = vand.u32 %v2344, 3
  %vm2346 = vcmp.lt.s32.totalorder %v2345, 2
  %vm2347 = vcmp.eq.s32.totalorder %v2345, 0
  %v2348 = vxor.u32 %v2342, 2147483648
  %v2349 = vsel %vm2347, %v2334, %v2348
  %vm2350 = vcmp.eq.s32.totalorder %v2345, 2
  %v2351 = vxor.u32 %v2334, 2147483648
  %v2352 = vsel %vm2350, %v2351, %v2342
  %v2353 = vsel %vm2346, %v2349, %v2352
  %v2354 = vsel %vm2343, nan, %v2353
  %v2355 = vand.u32 2147483647, %v180
  %vm2356 = vcmp.le.f32.partialorder %v2355, 0.7853982
  %vm2357 = vcmp.lt.s32.totalorder %v180, 0
  %v2358 = vand.u32 %v180, 2139095040
  %v2359 = vshrl.u32 %v2358, 23
  %v2360 = vsub.s32 %v2359, 127
  %v2361 = vand.u32 2147483647, %v180
  %v2362 = vand.u32 %v2361, 8388607
  %v2363 = vor.u32 %v2362, 8388608
  %v2364 = vsub.s32 0, %v2363
  %v2365 = vadd.s32 %v2360, 1
  %vm2366 = vcmp.gt.s32.totalorder %v2365, 0
  %v2367 = vsel %vm2366, %v2365, 0
  %v2368 = vshrl.u32 %v2367, 5
  %v2369 = vand.u32 %v2367, 31
  %v2370 = vsub.s32 32, %v2369
  %v2371 = vshrl.u32 683565275, %v2370
  %v2372 = vshll.u32 683565275, %v2369
  %v2373 = vshrl.u32 2475754826, %v2370
  %v2374 = vor.u32 %v2372, %v2373
  %v2375 = vshll.u32 2475754826, %v2369
  %v2376 = vshrl.u32 2131351028, %v2370
  %v2377 = vor.u32 %v2375, %v2376
  %v2378 = vshll.u32 2131351028, %v2369
  %v2379 = vshrl.u32 2102212464, %v2370
  %v2380 = vor.u32 %v2378, %v2379
  %v2381 = vshll.u32 2102212464, %v2369
  %v2382 = vshrl.u32 920167782, %v2370
  %v2383 = vor.u32 %v2381, %v2382
  %v2384 = vshll.u32 920167782, %v2369
  %v2385 = vshrl.u32 1326507024, %v2370
  %v2386 = vor.u32 %v2384, %v2385
  %vm2387 = vcmp.lt.s32.totalorder %v2368, 1
  %vm2388 = vcmp.lt.s32.totalorder %v2368, 2
  %vm2389 = vcmp.lt.s32.totalorder %v2368, 3
  %vm2390 = vcmp.lt.s32.totalorder %v2368, 4
  %v2391 = vsel %vm2387, %v2371, %v2374
  %v2392 = vsel %vm2390, %v2380, 2102212464
  %v2393 = vsel %vm2389, %v2377, %v2392
  %v2394 = vsel %vm2388, %v2391, %v2393
  %v2395 = vsel %vm2387, %v2374, %v2377
  %v2396 = vsel %vm2390, %v2383, 920167782
  %v2397 = vsel %vm2389, %v2380, %v2396
  %v2398 = vsel %vm2388, %v2395, %v2397
  %v2399 = vsel %vm2387, %v2377, %v2380
  %v2400 = vsel %vm2390, %v2386, 1326507024
  %v2401 = vsel %vm2389, %v2383, %v2400
  %v2402 = vsel %vm2388, %v2399, %v2401
  %v2403 = vshll.u32 %v2363, 8
  %v2404 = vand.u32 %v2403, 65535
  %v2405 = vshrl.u32 %v2403, 16
  %v2406 = vand.u32 %v2402, 65535
  %v2407 = vshrl.u32 %v2402, 16
  %v2408 = vmul.u32 %v2404, %v2406
  %v2409 = vmul.u32 %v2404, %v2407
  %v2410 = vmul.u32 %v2405, %v2406
  %v2411 = vmul.u32 %v2405, %v2407
  %v2412 = vshll.u32 %v2409, 16
  %v2413 = vshrl.u32 %v2409, 16
  %v2414 = vshll.u32 %v2410, 16
  %v2415 = vshrl.u32 %v2410, 16
  %vm2416 = vc.u32 %v2408, %v2412
  %v2417 = vsel %vm2416, 1, 0
  %v2418 = vadd.s32 %v2408, %v2412
  %v2419 = vadd.s32 %v2411, %v2417
  %vm2420 = vc.u32 %v2418, %v2414
  %v2421 = vsel %vm2420, 1, 0
  %v2422 = vadd.s32 %v2418, %v2414
  %v2423 = vadd.s32 %v2419, %v2421
  %v2424 = vadd.s32 %v2423, %v2413
  %v2425 = vadd.s32 %v2424, %v2415
  %v2426 = vand.u32 %v2403, 65535
  %v2427 = vshrl.u32 %v2403, 16
  %v2428 = vand.u32 %v2398, 65535
  %v2429 = vshrl.u32 %v2398, 16
  %v2430 = vmul.u32 %v2426, %v2428
  %v2431 = vmul.u32 %v2426, %v2429
  %v2432 = vmul.u32 %v2427, %v2428
  %v2433 = vmul.u32 %v2427, %v2429
  %v2434 = vshll.u32 %v2431, 16
  %v2435 = vshrl.u32 %v2431, 16
  %v2436 = vshll.u32 %v2432, 16
  %v2437 = vshrl.u32 %v2432, 16
  %vm2438 = vc.u32 %v2430, %v2434
  %v2439 = vsel %vm2438, 1, 0
  %v2440 = vadd.s32 %v2430, %v2434
  %v2441 = vadd.s32 %v2433, %v2439
  %vm2442 = vc.u32 %v2440, %v2436
  %v2443 = vsel %vm2442, 1, 0
  %v2444 = vadd.s32 %v2440, %v2436
  %v2445 = vadd.s32 %v2441, %v2443
  %v2446 = vadd.s32 %v2445, %v2435
  %v2447 = vadd.s32 %v2446, %v2437
  %v2448 = vmul.u32 %v2403, %v2394
  %v2449 = vadd.s32 %v2425, %v2444
  %vm2450 = vc.u32 %v2425, %v2444
  %v2451 = vadd.s32 %v2447, 1
  %v2452 = vsel %vm2450, %v2451, %v2447
  %v2453 = vadd.s32 %v2448, %v2452
  %v2454 = vadd.s32 %v2453, 536870912
  %v2455 = vshrl.u32 %v2454, 30
  %v2456 = vshll.u32 %v2455, 30
  %v2457 = vsub.s32 %v2453, %v2456
  %vm2458 = vcmp.lt.s32.totalorder %v2457, 0
  %v2459 = vsub.s32 0, %v2457
  %v2460 = vsel %vm2458, %v2459, %v2457
  %v2461 = vclz %v2460
  %v2462 = vsub.s32 %v2461, 2
  %vm2463 = vcmp.gt.s32.totalorder 0, %v2462
  %v2464 = vsel %vm2463, 0, %v2462
  %v2465 = vsub.s32 32, %v2464
  %v2466 = vshll.u32 %v2457, %v2464
  %v2467 = vshrl.u32 %v2449, %v2465
  %v2468 = vor.u32 %v2466, %v2467
  %v2469 = vsub.s32 4294967266, %v2464
  %v2470 = vadd.s32 %v2469, 127
  %v2471 = vshll.u32 %v2470, 23
  %v2472 = vor.u32 4788187, %v2471
  %v2473 = vand.u32 2147483647, %v2472
  %v2475 = vcvt.s32.f32 %v2468
  %v2476 = vmul.f32 %v2475, %v2473
  %v2477 = vxor.u32 %v2476, 2147483648
  %v2478 = vsel %vm2357, %v2477, %v2476
  %v2479 = vsub.s32 4, %v2455
  %v2480 = vsel %vm2357, %v2479, %v2455
  %v2481 = vsel %vm2356, %v180, %v2478
  %v2482 = vsel %vm2356, 0, %v2480
  %v2483 = vmul.f32 %v2481, %v2481
  %v2484 = vmul.f32 %v2483, -0.001358992
  %v2485 = vadd.f32 %v2484, 0.041655596
  %v2486 = vmul.f32 %v2483, %v2485
  %v2487 = vadd.f32 %v2486, -0.4999988
  %v2488 = vmul.f32 %v2483, %v2487
  %v2489 = vadd.f32 1.0, %v2488
  %v2490 = vmul.f32 %v2481, %v2481
  %v2491 = vmul.f32 %v2490, -0.00019511016
  %v2492 = vadd.f32 %v2491, 0.008332121
  %v2493 = vmul.f32 %v2490, %v2492
  %v2494 = vadd.f32 %v2493, -0.16666654
  %v2495 = vmul.f32 %v2490, %v2494
  %v2496 = vadd.f32 %v2495, 1.0
  %v2497 = vmul.f32 %v2496, %v2481
  %vm2498 = vweird.f32 %v180
  %v2499 = vadd.s32 %v2482, 3
  %v2500 = vand.u32 %v2499, 3
  %vm2501 = vcmp.lt.s32.totalorder %v2500, 2
  %vm2502 = vcmp.eq.s32.totalorder %v2500, 0
  %v2503 = vxor.u32 %v2497, 2147483648
  %v2504 = vsel %vm2502, %v2489, %v2503
  %vm2505 = vcmp.eq.s32.totalorder %v2500, 2
  %v2506 = vxor.u32 %v2489, 2147483648
  %v2507 = vsel %vm2505, %v2506, %v2497
  %v2508 = vsel %vm2501, %v2504, %v2507
  %v2509 = vsel %vm2498, nan, %v2508
  %v2510 = vand.u32 2147483647, %v183
  %vm2511 = vcmp.le.f32.partialorder %v2510, 0.7853982
  %vm2512 = vcmp.lt.s32.totalorder %v183, 0
  %v2513 = vand.u32 %v183, 2139095040
  %v2514 = vshrl.u32 %v2513, 23
  %v2515 = vsub.s32 %v2514, 127
  %v2516 = vand.u32 2147483647, %v183
  %v2517 = vand.u32 %v2516, 8388607
  %v2518 = vor.u32 %v2517, 8388608
  %v2519 = vsub.s32 0, %v2518
  %v2520 = vadd.s32 %v2515, 1
  %vm2521 = vcmp.gt.s32.totalorder %v2520, 0
  %v2522 = vsel %vm2521, %v2520, 0
  %v2523 = vshrl.u32 %v2522, 5
  %v2524 = vand.u32 %v2522, 31
  %v2525 = vsub.s32 32, %v2524
  %v2526 = vshrl.u32 683565275, %v2525
  %v2527 = vshll.u32 683565275, %v2524
  %v2528 = vshrl.u32 2475754826, %v2525
  %v2529 = vor.u32 %v2527, %v2528
  %v2530 = vshll.u32 2475754826, %v2524
  %v2531 = vshrl.u32 2131351028, %v2525
  %v2532 = vor.u32 %v2530, %v2531
  %v2533 = vshll.u32 2131351028, %v2524
  %v2534 = vshrl.u32 2102212464, %v2525
  %v2535 = vor.u32 %v2533, %v2534
  %v2536 = vshll.u32 2102212464, %v2524
  %v2537 = vshrl.u32 920167782, %v2525
  %v2538 = vor.u32 %v2536, %v2537
  %v2539 = vshll.u32 920167782, %v2524
  %v2540 = vshrl.u32 1326507024, %v2525
  %v2541 = vor.u32 %v2539, %v2540
  %vm2542 = vcmp.lt.s32.totalorder %v2523, 1
  %vm2543 = vcmp.lt.s32.totalorder %v2523, 2
  %vm2544 = vcmp.lt.s32.totalorder %v2523, 3
  %vm2545 = vcmp.lt.s32.totalorder %v2523, 4
  %v2546 = vsel %vm2542, %v2526, %v2529
  %v2547 = vsel %vm2545, %v2535, 2102212464
  %v2548 = vsel %vm2544, %v2532, %v2547
  %v2549 = vsel %vm2543, %v2546, %v2548
  %v2550 = vsel %vm2542, %v2529, %v2532
  %v2551 = vsel %vm2545, %v2538, 920167782
  %v2552 = vsel %vm2544, %v2535, %v2551
  %v2553 = vsel %vm2543, %v2550, %v2552
  %v2554 = vsel %vm2542, %v2532, %v2535
  %v2555 = vsel %vm2545, %v2541, 1326507024
  %v2556 = vsel %vm2544, %v2538, %v2555
  %v2557 = vsel %vm2543, %v2554, %v2556
  %v2558 = vshll.u32 %v2518, 8
  %v2559 = vand.u32 %v2558, 65535
  %v2560 = vshrl.u32 %v2558, 16
  %v2561 = vand.u32 %v2557, 65535
  %v2562 = vshrl.u32 %v2557, 16
  %v2563 = vmul.u32 %v2559, %v2561
  %v2564 = vmul.u32 %v2559, %v2562
  %v2565 = vmul.u32 %v2560, %v2561
  %v2566 = vmul.u32 %v2560, %v2562
  %v2567 = vshll.u32 %v2564, 16
  %v2568 = vshrl.u32 %v2564, 16
  %v2569 = vshll.u32 %v2565, 16
  %v2570 = vshrl.u32 %v2565, 16
  %vm2571 = vc.u32 %v2563, %v2567
  %v2572 = vsel %vm2571, 1, 0
  %v2573 = vadd.s32 %v2563, %v2567
  %v2574 = vadd.s32 %v2566, %v2572
  %vm2575 = vc.u32 %v2573, %v2569
  %v2576 = vsel %vm2575, 1, 0
  %v2577 = vadd.s32 %v2573, %v2569
  %v2578 = vadd.s32 %v2574, %v2576
  %v2579 = vadd.s32 %v2578, %v2568
  %v2580 = vadd.s32 %v2579, %v2570
  %v2581 = vand.u32 %v2558, 65535
  %v2582 = vshrl.u32 %v2558, 16
  %v2583 = vand.u32 %v2553, 65535
  %v2584 = vshrl.u32 %v2553, 16
  %v2585 = vmul.u32 %v2581, %v2583
  %v2586 = vmul.u32 %v2581, %v2584
  %v2587 = vmul.u32 %v2582, %v2583
  %v2588 = vmul.u32 %v2582, %v2584
  %v2589 = vshll.u32 %v2586, 16
  %v2590 = vshrl.u32 %v2586, 16
  %v2591 = vshll.u32 %v2587, 16
  %v2592 = vshrl.u32 %v2587, 16
  %vm2593 = vc.u32 %v2585, %v2589
  %v2594 = vsel %vm2593, 1, 0
  %v2595 = vadd.s32 %v2585, %v2589
  %v2596 = vadd.s32 %v2588, %v2594
  %vm2597 = vc.u32 %v2595, %v2591
  %v2598 = vsel %vm2597, 1, 0
  %v2599 = vadd.s32 %v2595, %v2591
  %v2600 = vadd.s32 %v2596, %v2598
  %v2601 = vadd.s32 %v2600, %v2590
  %v2602 = vadd.s32 %v2601, %v2592
  %v2603 = vmul.u32 %v2558, %v2549
  %v2604 = vadd.s32 %v2580, %v2599
  %vm2605 = vc.u32 %v2580, %v2599
  %v2606 = vadd.s32 %v2602, 1
  %v2607 = vsel %vm2605, %v2606, %v2602
  %v2608 = vadd.s32 %v2603, %v2607
  %v2609 = vadd.s32 %v2608, 536870912
  %v2610 = vshrl.u32 %v2609, 30
  %v2611 = vshll.u32 %v2610, 30
  %v2612 = vsub.s32 %v2608, %v2611
  %vm2613 = vcmp.lt.s32.totalorder %v2612, 0
  %v2614 = vsub.s32 0, %v2612
  %v2615 = vsel %vm2613, %v2614, %v2612
  %v2616 = vclz %v2615
  %v2617 = vsub.s32 %v2616, 2
  %vm2618 = vcmp.gt.s32.totalorder 0, %v2617
  %v2619 = vsel %vm2618, 0, %v2617
  %v2620 = vsub.s32 32, %v2619
  %v2621 = vshll.u32 %v2612, %v2619
  %v2622 = vshrl.u32 %v2604, %v2620
  %v2623 = vor.u32 %v2621, %v2622
  %v2624 = vsub.s32 4294967266, %v2619
  %v2625 = vadd.s32 %v2624, 127
  %v2626 = vshll.u32 %v2625, 23
  %v2627 = vor.u32 4788187, %v2626
  %v2628 = vand.u32 2147483647, %v2627
  %v2630 = vcvt.s32.f32 %v2623
  %v2631 = vmul.f32 %v2630, %v2628
  %v2632 = vxor.u32 %v2631, 2147483648
  %v2633 = vsel %vm2512, %v2632, %v2631
  %v2634 = vsub.s32 4, %v2610
  %v2635 = vsel %vm2512, %v2634, %v2610
  %v2636 = vsel %vm2511, %v183, %v2633
  %v2637 = vsel %vm2511, 0, %v2635
  %v2638 = vmul.f32 %v2636, %v2636
  %v2639 = vmul.f32 %v2638, -0.001358992
  %v2640 = vadd.f32 %v2639, 0.041655596
  %v2641 = vmul.f32 %v2638, %v2640
  %v2642 = vadd.f32 %v2641, -0.4999988
  %v2643 = vmul.f32 %v2638, %v2642
  %v2644 = vadd.f32 1.0, %v2643
  %v2645 = vmul.f32 %v2636, %v2636
  %v2646 = vmul.f32 %v2645, -0.00019511016
  %v2647 = vadd.f32 %v2646, 0.008332121
  %v2648 = vmul.f32 %v2645, %v2647
  %v2649 = vadd.f32 %v2648, -0.16666654
  %v2650 = vmul.f32 %v2645, %v2649
  %v2651 = vadd.f32 %v2650, 1.0
  %v2652 = vmul.f32 %v2651, %v2636
  %vm2653 = vweird.f32 %v183
  %v2654 = vadd.s32 %v2637, 3
  %v2655 = vand.u32 %v2654, 3
  %vm2656 = vcmp.lt.s32.totalorder %v2655, 2
  %vm2657 = vcmp.eq.s32.totalorder %v2655, 0
  %v2658 = vxor.u32 %v2652, 2147483648
  %v2659 = vsel %vm2657, %v2644, %v2658
  %vm2660 = vcmp.eq.s32.totalorder %v2655, 2
  %v2661 = vxor.u32 %v2644, 2147483648
  %v2662 = vsel %vm2660, %v2661, %v2652
  %v2663 = vsel %vm2656, %v2659, %v2662
  %v2664 = vsel %vm2653, nan, %v2663
  %v2665 = vld [vmem:[%s3] sm:$0x7]
  %v2666 = vpack.c.bf16 %v494, %v339
  %v2667 = vpack.c.bf16 %v804, %v649
  %v2668 = vpack.c.bf16 %v1114, %v959
  %v2669 = vpack.c.bf16 %v1424, %v1269
  %v2670 = vpack.c.bf16 %v1734, %v1579
  %v2671 = vpack.c.bf16 %v2044, %v1889
  %v2672 = vpack.c.bf16 %v2354, %v2199
  %v2673 = vpack.c.bf16 %v2664, %v2509
  %v2674 = vld [vmem:[%s4] sm:$0xf]
  %v2675 = vld [vmem:[%s4 + $0x4] sm:$0xf]
  %v2676 = vld [vmem:[%s4 + $0x8] sm:$0xf]
  %v2677 = vld [vmem:[%s4 + $0xc] sm:$0xf]
  %v2678 = vld [vmem:[%s4 + $0x10] sm:$0xf]
  %v2679 = vld [vmem:[%s4 + $0x14] sm:$0xf]
  %v2680 = vld [vmem:[%s4 + $0x18] sm:$0xf]
  %v2681 = vld [vmem:[%s4 + $0x1c] sm:$0xf]
  %v2682 = vld [vmem:[%s4 + $0x20] sm:$0xf]
  %v2683 = vld [vmem:[%s4 + $0x24] sm:$0xf]
  %v2684 = vld [vmem:[%s4 + $0x28] sm:$0xf]
  %v2685 = vld [vmem:[%s4 + $0x2c] sm:$0xf]
  %v2686 = vld [vmem:[%s4 + $0x30] sm:$0xf]
  %v2687 = vld [vmem:[%s4 + $0x34] sm:$0xf]
  %v2688 = vld [vmem:[%s4 + $0x38] sm:$0xf]
  %v2689 = vld [vmem:[%s4 + $0x3c] sm:$0xf]
  %v2706 = vunpack.c.l.b16 %v2674
  %v2707 = vunpack.c.l.b16 %v2675
  %v2708 = vunpack.c.l.b16 %v2676
  %v2709 = vunpack.c.l.b16 %v2677
  %v2710 = vunpack.c.l.b16 %v2678
  %v2711 = vunpack.c.l.b16 %v2679
  %v2712 = vunpack.c.l.b16 %v2680
  %v2713 = vunpack.c.l.b16 %v2681
  %v2714 = vunpack.c.l.b16 %v2682
  %v2715 = vunpack.c.l.b16 %v2683
  %v2716 = vunpack.c.l.b16 %v2684
  %v2717 = vunpack.c.l.b16 %v2685
  %v2718 = vunpack.c.l.b16 %v2686
  %v2719 = vunpack.c.l.b16 %v2687
  %v2720 = vunpack.c.l.b16 %v2688
  %v2721 = vunpack.c.l.b16 %v2689
  %v2722 = vpack.c.b16 %v2707, %v2706
  %v2723 = vpack.c.b16 %v2709, %v2708
  %v2724 = vpack.c.b16 %v2711, %v2710
  %v2725 = vpack.c.b16 %v2713, %v2712
  %v2726 = vpack.c.b16 %v2715, %v2714
  %v2727 = vpack.c.b16 %v2717, %v2716
  %v2728 = vpack.c.b16 %v2719, %v2718
  %v2729 = vpack.c.b16 %v2721, %v2720
  %2738 = vmatpush.bf16.msra.mxu0 %v2729
  %2739 = vmatpush.bf16.msra.mxu0 %v2728
  %2740 = vmatpush.bf16.msra.mxu0 %v2727
  %2741 = vmatpush.bf16.msra.mxu0 %v2726
  %2742 = vmatpush.bf16.msra.mxu0 %v2725
  %2743 = vmatpush.bf16.msra.mxu0 %v2724
  %2744 = vmatpush.bf16.msra.mxu0 %v2723
  %2745 = vmatpush.bf16.msra.mxu0 %v2722
  %2746 = vmatmul.bf16.gmra.mxu0 %v2666
  %v2747 = vpop.f32.mrf.mxu0
  %v2748 = vadd.f32 0.0, %v2747
  %v2749 = vpop.f32.mrf.mxu0
  %v2750 = vadd.f32 0.0, %v2749
  %2751 = vmatmul.bf16.gmra.mxu0 %v2667
  %v2752 = vpop.f32.mrf.mxu0
  %v2753 = vadd.f32 0.0, %v2752
  %v2754 = vpop.f32.mrf.mxu0
  %v2755 = vadd.f32 0.0, %v2754
  %2756 = vmatmul.bf16.gmra.mxu0 %v2668
  %v2757 = vpop.f32.mrf.mxu0
  %v2758 = vadd.f32 0.0, %v2757
  %v2759 = vpop.f32.mrf.mxu0
  %v2760 = vadd.f32 0.0, %v2759
  %2761 = vmatmul.bf16.gmra.mxu0 %v2669
  %v2762 = vpop.f32.mrf.mxu0
  %v2763 = vadd.f32 0.0, %v2762
  %v2764 = vpop.f32.mrf.mxu0
  %v2765 = vadd.f32 0.0, %v2764
  %2766 = vmatmul.bf16.gmra.mxu0 %v2670
  %v2767 = vpop.f32.mrf.mxu0
  %v2768 = vadd.f32 0.0, %v2767
  %v2769 = vpop.f32.mrf.mxu0
  %v2770 = vadd.f32 0.0, %v2769
  %2771 = vmatmul.bf16.gmra.mxu0 %v2671
  %v2772 = vpop.f32.mrf.mxu0
  %v2773 = vadd.f32 0.0, %v2772
  %v2774 = vpop.f32.mrf.mxu0
  %v2775 = vadd.f32 0.0, %v2774
  %2776 = vmatmul.bf16.gmra.mxu0 %v2672
  %v2777 = vpop.f32.mrf.mxu0
  %v2778 = vadd.f32 0.0, %v2777
  %v2779 = vpop.f32.mrf.mxu0
  %v2780 = vadd.f32 0.0, %v2779
  %2781 = vmatmul.bf16.gmra.mxu0 %v2673
  %v2782 = vpop.f32.mrf.mxu0
  %v2783 = vadd.f32 0.0, %v2782
  %v2784 = vpop.f32.mrf.mxu0
  %v2785 = vadd.f32 0.0, %v2784
  %2786 = vdwg.mxu0
  %v2788 = vsel %vm116, %v2665, 0
  %2790 = vmatpush.msra.mxu0 0.0
  %2791 = vmatpush.msra.mxu0 0.0
  %2792 = vmatpush.msra.mxu0 0.0
  %2793 = vmatpush.msra.mxu0 0.0
  %2794 = vmatpush.msra.mxu0 0.0
  %2795 = vmatpush.msra.mxu0 0.0
  %2796 = vmatpush.msra.mxu0 0.0
  %2797 = vmatpush.msra.mxu0 0.0
  %2798 = vmatpush.msra.mxu0 0.0
  %2799 = vmatpush.msra.mxu0 0.0
  %2800 = vmatpush.msra.mxu0 0.0
  %2801 = vmatpush.msra.mxu0 0.0
  %2802 = vmatpush.msra.mxu0 0.0
  %2803 = vmatpush.msra.mxu0 0.0
  %2804 = vmatpush.msra.mxu0 0.0
  %2805 = vmatpush.msra.mxu0 %v2788
  %2806 = vmatmul.f32.gmra.mxu0 %v69
  %v2807 = vpop.f32.mrf.mxu0
  %v2808 = vadd.f32 %v2748, %v2807
  %2809 = vmatmul.f32.gmra.mxu0 %v72
  %v2810 = vpop.f32.mrf.mxu0
  %v2811 = vadd.f32 %v2750, %v2810
  %2812 = vmatmul.f32.gmra.mxu0 %v75
  %v2813 = vpop.f32.mrf.mxu0
  %v2814 = vadd.f32 %v2753, %v2813
  %2815 = vmatmul.f32.gmra.mxu0 %v78
  %v2816 = vpop.f32.mrf.mxu0
  %v2817 = vadd.f32 %v2755, %v2816
  %2818 = vmatmul.f32.gmra.mxu0 %v81
  %v2819 = vpop.f32.mrf.mxu0
  %v2820 = vadd.f32 %v2758, %v2819
  %2821 = vmatmul.f32.gmra.mxu0 %v84
  %v2822 = vpop.f32.mrf.mxu0
  %v2823 = vadd.f32 %v2760, %v2822
  %2824 = vmatmul.f32.gmra.mxu0 %v87
  %v2825 = vpop.f32.mrf.mxu0
  %v2826 = vadd.f32 %v2763, %v2825
  %2827 = vmatmul.f32.gmra.mxu0 %v90
  %v2828 = vpop.f32.mrf.mxu0
  %v2829 = vadd.f32 %v2765, %v2828
  %2830 = vmatmul.f32.gmra.mxu0 %v93
  %v2831 = vpop.f32.mrf.mxu0
  %v2832 = vadd.f32 %v2768, %v2831
  %2833 = vmatmul.f32.gmra.mxu0 %v96
  %v2834 = vpop.f32.mrf.mxu0
  %v2835 = vadd.f32 %v2770, %v2834
  %2836 = vmatmul.f32.gmra.mxu0 %v99
  %v2837 = vpop.f32.mrf.mxu0
  %v2838 = vadd.f32 %v2773, %v2837
  %2839 = vmatmul.f32.gmra.mxu0 %v102
  %v2840 = vpop.f32.mrf.mxu0
  %v2841 = vadd.f32 %v2775, %v2840
  %2842 = vmatmul.f32.gmra.mxu0 %v105
  %v2843 = vpop.f32.mrf.mxu0
  %v2844 = vadd.f32 %v2778, %v2843
  %2845 = vmatmul.f32.gmra.mxu0 %v108
  %v2846 = vpop.f32.mrf.mxu0
  %v2847 = vadd.f32 %v2780, %v2846
  %2848 = vmatmul.f32.gmra.mxu0 %v111
  %v2849 = vpop.f32.mrf.mxu0
  %v2850 = vadd.f32 %v2783, %v2849
  %2851 = vmatmul.f32.gmra.mxu0 %v114
  %v2852 = vpop.f32.mrf.mxu0
  %v2853 = vadd.f32 %v2785, %v2852
  %2854 = vdwg.mxu0
  %v2855 = vld [vmem:[%s5] sm:$0x1]
  %v2857 = vperm.slane %v2855, 0
  %v2859 = vadd.f32 %v2808, %v2857
  %v2860 = vadd.f32 %v2811, %v2857
  %v2861 = vadd.f32 %v2814, %v2857
  %v2862 = vadd.f32 %v2817, %v2857
  %v2863 = vadd.f32 %v2820, %v2857
  %v2864 = vadd.f32 %v2823, %v2857
  %v2865 = vadd.f32 %v2826, %v2857
  %v2866 = vadd.f32 %v2829, %v2857
  %v2867 = vadd.f32 %v2832, %v2857
  %v2868 = vadd.f32 %v2835, %v2857
  %v2869 = vadd.f32 %v2838, %v2857
  %v2870 = vadd.f32 %v2841, %v2857
  %v2871 = vadd.f32 %v2844, %v2857
  %v2872 = vadd.f32 %v2847, %v2857
  %v2873 = vadd.f32 %v2850, %v2857
  %v2874 = vadd.f32 %v2853, %v2857
  %v2875 = vmul.f32 %v2859, 100.0
  %v2876 = vmul.f32 %v2860, 100.0
  %v2877 = vmul.f32 %v2861, 100.0
  %v2878 = vmul.f32 %v2862, 100.0
  %v2879 = vmul.f32 %v2863, 100.0
  %v2880 = vmul.f32 %v2864, 100.0
  %v2881 = vmul.f32 %v2865, 100.0
  %v2882 = vmul.f32 %v2866, 100.0
  %v2883 = vmul.f32 %v2867, 100.0
  %v2884 = vmul.f32 %v2868, 100.0
  %v2885 = vmul.f32 %v2869, 100.0
  %v2886 = vmul.f32 %v2870, 100.0
  %v2887 = vmul.f32 %v2871, 100.0
  %v2888 = vmul.f32 %v2872, 100.0
  %v2889 = vmul.f32 %v2873, 100.0
  %v2890 = vmul.f32 %v2874, 100.0
  %v2891 = vmin.f32 %v2875, 20.0
  %v2892 = vmin.f32 %v2876, 20.0
  %v2893 = vmin.f32 %v2877, 20.0
  %v2894 = vmin.f32 %v2878, 20.0
  %v2895 = vmin.f32 %v2879, 20.0
  %v2896 = vmin.f32 %v2880, 20.0
  %v2897 = vmin.f32 %v2881, 20.0
  %v2898 = vmin.f32 %v2882, 20.0
  %v2899 = vmin.f32 %v2883, 20.0
  %v2900 = vmin.f32 %v2884, 20.0
  %v2901 = vmin.f32 %v2885, 20.0
  %v2902 = vmin.f32 %v2886, 20.0
  %v2903 = vmin.f32 %v2887, 20.0
  %v2904 = vmin.f32 %v2888, 20.0
  %v2905 = vmin.f32 %v2889, 20.0
  %v2906 = vmin.f32 %v2890, 20.0
  %v2907 = vmul.f32 %v2891, 1.442695
  %v2908 = vpow.pop %v2907
  %v2909 = vmul.f32 %v2892, 1.442695
  %v2910 = vpow.pop %v2909
  %v2911 = vmul.f32 %v2893, 1.442695
  %v2912 = vpow.pop %v2911
  %v2913 = vmul.f32 %v2894, 1.442695
  %v2914 = vpow.pop %v2913
  %v2915 = vmul.f32 %v2895, 1.442695
  %v2916 = vpow.pop %v2915
  %v2917 = vmul.f32 %v2896, 1.442695
  %v2918 = vpow.pop %v2917
  %v2919 = vmul.f32 %v2897, 1.442695
  %v2920 = vpow.pop %v2919
  %v2921 = vmul.f32 %v2898, 1.442695
  %v2922 = vpow.pop %v2921
  %v2923 = vmul.f32 %v2899, 1.442695
  %v2924 = vpow.pop %v2923
  %v2925 = vmul.f32 %v2900, 1.442695
  %v2926 = vpow.pop %v2925
  %v2927 = vmul.f32 %v2901, 1.442695
  %v2928 = vpow.pop %v2927
  %v2929 = vmul.f32 %v2902, 1.442695
  %v2930 = vpow.pop %v2929
  %v2931 = vmul.f32 %v2903, 1.442695
  %v2932 = vpow.pop %v2931
  %v2933 = vmul.f32 %v2904, 1.442695
  %v2934 = vpow.pop %v2933
  %v2935 = vmul.f32 %v2905, 1.442695
  %v2936 = vpow.pop %v2935
  %v2937 = vmul.f32 %v2906, 1.442695
  %v2938 = vpow.pop %v2937
  %v2939 = vadd.f32 %v2908, 1.0
  %v2940 = vlog2.pop %v2939
  %v2941 = vmul.f32 %v2940, 0.6931472
  %v2942 = vmul.f32 -0.5, %v2908
  %v2943 = vadd.f32 %v2942, 1.0
  %v2944 = vmul.f32 %v2943, %v2908
  %v2945 = vand.u32 2147483647, %v2908
  %vm2946 = vcmp.lt.f32.partialorder %v2945, 0.0004427343
  %v2947 = vsel %vm2946, %v2944, %v2941
  %v2948 = vadd.f32 %v2910, 1.0
  %v2949 = vlog2.pop %v2948
  %v2950 = vmul.f32 %v2949, 0.6931472
  %v2951 = vmul.f32 -0.5, %v2910
  %v2952 = vadd.f32 %v2951, 1.0
  %v2953 = vmul.f32 %v2952, %v2910
  %v2954 = vand.u32 2147483647, %v2910
  %vm2955 = vcmp.lt.f32.partialorder %v2954, 0.0004427343
  %v2956 = vsel %vm2955, %v2953, %v2950
  %v2957 = vadd.f32 %v2912, 1.0
  %v2958 = vlog2.pop %v2957
  %v2959 = vmul.f32 %v2958, 0.6931472
  %v2960 = vmul.f32 -0.5, %v2912
  %v2961 = vadd.f32 %v2960, 1.0
  %v2962 = vmul.f32 %v2961, %v2912
  %v2963 = vand.u32 2147483647, %v2912
  %vm2964 = vcmp.lt.f32.partialorder %v2963, 0.0004427343
  %v2965 = vsel %vm2964, %v2962, %v2959
  %v2966 = vadd.f32 %v2914, 1.0
  %v2967 = vlog2.pop %v2966
  %v2968 = vmul.f32 %v2967, 0.6931472
  %v2969 = vmul.f32 -0.5, %v2914
  %v2970 = vadd.f32 %v2969, 1.0
  %v2971 = vmul.f32 %v2970, %v2914
  %v2972 = vand.u32 2147483647, %v2914
  %vm2973 = vcmp.lt.f32.partialorder %v2972, 0.0004427343
  %v2974 = vsel %vm2973, %v2971, %v2968
  %v2975 = vadd.f32 %v2916, 1.0
  %v2976 = vlog2.pop %v2975
  %v2977 = vmul.f32 %v2976, 0.6931472
  %v2978 = vmul.f32 -0.5, %v2916
  %v2979 = vadd.f32 %v2978, 1.0
  %v2980 = vmul.f32 %v2979, %v2916
  %v2981 = vand.u32 2147483647, %v2916
  %vm2982 = vcmp.lt.f32.partialorder %v2981, 0.0004427343
  %v2983 = vsel %vm2982, %v2980, %v2977
  %v2984 = vadd.f32 %v2918, 1.0
  %v2985 = vlog2.pop %v2984
  %v2986 = vmul.f32 %v2985, 0.6931472
  %v2987 = vmul.f32 -0.5, %v2918
  %v2988 = vadd.f32 %v2987, 1.0
  %v2989 = vmul.f32 %v2988, %v2918
  %v2990 = vand.u32 2147483647, %v2918
  %vm2991 = vcmp.lt.f32.partialorder %v2990, 0.0004427343
  %v2992 = vsel %vm2991, %v2989, %v2986
  %v2993 = vadd.f32 %v2920, 1.0
  %v2994 = vlog2.pop %v2993
  %v2995 = vmul.f32 %v2994, 0.6931472
  %v2996 = vmul.f32 -0.5, %v2920
  %v2997 = vadd.f32 %v2996, 1.0
  %v2998 = vmul.f32 %v2997, %v2920
  %v2999 = vand.u32 2147483647, %v2920
  %vm3000 = vcmp.lt.f32.partialorder %v2999, 0.0004427343
  %v3001 = vsel %vm3000, %v2998, %v2995
  %v3002 = vadd.f32 %v2922, 1.0
  %v3003 = vlog2.pop %v3002
  %v3004 = vmul.f32 %v3003, 0.6931472
  %v3005 = vmul.f32 -0.5, %v2922
  %v3006 = vadd.f32 %v3005, 1.0
  %v3007 = vmul.f32 %v3006, %v2922
  %v3008 = vand.u32 2147483647, %v2922
  %vm3009 = vcmp.lt.f32.partialorder %v3008, 0.0004427343
  %v3010 = vsel %vm3009, %v3007, %v3004
  %v3011 = vadd.f32 %v2924, 1.0
  %v3012 = vlog2.pop %v3011
  %v3013 = vmul.f32 %v3012, 0.6931472
  %v3014 = vmul.f32 -0.5, %v2924
  %v3015 = vadd.f32 %v3014, 1.0
  %v3016 = vmul.f32 %v3015, %v2924
  %v3017 = vand.u32 2147483647, %v2924
  %vm3018 = vcmp.lt.f32.partialorder %v3017, 0.0004427343
  %v3019 = vsel %vm3018, %v3016, %v3013
  %v3020 = vadd.f32 %v2926, 1.0
  %v3021 = vlog2.pop %v3020
  %v3022 = vmul.f32 %v3021, 0.6931472
  %v3023 = vmul.f32 -0.5, %v2926
  %v3024 = vadd.f32 %v3023, 1.0
  %v3025 = vmul.f32 %v3024, %v2926
  %v3026 = vand.u32 2147483647, %v2926
  %vm3027 = vcmp.lt.f32.partialorder %v3026, 0.0004427343
  %v3028 = vsel %vm3027, %v3025, %v3022
  %v3029 = vadd.f32 %v2928, 1.0
  %v3030 = vlog2.pop %v3029
  %v3031 = vmul.f32 %v3030, 0.6931472
  %v3032 = vmul.f32 -0.5, %v2928
  %v3033 = vadd.f32 %v3032, 1.0
  %v3034 = vmul.f32 %v3033, %v2928
  %v3035 = vand.u32 2147483647, %v2928
  %vm3036 = vcmp.lt.f32.partialorder %v3035, 0.0004427343
  %v3037 = vsel %vm3036, %v3034, %v3031
  %v3038 = vadd.f32 %v2930, 1.0
  %v3039 = vlog2.pop %v3038
  %v3040 = vmul.f32 %v3039, 0.6931472
  %v3041 = vmul.f32 -0.5, %v2930
  %v3042 = vadd.f32 %v3041, 1.0
  %v3043 = vmul.f32 %v3042, %v2930
  %v3044 = vand.u32 2147483647, %v2930
  %vm3045 = vcmp.lt.f32.partialorder %v3044, 0.0004427343
  %v3046 = vsel %vm3045, %v3043, %v3040
  %v3047 = vadd.f32 %v2932, 1.0
  %v3048 = vlog2.pop %v3047
  %v3049 = vmul.f32 %v3048, 0.6931472
  %v3050 = vmul.f32 -0.5, %v2932
  %v3051 = vadd.f32 %v3050, 1.0
  %v3052 = vmul.f32 %v3051, %v2932
  %v3053 = vand.u32 2147483647, %v2932
  %vm3054 = vcmp.lt.f32.partialorder %v3053, 0.0004427343
  %v3055 = vsel %vm3054, %v3052, %v3049
  %v3056 = vadd.f32 %v2934, 1.0
  %v3057 = vlog2.pop %v3056
  %v3058 = vmul.f32 %v3057, 0.6931472
  %v3059 = vmul.f32 -0.5, %v2934
  %v3060 = vadd.f32 %v3059, 1.0
  %v3061 = vmul.f32 %v3060, %v2934
  %v3062 = vand.u32 2147483647, %v2934
  %vm3063 = vcmp.lt.f32.partialorder %v3062, 0.0004427343
  %v3064 = vsel %vm3063, %v3061, %v3058
  %v3065 = vadd.f32 %v2936, 1.0
  %v3066 = vlog2.pop %v3065
  %v3067 = vmul.f32 %v3066, 0.6931472
  %v3068 = vmul.f32 -0.5, %v2936
  %v3069 = vadd.f32 %v3068, 1.0
  %v3070 = vmul.f32 %v3069, %v2936
  %v3071 = vand.u32 2147483647, %v2936
  %vm3072 = vcmp.lt.f32.partialorder %v3071, 0.0004427343
  %v3073 = vsel %vm3072, %v3070, %v3067
  %v3074 = vadd.f32 %v2938, 1.0
  %v3075 = vlog2.pop %v3074
  %v3076 = vmul.f32 %v3075, 0.6931472
  %v3077 = vmul.f32 -0.5, %v2938
  %v3078 = vadd.f32 %v3077, 1.0
  %v3079 = vmul.f32 %v3078, %v2938
  %v3080 = vand.u32 2147483647, %v2938
  %vm3081 = vcmp.lt.f32.partialorder %v3080, 0.0004427343
  %v3082 = vsel %vm3081, %v3079, %v3076
  %vm3083 = vcmp.gt.f32.partialorder %v2875, 20.0
  %vm3084 = vcmp.gt.f32.partialorder %v2876, 20.0
  %vm3085 = vcmp.gt.f32.partialorder %v2877, 20.0
  %vm3086 = vcmp.gt.f32.partialorder %v2878, 20.0
  %vm3087 = vcmp.gt.f32.partialorder %v2879, 20.0
  %vm3088 = vcmp.gt.f32.partialorder %v2880, 20.0
  %vm3089 = vcmp.gt.f32.partialorder %v2881, 20.0
  %vm3090 = vcmp.gt.f32.partialorder %v2882, 20.0
  %vm3091 = vcmp.gt.f32.partialorder %v2883, 20.0
  %vm3092 = vcmp.gt.f32.partialorder %v2884, 20.0
  %vm3093 = vcmp.gt.f32.partialorder %v2885, 20.0
  %vm3094 = vcmp.gt.f32.partialorder %v2886, 20.0
  %vm3095 = vcmp.gt.f32.partialorder %v2887, 20.0
  %vm3096 = vcmp.gt.f32.partialorder %v2888, 20.0
  %vm3097 = vcmp.gt.f32.partialorder %v2889, 20.0
  %vm3098 = vcmp.gt.f32.partialorder %v2890, 20.0
  %v3099 = vmul.f32 %v2947, 0.01
  %v3100 = vmul.f32 %v2956, 0.01
  %v3101 = vmul.f32 %v2965, 0.01
  %v3102 = vmul.f32 %v2974, 0.01
  %v3103 = vmul.f32 %v2983, 0.01
  %v3104 = vmul.f32 %v2992, 0.01
  %v3105 = vmul.f32 %v3001, 0.01
  %v3106 = vmul.f32 %v3010, 0.01
  %v3107 = vmul.f32 %v3019, 0.01
  %v3108 = vmul.f32 %v3028, 0.01
  %v3109 = vmul.f32 %v3037, 0.01
  %v3110 = vmul.f32 %v3046, 0.01
  %v3111 = vmul.f32 %v3055, 0.01
  %v3112 = vmul.f32 %v3064, 0.01
  %v3113 = vmul.f32 %v3073, 0.01
  %v3114 = vmul.f32 %v3082, 0.01
  %v3115 = vsel %vm3083, %v2859, %v3099
  %v3116 = vsel %vm3084, %v2860, %v3100
  %v3117 = vsel %vm3085, %v2861, %v3101
  %v3118 = vsel %vm3086, %v2862, %v3102
  %v3119 = vsel %vm3087, %v2863, %v3103
  %v3120 = vsel %vm3088, %v2864, %v3104
  %v3121 = vsel %vm3089, %v2865, %v3105
  %v3122 = vsel %vm3090, %v2866, %v3106
  %v3123 = vsel %vm3091, %v2867, %v3107
  %v3124 = vsel %vm3092, %v2868, %v3108
  %v3125 = vsel %vm3093, %v2869, %v3109
  %v3126 = vsel %vm3094, %v2870, %v3110
  %v3127 = vsel %vm3095, %v2871, %v3111
  %v3128 = vsel %vm3096, %v2872, %v3112
  %v3129 = vsel %vm3097, %v2873, %v3113
  %v3130 = vsel %vm3098, %v2874, %v3114
  %v3131 = vpack.c.bf16 %v3116, %v3115
  %v3132 = vpack.c.bf16 %v3118, %v3117
  %v3133 = vpack.c.bf16 %v3120, %v3119
  %v3134 = vpack.c.bf16 %v3122, %v3121
  %v3135 = vpack.c.bf16 %v3124, %v3123
  %v3136 = vpack.c.bf16 %v3126, %v3125
  %v3137 = vpack.c.bf16 %v3128, %v3127
  %v3138 = vpack.c.bf16 %v3130, %v3129
  %v3139 = vld [vmem:[%s6] sm:$0xf]
  %v3140 = vld [vmem:[%s6 + $0x4] sm:$0xf]
  %v3141 = vld [vmem:[%s6 + $0x8] sm:$0xf]
  %v3142 = vld [vmem:[%s6 + $0xc] sm:$0xf]
  %v3143 = vld [vmem:[%s7] sm:$0x1]
  %v3145 = vperm.slane %v3143, 0
  %v3151 = vunpack.c.l.b16 %v3139
  %v3152 = vunpack.c.l.b16 %v3140
  %v3153 = vunpack.c.l.b16 %v3141
  %v3154 = vunpack.c.l.b16 %v3142
  %v3155 = vpack.c.b16 %v3152, %v3151
  %v3156 = vpack.c.b16 %v3154, %v3153
  %vm3159 = vcmask 261120
  %v3161 = vsel %vm3159, %v3131, 0
  %v3164 = vsel %vm3159, %v3132, 0
  %v3167 = vsel %vm3159, %v3133, 0
  %v3170 = vsel %vm3159, %v3134, 0
  %v3173 = vsel %vm3159, %v3135, 0
  %v3176 = vsel %vm3159, %v3136, 0
  %v3179 = vsel %vm3159, %v3137, 0
  %v3182 = vsel %vm3159, %v3138, 0
  %3184 = vmatpush.bf16.msra.mxu0 0
  %3185 = vmatpush.bf16.msra.mxu0 0
  %3186 = vmatpush.bf16.msra.mxu0 0
  %3187 = vmatpush.bf16.msra.mxu0 0
  %3188 = vmatpush.bf16.msra.mxu0 0
  %3189 = vmatpush.bf16.msra.mxu0 0
  %3190 = vmatpush.bf16.msra.mxu0 %v3156
  %3191 = vmatpush.bf16.msra.mxu0 %v3155
  %3192 = vmatmul.bf16.gmra.mxu0 %v3161
  %v3193 = vpop.f32.mrf.mxu0
  %v3194 = vadd.f32 %v3145, %v3193
  %v3195 = vpop.f32.mrf.mxu0
  %v3196 = vadd.f32 %v3145, %v3195
  %3197 = vmatmul.bf16.gmra.mxu0 %v3164
  %v3198 = vpop.f32.mrf.mxu0
  %v3199 = vadd.f32 %v3145, %v3198
  %v3200 = vpop.f32.mrf.mxu0
  %v3201 = vadd.f32 %v3145, %v3200
  %3202 = vmatmul.bf16.gmra.mxu0 %v3167
  %v3203 = vpop.f32.mrf.mxu0
  %v3204 = vadd.f32 %v3145, %v3203
  %v3205 = vpop.f32.mrf.mxu0
  %v3206 = vadd.f32 %v3145, %v3205
  %3207 = vmatmul.bf16.gmra.mxu0 %v3170
  %v3208 = vpop.f32.mrf.mxu0
  %v3209 = vadd.f32 %v3145, %v3208
  %v3210 = vpop.f32.mrf.mxu0
  %v3211 = vadd.f32 %v3145, %v3210
  %3212 = vmatmul.bf16.gmra.mxu0 %v3173
  %v3213 = vpop.f32.mrf.mxu0
  %v3214 = vadd.f32 %v3145, %v3213
  %v3215 = vpop.f32.mrf.mxu0
  %v3216 = vadd.f32 %v3145, %v3215
  %3217 = vmatmul.bf16.gmra.mxu0 %v3176
  %v3218 = vpop.f32.mrf.mxu0
  %v3219 = vadd.f32 %v3145, %v3218
  %v3220 = vpop.f32.mrf.mxu0
  %v3221 = vadd.f32 %v3145, %v3220
  %3222 = vmatmul.bf16.gmra.mxu0 %v3179
  %v3223 = vpop.f32.mrf.mxu0
  %v3224 = vadd.f32 %v3145, %v3223
  %v3225 = vpop.f32.mrf.mxu0
  %v3226 = vadd.f32 %v3145, %v3225
  %3227 = vmatmul.bf16.gmra.mxu0 %v3182
  %v3228 = vpop.f32.mrf.mxu0
  %v3229 = vadd.f32 %v3145, %v3228
  %v3230 = vpop.f32.mrf.mxu0
  %v3231 = vadd.f32 %v3145, %v3230
  %3232 = vdwg.mxu0
  %v3233 = vmul.f32 %v3194, 100.0
  %v3234 = vmul.f32 %v3196, 100.0
  %v3235 = vmul.f32 %v3199, 100.0
  %v3236 = vmul.f32 %v3201, 100.0
  %v3237 = vmul.f32 %v3204, 100.0
  %v3238 = vmul.f32 %v3206, 100.0
  %v3239 = vmul.f32 %v3209, 100.0
  %v3240 = vmul.f32 %v3211, 100.0
  %v3241 = vmul.f32 %v3214, 100.0
  %v3242 = vmul.f32 %v3216, 100.0
  %v3243 = vmul.f32 %v3219, 100.0
  %v3244 = vmul.f32 %v3221, 100.0
  %v3245 = vmul.f32 %v3224, 100.0
  %v3246 = vmul.f32 %v3226, 100.0
  %v3247 = vmul.f32 %v3229, 100.0
  %v3248 = vmul.f32 %v3231, 100.0
  %v3249 = vmin.f32 %v3233, 20.0
  %v3250 = vmin.f32 %v3234, 20.0
  %v3251 = vmin.f32 %v3235, 20.0
  %v3252 = vmin.f32 %v3236, 20.0
  %v3253 = vmin.f32 %v3237, 20.0
  %v3254 = vmin.f32 %v3238, 20.0
  %v3255 = vmin.f32 %v3239, 20.0
  %v3256 = vmin.f32 %v3240, 20.0
  %v3257 = vmin.f32 %v3241, 20.0
  %v3258 = vmin.f32 %v3242, 20.0
  %v3259 = vmin.f32 %v3243, 20.0
  %v3260 = vmin.f32 %v3244, 20.0
  %v3261 = vmin.f32 %v3245, 20.0
  %v3262 = vmin.f32 %v3246, 20.0
  %v3263 = vmin.f32 %v3247, 20.0
  %v3264 = vmin.f32 %v3248, 20.0
  %v3265 = vmul.f32 %v3249, 1.442695
  %v3266 = vpow.pop %v3265
  %v3267 = vmul.f32 %v3250, 1.442695
  %v3268 = vpow.pop %v3267
  %v3269 = vmul.f32 %v3251, 1.442695
  %v3270 = vpow.pop %v3269
  %v3271 = vmul.f32 %v3252, 1.442695
  %v3272 = vpow.pop %v3271
  %v3273 = vmul.f32 %v3253, 1.442695
  %v3274 = vpow.pop %v3273
  %v3275 = vmul.f32 %v3254, 1.442695
  %v3276 = vpow.pop %v3275
  %v3277 = vmul.f32 %v3255, 1.442695
  %v3278 = vpow.pop %v3277
  %v3279 = vmul.f32 %v3256, 1.442695
  %v3280 = vpow.pop %v3279
  %v3281 = vmul.f32 %v3257, 1.442695
  %v3282 = vpow.pop %v3281
  %v3283 = vmul.f32 %v3258, 1.442695
  %v3284 = vpow.pop %v3283
  %v3285 = vmul.f32 %v3259, 1.442695
  %v3286 = vpow.pop %v3285
  %v3287 = vmul.f32 %v3260, 1.442695
  %v3288 = vpow.pop %v3287
  %v3289 = vmul.f32 %v3261, 1.442695
  %v3290 = vpow.pop %v3289
  %v3291 = vmul.f32 %v3262, 1.442695
  %v3292 = vpow.pop %v3291
  %v3293 = vmul.f32 %v3263, 1.442695
  %v3294 = vpow.pop %v3293
  %v3295 = vmul.f32 %v3264, 1.442695
  %v3296 = vpow.pop %v3295
  %v3297 = vadd.f32 %v3266, 1.0
  %v3298 = vlog2.pop %v3297
  %v3299 = vmul.f32 %v3298, 0.6931472
  %v3300 = vmul.f32 -0.5, %v3266
  %v3301 = vadd.f32 %v3300, 1.0
  %v3302 = vmul.f32 %v3301, %v3266
  %v3303 = vand.u32 2147483647, %v3266
  %vm3304 = vcmp.lt.f32.partialorder %v3303, 0.0004427343
  %v3305 = vsel %vm3304, %v3302, %v3299
  %v3306 = vadd.f32 %v3268, 1.0
  %v3307 = vlog2.pop %v3306
  %v3308 = vmul.f32 %v3307, 0.6931472
  %v3309 = vmul.f32 -0.5, %v3268
  %v3310 = vadd.f32 %v3309, 1.0
  %v3311 = vmul.f32 %v3310, %v3268
  %v3312 = vand.u32 2147483647, %v3268
  %vm3313 = vcmp.lt.f32.partialorder %v3312, 0.0004427343
  %v3314 = vsel %vm3313, %v3311, %v3308
  %v3315 = vadd.f32 %v3270, 1.0
  %v3316 = vlog2.pop %v3315
  %v3317 = vmul.f32 %v3316, 0.6931472
  %v3318 = vmul.f32 -0.5, %v3270
  %v3319 = vadd.f32 %v3318, 1.0
  %v3320 = vmul.f32 %v3319, %v3270
  %v3321 = vand.u32 2147483647, %v3270
  %vm3322 = vcmp.lt.f32.partialorder %v3321, 0.0004427343
  %v3323 = vsel %vm3322, %v3320, %v3317
  %v3324 = vadd.f32 %v3272, 1.0
  %v3325 = vlog2.pop %v3324
  %v3326 = vmul.f32 %v3325, 0.6931472
  %v3327 = vmul.f32 -0.5, %v3272
  %v3328 = vadd.f32 %v3327, 1.0
  %v3329 = vmul.f32 %v3328, %v3272
  %v3330 = vand.u32 2147483647, %v3272
  %vm3331 = vcmp.lt.f32.partialorder %v3330, 0.0004427343
  %v3332 = vsel %vm3331, %v3329, %v3326
  %v3333 = vadd.f32 %v3274, 1.0
  %v3334 = vlog2.pop %v3333
  %v3335 = vmul.f32 %v3334, 0.6931472
  %v3336 = vmul.f32 -0.5, %v3274
  %v3337 = vadd.f32 %v3336, 1.0
  %v3338 = vmul.f32 %v3337, %v3274
  %v3339 = vand.u32 2147483647, %v3274
  %vm3340 = vcmp.lt.f32.partialorder %v3339, 0.0004427343
  %v3341 = vsel %vm3340, %v3338, %v3335
  %v3342 = vadd.f32 %v3276, 1.0
  %v3343 = vlog2.pop %v3342
  %v3344 = vmul.f32 %v3343, 0.6931472
  %v3345 = vmul.f32 -0.5, %v3276
  %v3346 = vadd.f32 %v3345, 1.0
  %v3347 = vmul.f32 %v3346, %v3276
  %v3348 = vand.u32 2147483647, %v3276
  %vm3349 = vcmp.lt.f32.partialorder %v3348, 0.0004427343
  %v3350 = vsel %vm3349, %v3347, %v3344
  %v3351 = vadd.f32 %v3278, 1.0
  %v3352 = vlog2.pop %v3351
  %v3353 = vmul.f32 %v3352, 0.6931472
  %v3354 = vmul.f32 -0.5, %v3278
  %v3355 = vadd.f32 %v3354, 1.0
  %v3356 = vmul.f32 %v3355, %v3278
  %v3357 = vand.u32 2147483647, %v3278
  %vm3358 = vcmp.lt.f32.partialorder %v3357, 0.0004427343
  %v3359 = vsel %vm3358, %v3356, %v3353
  %v3360 = vadd.f32 %v3280, 1.0
  %v3361 = vlog2.pop %v3360
  %v3362 = vmul.f32 %v3361, 0.6931472
  %v3363 = vmul.f32 -0.5, %v3280
  %v3364 = vadd.f32 %v3363, 1.0
  %v3365 = vmul.f32 %v3364, %v3280
  %v3366 = vand.u32 2147483647, %v3280
  %vm3367 = vcmp.lt.f32.partialorder %v3366, 0.0004427343
  %v3368 = vsel %vm3367, %v3365, %v3362
  %v3369 = vadd.f32 %v3282, 1.0
  %v3370 = vlog2.pop %v3369
  %v3371 = vmul.f32 %v3370, 0.6931472
  %v3372 = vmul.f32 -0.5, %v3282
  %v3373 = vadd.f32 %v3372, 1.0
  %v3374 = vmul.f32 %v3373, %v3282
  %v3375 = vand.u32 2147483647, %v3282
  %vm3376 = vcmp.lt.f32.partialorder %v3375, 0.0004427343
  %v3377 = vsel %vm3376, %v3374, %v3371
  %v3378 = vadd.f32 %v3284, 1.0
  %v3379 = vlog2.pop %v3378
  %v3380 = vmul.f32 %v3379, 0.6931472
  %v3381 = vmul.f32 -0.5, %v3284
  %v3382 = vadd.f32 %v3381, 1.0
  %v3383 = vmul.f32 %v3382, %v3284
  %v3384 = vand.u32 2147483647, %v3284
  %vm3385 = vcmp.lt.f32.partialorder %v3384, 0.0004427343
  %v3386 = vsel %vm3385, %v3383, %v3380
  %v3387 = vadd.f32 %v3286, 1.0
  %v3388 = vlog2.pop %v3387
  %v3389 = vmul.f32 %v3388, 0.6931472
  %v3390 = vmul.f32 -0.5, %v3286
  %v3391 = vadd.f32 %v3390, 1.0
  %v3392 = vmul.f32 %v3391, %v3286
  %v3393 = vand.u32 2147483647, %v3286
  %vm3394 = vcmp.lt.f32.partialorder %v3393, 0.0004427343
  %v3395 = vsel %vm3394, %v3392, %v3389
  %v3396 = vadd.f32 %v3288, 1.0
  %v3397 = vlog2.pop %v3396
  %v3398 = vmul.f32 %v3397, 0.6931472
  %v3399 = vmul.f32 -0.5, %v3288
  %v3400 = vadd.f32 %v3399, 1.0
  %v3401 = vmul.f32 %v3400, %v3288
  %v3402 = vand.u32 2147483647, %v3288
  %vm3403 = vcmp.lt.f32.partialorder %v3402, 0.0004427343
  %v3404 = vsel %vm3403, %v3401, %v3398
  %v3405 = vadd.f32 %v3290, 1.0
  %v3406 = vlog2.pop %v3405
  %v3407 = vmul.f32 %v3406, 0.6931472
  %v3408 = vmul.f32 -0.5, %v3290
  %v3409 = vadd.f32 %v3408, 1.0
  %v3410 = vmul.f32 %v3409, %v3290
  %v3411 = vand.u32 2147483647, %v3290
  %vm3412 = vcmp.lt.f32.partialorder %v3411, 0.0004427343
  %v3413 = vsel %vm3412, %v3410, %v3407
  %v3414 = vadd.f32 %v3292, 1.0
  %v3415 = vlog2.pop %v3414
  %v3416 = vmul.f32 %v3415, 0.6931472
  %v3417 = vmul.f32 -0.5, %v3292
  %v3418 = vadd.f32 %v3417, 1.0
  %v3419 = vmul.f32 %v3418, %v3292
  %v3420 = vand.u32 2147483647, %v3292
  %vm3421 = vcmp.lt.f32.partialorder %v3420, 0.0004427343
  %v3422 = vsel %vm3421, %v3419, %v3416
  %v3423 = vadd.f32 %v3294, 1.0
  %v3424 = vlog2.pop %v3423
  %v3425 = vmul.f32 %v3424, 0.6931472
  %v3426 = vmul.f32 -0.5, %v3294
  %v3427 = vadd.f32 %v3426, 1.0
  %v3428 = vmul.f32 %v3427, %v3294
  %v3429 = vand.u32 2147483647, %v3294
  %vm3430 = vcmp.lt.f32.partialorder %v3429, 0.0004427343
  %v3431 = vsel %vm3430, %v3428, %v3425
  %v3432 = vadd.f32 %v3296, 1.0
  %v3433 = vlog2.pop %v3432
  %v3434 = vmul.f32 %v3433, 0.6931472
  %v3435 = vmul.f32 -0.5, %v3296
  %v3436 = vadd.f32 %v3435, 1.0
  %v3437 = vmul.f32 %v3436, %v3296
  %v3438 = vand.u32 2147483647, %v3296
  %vm3439 = vcmp.lt.f32.partialorder %v3438, 0.0004427343
  %v3440 = vsel %vm3439, %v3437, %v3434
  %vm3441 = vcmp.gt.f32.partialorder %v3233, 20.0
  %vm3442 = vcmp.gt.f32.partialorder %v3234, 20.0
  %vm3443 = vcmp.gt.f32.partialorder %v3235, 20.0
  %vm3444 = vcmp.gt.f32.partialorder %v3236, 20.0
  %vm3445 = vcmp.gt.f32.partialorder %v3237, 20.0
  %vm3446 = vcmp.gt.f32.partialorder %v3238, 20.0
  %vm3447 = vcmp.gt.f32.partialorder %v3239, 20.0
  %vm3448 = vcmp.gt.f32.partialorder %v3240, 20.0
  %vm3449 = vcmp.gt.f32.partialorder %v3241, 20.0
  %vm3450 = vcmp.gt.f32.partialorder %v3242, 20.0
  %vm3451 = vcmp.gt.f32.partialorder %v3243, 20.0
  %vm3452 = vcmp.gt.f32.partialorder %v3244, 20.0
  %vm3453 = vcmp.gt.f32.partialorder %v3245, 20.0
  %vm3454 = vcmp.gt.f32.partialorder %v3246, 20.0
  %vm3455 = vcmp.gt.f32.partialorder %v3247, 20.0
  %vm3456 = vcmp.gt.f32.partialorder %v3248, 20.0
  %v3457 = vmul.f32 %v3305, 0.01
  %v3458 = vmul.f32 %v3314, 0.01
  %v3459 = vmul.f32 %v3323, 0.01
  %v3460 = vmul.f32 %v3332, 0.01
  %v3461 = vmul.f32 %v3341, 0.01
  %v3462 = vmul.f32 %v3350, 0.01
  %v3463 = vmul.f32 %v3359, 0.01
  %v3464 = vmul.f32 %v3368, 0.01
  %v3465 = vmul.f32 %v3377, 0.01
  %v3466 = vmul.f32 %v3386, 0.01
  %v3467 = vmul.f32 %v3395, 0.01
  %v3468 = vmul.f32 %v3404, 0.01
  %v3469 = vmul.f32 %v3413, 0.01
  %v3470 = vmul.f32 %v3422, 0.01
  %v3471 = vmul.f32 %v3431, 0.01
  %v3472 = vmul.f32 %v3440, 0.01
  %v3473 = vsel %vm3441, %v3194, %v3457
  %v3474 = vsel %vm3442, %v3196, %v3458
  %v3475 = vsel %vm3443, %v3199, %v3459
  %v3476 = vsel %vm3444, %v3201, %v3460
  %v3477 = vsel %vm3445, %v3204, %v3461
  %v3478 = vsel %vm3446, %v3206, %v3462
  %v3479 = vsel %vm3447, %v3209, %v3463
  %v3480 = vsel %vm3448, %v3211, %v3464
  %v3481 = vsel %vm3449, %v3214, %v3465
  %v3482 = vsel %vm3450, %v3216, %v3466
  %v3483 = vsel %vm3451, %v3219, %v3467
  %v3484 = vsel %vm3452, %v3221, %v3468
  %v3485 = vsel %vm3453, %v3224, %v3469
  %v3486 = vsel %vm3454, %v3226, %v3470
  %v3487 = vsel %vm3455, %v3229, %v3471
  %v3488 = vsel %vm3456, %v3231, %v3472
  %v3489 = vpack.c.bf16 %v3474, %v3473
  %v3490 = vpack.c.bf16 %v3476, %v3475
  %v3491 = vpack.c.bf16 %v3478, %v3477
  %v3492 = vpack.c.bf16 %v3480, %v3479
  %v3493 = vpack.c.bf16 %v3482, %v3481
  %v3494 = vpack.c.bf16 %v3484, %v3483
  %v3495 = vpack.c.bf16 %v3486, %v3485
  %v3496 = vpack.c.bf16 %v3488, %v3487
  %s3497 = scalar_lea.vmem %s6, 16
  %v3498 = vld [vmem:[%s3497] sm:$0xf]
  %v3499 = vld [vmem:[%s3497 + $0x4] sm:$0xf]
  %v3500 = vld [vmem:[%s3497 + $0x8] sm:$0xf]
  %v3501 = vld [vmem:[%s3497 + $0xc] sm:$0xf]
  %s3502 = scalar_lea.vmem %s7, 1
  %v3503 = vld [vmem:[%s3502] sm:$0x1]
  %v3505 = vperm.slane %v3503, 0
  %v3511 = vunpack.c.l.b16 %v3498
  %v3512 = vunpack.c.l.b16 %v3499
  %v3513 = vunpack.c.l.b16 %v3500
  %v3514 = vunpack.c.l.b16 %v3501
  %v3515 = vpack.c.b16 %v3512, %v3511
  %v3516 = vpack.c.b16 %v3514, %v3513
  %v3520 = vsel %vm3159, %v3489, 0
  %v3523 = vsel %vm3159, %v3490, 0
  %v3526 = vsel %vm3159, %v3491, 0
  %v3529 = vsel %vm3159, %v3492, 0
  %v3532 = vsel %vm3159, %v3493, 0
  %v3535 = vsel %vm3159, %v3494, 0
  %v3538 = vsel %vm3159, %v3495, 0
  %v3541 = vsel %vm3159, %v3496, 0
  %3543 = vmatpush.bf16.msra.mxu0 0
  %3544 = vmatpush.bf16.msra.mxu0 0
  %3545 = vmatpush.bf16.msra.mxu0 0
  %3546 = vmatpush.bf16.msra.mxu0 0
  %3547 = vmatpush.bf16.msra.mxu0 0
  %3548 = vmatpush.bf16.msra.mxu0 0
  %3549 = vmatpush.bf16.msra.mxu0 %v3516
  %3550 = vmatpush.bf16.msra.mxu0 %v3515
  %3551 = vmatmul.bf16.gmra.mxu0 %v3520
  %v3552 = vpop.f32.mrf.mxu0
  %v3553 = vadd.f32 %v3505, %v3552
  %v3554 = vpop.f32.mrf.mxu0
  %v3555 = vadd.f32 %v3505, %v3554
  %3556 = vmatmul.bf16.gmra.mxu0 %v3523
  %v3557 = vpop.f32.mrf.mxu0
  %v3558 = vadd.f32 %v3505, %v3557
  %v3559 = vpop.f32.mrf.mxu0
  %v3560 = vadd.f32 %v3505, %v3559
  %3561 = vmatmul.bf16.gmra.mxu0 %v3526
  %v3562 = vpop.f32.mrf.mxu0
  %v3563 = vadd.f32 %v3505, %v3562
  %v3564 = vpop.f32.mrf.mxu0
  %v3565 = vadd.f32 %v3505, %v3564
  %3566 = vmatmul.bf16.gmra.mxu0 %v3529
  %v3567 = vpop.f32.mrf.mxu0
  %v3568 = vadd.f32 %v3505, %v3567
  %v3569 = vpop.f32.mrf.mxu0
  %v3570 = vadd.f32 %v3505, %v3569
  %3571 = vmatmul.bf16.gmra.mxu0 %v3532
  %v3572 = vpop.f32.mrf.mxu0
  %v3573 = vadd.f32 %v3505, %v3572
  %v3574 = vpop.f32.mrf.mxu0
  %v3575 = vadd.f32 %v3505, %v3574
  %3576 = vmatmul.bf16.gmra.mxu0 %v3535
  %v3577 = vpop.f32.mrf.mxu0
  %v3578 = vadd.f32 %v3505, %v3577
  %v3579 = vpop.f32.mrf.mxu0
  %v3580 = vadd.f32 %v3505, %v3579
  %3581 = vmatmul.bf16.gmra.mxu0 %v3538
  %v3582 = vpop.f32.mrf.mxu0
  %v3583 = vadd.f32 %v3505, %v3582
  %v3584 = vpop.f32.mrf.mxu0
  %v3585 = vadd.f32 %v3505, %v3584
  %3586 = vmatmul.bf16.gmra.mxu0 %v3541
  %v3587 = vpop.f32.mrf.mxu0
  %v3588 = vadd.f32 %v3505, %v3587
  %v3589 = vpop.f32.mrf.mxu0
  %v3590 = vadd.f32 %v3505, %v3589
  %3591 = vdwg.mxu0
  %v3592 = vmul.f32 %v3553, 100.0
  %v3593 = vmul.f32 %v3555, 100.0
  %v3594 = vmul.f32 %v3558, 100.0
  %v3595 = vmul.f32 %v3560, 100.0
  %v3596 = vmul.f32 %v3563, 100.0
  %v3597 = vmul.f32 %v3565, 100.0
  %v3598 = vmul.f32 %v3568, 100.0
  %v3599 = vmul.f32 %v3570, 100.0
  %v3600 = vmul.f32 %v3573, 100.0
  %v3601 = vmul.f32 %v3575, 100.0
  %v3602 = vmul.f32 %v3578, 100.0
  %v3603 = vmul.f32 %v3580, 100.0
  %v3604 = vmul.f32 %v3583, 100.0
  %v3605 = vmul.f32 %v3585, 100.0
  %v3606 = vmul.f32 %v3588, 100.0
  %v3607 = vmul.f32 %v3590, 100.0
  %v3608 = vmin.f32 %v3592, 20.0
  %v3609 = vmin.f32 %v3593, 20.0
  %v3610 = vmin.f32 %v3594, 20.0
  %v3611 = vmin.f32 %v3595, 20.0
  %v3612 = vmin.f32 %v3596, 20.0
  %v3613 = vmin.f32 %v3597, 20.0
  %v3614 = vmin.f32 %v3598, 20.0
  %v3615 = vmin.f32 %v3599, 20.0
  %v3616 = vmin.f32 %v3600, 20.0
  %v3617 = vmin.f32 %v3601, 20.0
  %v3618 = vmin.f32 %v3602, 20.0
  %v3619 = vmin.f32 %v3603, 20.0
  %v3620 = vmin.f32 %v3604, 20.0
  %v3621 = vmin.f32 %v3605, 20.0
  %v3622 = vmin.f32 %v3606, 20.0
  %v3623 = vmin.f32 %v3607, 20.0
  %v3624 = vmul.f32 %v3608, 1.442695
  %v3625 = vpow.pop %v3624
  %v3626 = vmul.f32 %v3609, 1.442695
  %v3627 = vpow.pop %v3626
  %v3628 = vmul.f32 %v3610, 1.442695
  %v3629 = vpow.pop %v3628
  %v3630 = vmul.f32 %v3611, 1.442695
  %v3631 = vpow.pop %v3630
  %v3632 = vmul.f32 %v3612, 1.442695
  %v3633 = vpow.pop %v3632
  %v3634 = vmul.f32 %v3613, 1.442695
  %v3635 = vpow.pop %v3634
  %v3636 = vmul.f32 %v3614, 1.442695
  %v3637 = vpow.pop %v3636
  %v3638 = vmul.f32 %v3615, 1.442695
  %v3639 = vpow.pop %v3638
  %v3640 = vmul.f32 %v3616, 1.442695
  %v3641 = vpow.pop %v3640
  %v3642 = vmul.f32 %v3617, 1.442695
  %v3643 = vpow.pop %v3642
  %v3644 = vmul.f32 %v3618, 1.442695
  %v3645 = vpow.pop %v3644
  %v3646 = vmul.f32 %v3619, 1.442695
  %v3647 = vpow.pop %v3646
  %v3648 = vmul.f32 %v3620, 1.442695
  %v3649 = vpow.pop %v3648
  %v3650 = vmul.f32 %v3621, 1.442695
  %v3651 = vpow.pop %v3650
  %v3652 = vmul.f32 %v3622, 1.442695
  %v3653 = vpow.pop %v3652
  %v3654 = vmul.f32 %v3623, 1.442695
  %v3655 = vpow.pop %v3654
  %v3656 = vadd.f32 %v3625, 1.0
  %v3657 = vlog2.pop %v3656
  %v3658 = vmul.f32 %v3657, 0.6931472
  %v3659 = vmul.f32 -0.5, %v3625
  %v3660 = vadd.f32 %v3659, 1.0
  %v3661 = vmul.f32 %v3660, %v3625
  %v3662 = vand.u32 2147483647, %v3625
  %vm3663 = vcmp.lt.f32.partialorder %v3662, 0.0004427343
  %v3664 = vsel %vm3663, %v3661, %v3658
  %v3665 = vadd.f32 %v3627, 1.0
  %v3666 = vlog2.pop %v3665
  %v3667 = vmul.f32 %v3666, 0.6931472
  %v3668 = vmul.f32 -0.5, %v3627
  %v3669 = vadd.f32 %v3668, 1.0
  %v3670 = vmul.f32 %v3669, %v3627
  %v3671 = vand.u32 2147483647, %v3627
  %vm3672 = vcmp.lt.f32.partialorder %v3671, 0.0004427343
  %v3673 = vsel %vm3672, %v3670, %v3667
  %v3674 = vadd.f32 %v3629, 1.0
  %v3675 = vlog2.pop %v3674
  %v3676 = vmul.f32 %v3675, 0.6931472
  %v3677 = vmul.f32 -0.5, %v3629
  %v3678 = vadd.f32 %v3677, 1.0
  %v3679 = vmul.f32 %v3678, %v3629
  %v3680 = vand.u32 2147483647, %v3629
  %vm3681 = vcmp.lt.f32.partialorder %v3680, 0.0004427343
  %v3682 = vsel %vm3681, %v3679, %v3676
  %v3683 = vadd.f32 %v3631, 1.0
  %v3684 = vlog2.pop %v3683
  %v3685 = vmul.f32 %v3684, 0.6931472
  %v3686 = vmul.f32 -0.5, %v3631
  %v3687 = vadd.f32 %v3686, 1.0
  %v3688 = vmul.f32 %v3687, %v3631
  %v3689 = vand.u32 2147483647, %v3631
  %vm3690 = vcmp.lt.f32.partialorder %v3689, 0.0004427343
  %v3691 = vsel %vm3690, %v3688, %v3685
  %v3692 = vadd.f32 %v3633, 1.0
  %v3693 = vlog2.pop %v3692
  %v3694 = vmul.f32 %v3693, 0.6931472
  %v3695 = vmul.f32 -0.5, %v3633
  %v3696 = vadd.f32 %v3695, 1.0
  %v3697 = vmul.f32 %v3696, %v3633
  %v3698 = vand.u32 2147483647, %v3633
  %vm3699 = vcmp.lt.f32.partialorder %v3698, 0.0004427343
  %v3700 = vsel %vm3699, %v3697, %v3694
  %v3701 = vadd.f32 %v3635, 1.0
  %v3702 = vlog2.pop %v3701
  %v3703 = vmul.f32 %v3702, 0.6931472
  %v3704 = vmul.f32 -0.5, %v3635
  %v3705 = vadd.f32 %v3704, 1.0
  %v3706 = vmul.f32 %v3705, %v3635
  %v3707 = vand.u32 2147483647, %v3635
  %vm3708 = vcmp.lt.f32.partialorder %v3707, 0.0004427343
  %v3709 = vsel %vm3708, %v3706, %v3703
  %v3710 = vadd.f32 %v3637, 1.0
  %v3711 = vlog2.pop %v3710
  %v3712 = vmul.f32 %v3711, 0.6931472
  %v3713 = vmul.f32 -0.5, %v3637
  %v3714 = vadd.f32 %v3713, 1.0
  %v3715 = vmul.f32 %v3714, %v3637
  %v3716 = vand.u32 2147483647, %v3637
  %vm3717 = vcmp.lt.f32.partialorder %v3716, 0.0004427343
  %v3718 = vsel %vm3717, %v3715, %v3712
  %v3719 = vadd.f32 %v3639, 1.0
  %v3720 = vlog2.pop %v3719
  %v3721 = vmul.f32 %v3720, 0.6931472
  %v3722 = vmul.f32 -0.5, %v3639
  %v3723 = vadd.f32 %v3722, 1.0
  %v3724 = vmul.f32 %v3723, %v3639
  %v3725 = vand.u32 2147483647, %v3639
  %vm3726 = vcmp.lt.f32.partialorder %v3725, 0.0004427343
  %v3727 = vsel %vm3726, %v3724, %v3721
  %v3728 = vadd.f32 %v3641, 1.0
  %v3729 = vlog2.pop %v3728
  %v3730 = vmul.f32 %v3729, 0.6931472
  %v3731 = vmul.f32 -0.5, %v3641
  %v3732 = vadd.f32 %v3731, 1.0
  %v3733 = vmul.f32 %v3732, %v3641
  %v3734 = vand.u32 2147483647, %v3641
  %vm3735 = vcmp.lt.f32.partialorder %v3734, 0.0004427343
  %v3736 = vsel %vm3735, %v3733, %v3730
  %v3737 = vadd.f32 %v3643, 1.0
  %v3738 = vlog2.pop %v3737
  %v3739 = vmul.f32 %v3738, 0.6931472
  %v3740 = vmul.f32 -0.5, %v3643
  %v3741 = vadd.f32 %v3740, 1.0
  %v3742 = vmul.f32 %v3741, %v3643
  %v3743 = vand.u32 2147483647, %v3643
  %vm3744 = vcmp.lt.f32.partialorder %v3743, 0.0004427343
  %v3745 = vsel %vm3744, %v3742, %v3739
  %v3746 = vadd.f32 %v3645, 1.0
  %v3747 = vlog2.pop %v3746
  %v3748 = vmul.f32 %v3747, 0.6931472
  %v3749 = vmul.f32 -0.5, %v3645
  %v3750 = vadd.f32 %v3749, 1.0
  %v3751 = vmul.f32 %v3750, %v3645
  %v3752 = vand.u32 2147483647, %v3645
  %vm3753 = vcmp.lt.f32.partialorder %v3752, 0.0004427343
  %v3754 = vsel %vm3753, %v3751, %v3748
  %v3755 = vadd.f32 %v3647, 1.0
  %v3756 = vlog2.pop %v3755
  %v3757 = vmul.f32 %v3756, 0.6931472
  %v3758 = vmul.f32 -0.5, %v3647
  %v3759 = vadd.f32 %v3758, 1.0
  %v3760 = vmul.f32 %v3759, %v3647
  %v3761 = vand.u32 2147483647, %v3647
  %vm3762 = vcmp.lt.f32.partialorder %v3761, 0.0004427343
  %v3763 = vsel %vm3762, %v3760, %v3757
  %v3764 = vadd.f32 %v3649, 1.0
  %v3765 = vlog2.pop %v3764
  %v3766 = vmul.f32 %v3765, 0.6931472
  %v3767 = vmul.f32 -0.5, %v3649
  %v3768 = vadd.f32 %v3767, 1.0
  %v3769 = vmul.f32 %v3768, %v3649
  %v3770 = vand.u32 2147483647, %v3649
  %vm3771 = vcmp.lt.f32.partialorder %v3770, 0.0004427343
  %v3772 = vsel %vm3771, %v3769, %v3766
  %v3773 = vadd.f32 %v3651, 1.0
  %v3774 = vlog2.pop %v3773
  %v3775 = vmul.f32 %v3774, 0.6931472
  %v3776 = vmul.f32 -0.5, %v3651
  %v3777 = vadd.f32 %v3776, 1.0
  %v3778 = vmul.f32 %v3777, %v3651
  %v3779 = vand.u32 2147483647, %v3651
  %vm3780 = vcmp.lt.f32.partialorder %v3779, 0.0004427343
  %v3781 = vsel %vm3780, %v3778, %v3775
  %v3782 = vadd.f32 %v3653, 1.0
  %v3783 = vlog2.pop %v3782
  %v3784 = vmul.f32 %v3783, 0.6931472
  %v3785 = vmul.f32 -0.5, %v3653
  %v3786 = vadd.f32 %v3785, 1.0
  %v3787 = vmul.f32 %v3786, %v3653
  %v3788 = vand.u32 2147483647, %v3653
  %vm3789 = vcmp.lt.f32.partialorder %v3788, 0.0004427343
  %v3790 = vsel %vm3789, %v3787, %v3784
  %v3791 = vadd.f32 %v3655, 1.0
  %v3792 = vlog2.pop %v3791
  %v3793 = vmul.f32 %v3792, 0.6931472
  %v3794 = vmul.f32 -0.5, %v3655
  %v3795 = vadd.f32 %v3794, 1.0
  %v3796 = vmul.f32 %v3795, %v3655
  %v3797 = vand.u32 2147483647, %v3655
  %vm3798 = vcmp.lt.f32.partialorder %v3797, 0.0004427343
  %v3799 = vsel %vm3798, %v3796, %v3793
  %vm3800 = vcmp.gt.f32.partialorder %v3592, 20.0
  %vm3801 = vcmp.gt.f32.partialorder %v3593, 20.0
  %vm3802 = vcmp.gt.f32.partialorder %v3594, 20.0
  %vm3803 = vcmp.gt.f32.partialorder %v3595, 20.0
  %vm3804 = vcmp.gt.f32.partialorder %v3596, 20.0
  %vm3805 = vcmp.gt.f32.partialorder %v3597, 20.0
  %vm3806 = vcmp.gt.f32.partialorder %v3598, 20.0
  %vm3807 = vcmp.gt.f32.partialorder %v3599, 20.0
  %vm3808 = vcmp.gt.f32.partialorder %v3600, 20.0
  %vm3809 = vcmp.gt.f32.partialorder %v3601, 20.0
  %vm3810 = vcmp.gt.f32.partialorder %v3602, 20.0
  %vm3811 = vcmp.gt.f32.partialorder %v3603, 20.0
  %vm3812 = vcmp.gt.f32.partialorder %v3604, 20.0
  %vm3813 = vcmp.gt.f32.partialorder %v3605, 20.0
  %vm3814 = vcmp.gt.f32.partialorder %v3606, 20.0
  %vm3815 = vcmp.gt.f32.partialorder %v3607, 20.0
  %v3816 = vmul.f32 %v3664, 0.01
  %v3817 = vmul.f32 %v3673, 0.01
  %v3818 = vmul.f32 %v3682, 0.01
  %v3819 = vmul.f32 %v3691, 0.01
  %v3820 = vmul.f32 %v3700, 0.01
  %v3821 = vmul.f32 %v3709, 0.01
  %v3822 = vmul.f32 %v3718, 0.01
  %v3823 = vmul.f32 %v3727, 0.01
  %v3824 = vmul.f32 %v3736, 0.01
  %v3825 = vmul.f32 %v3745, 0.01
  %v3826 = vmul.f32 %v3754, 0.01
  %v3827 = vmul.f32 %v3763, 0.01
  %v3828 = vmul.f32 %v3772, 0.01
  %v3829 = vmul.f32 %v3781, 0.01
  %v3830 = vmul.f32 %v3790, 0.01
  %v3831 = vmul.f32 %v3799, 0.01
  %v3832 = vsel %vm3800, %v3553, %v3816
  %v3833 = vsel %vm3801, %v3555, %v3817
  %v3834 = vsel %vm3802, %v3558, %v3818
  %v3835 = vsel %vm3803, %v3560, %v3819
  %v3836 = vsel %vm3804, %v3563, %v3820
  %v3837 = vsel %vm3805, %v3565, %v3821
  %v3838 = vsel %vm3806, %v3568, %v3822
  %v3839 = vsel %vm3807, %v3570, %v3823
  %v3840 = vsel %vm3808, %v3573, %v3824
  %v3841 = vsel %vm3809, %v3575, %v3825
  %v3842 = vsel %vm3810, %v3578, %v3826
  %v3843 = vsel %vm3811, %v3580, %v3827
  %v3844 = vsel %vm3812, %v3583, %v3828
  %v3845 = vsel %vm3813, %v3585, %v3829
  %v3846 = vsel %vm3814, %v3588, %v3830
  %v3847 = vsel %vm3815, %v3590, %v3831
  %v3848 = vld [vmem:[%s8] sm:$0x1]
  %v3850 = vperm.slane %v3848, 0
  %v3852 = vmul.f32 %v3832, %v3850
  %v3853 = vmul.f32 %v3833, %v3850
  %v3854 = vmul.f32 %v3834, %v3850
  %v3855 = vmul.f32 %v3835, %v3850
  %v3856 = vmul.f32 %v3836, %v3850
  %v3857 = vmul.f32 %v3837, %v3850
  %v3858 = vmul.f32 %v3838, %v3850
  %v3859 = vmul.f32 %v3839, %v3850
  %v3860 = vmul.f32 %v3840, %v3850
  %v3861 = vmul.f32 %v3841, %v3850
  %v3862 = vmul.f32 %v3842, %v3850
  %v3863 = vmul.f32 %v3843, %v3850
  %v3864 = vmul.f32 %v3844, %v3850
  %v3865 = vmul.f32 %v3845, %v3850
  %v3866 = vmul.f32 %v3846, %v3850
  %v3867 = vmul.f32 %v3847, %v3850
  %v3868 = vsel %vm3159, %v3852, 0.0
  %3869 = vadd.xlane.f32.xlu0 %v3868
  %v3870 = vpop.xlane.xlu0 %3869
  %v3871 = vsel %vm3159, %v3853, 0.0
  %3872 = vadd.xlane.f32.xlu0 %v3871
  %v3873 = vpop.xlane.xlu0 %3872
  %v3874 = vsel %vm3159, %v3854, 0.0
  %3875 = vadd.xlane.f32.xlu0 %v3874
  %v3876 = vpop.xlane.xlu0 %3875
  %v3877 = vsel %vm3159, %v3855, 0.0
  %3878 = vadd.xlane.f32.xlu0 %v3877
  %v3879 = vpop.xlane.xlu0 %3878
  %v3880 = vsel %vm3159, %v3856, 0.0
  %3881 = vadd.xlane.f32.xlu0 %v3880
  %v3882 = vpop.xlane.xlu0 %3881
  %v3883 = vsel %vm3159, %v3857, 0.0
  %3884 = vadd.xlane.f32.xlu0 %v3883
  %v3885 = vpop.xlane.xlu0 %3884
  %v3886 = vsel %vm3159, %v3858, 0.0
  %3887 = vadd.xlane.f32.xlu0 %v3886
  %v3888 = vpop.xlane.xlu0 %3887
  %v3889 = vsel %vm3159, %v3859, 0.0
  %3890 = vadd.xlane.f32.xlu0 %v3889
  %v3891 = vpop.xlane.xlu0 %3890
  %v3892 = vsel %vm3159, %v3860, 0.0
  %3893 = vadd.xlane.f32.xlu0 %v3892
  %v3894 = vpop.xlane.xlu0 %3893
  %v3895 = vsel %vm3159, %v3861, 0.0
  %3896 = vadd.xlane.f32.xlu0 %v3895
  %v3897 = vpop.xlane.xlu0 %3896
  %v3898 = vsel %vm3159, %v3862, 0.0
  %3899 = vadd.xlane.f32.xlu0 %v3898
  %v3900 = vpop.xlane.xlu0 %3899
  %v3901 = vsel %vm3159, %v3863, 0.0
  %3902 = vadd.xlane.f32.xlu0 %v3901
  %v3903 = vpop.xlane.xlu0 %3902
  %v3904 = vsel %vm3159, %v3864, 0.0
  %3905 = vadd.xlane.f32.xlu0 %v3904
  %v3906 = vpop.xlane.xlu0 %3905
  %v3907 = vsel %vm3159, %v3865, 0.0
  %3908 = vadd.xlane.f32.xlu0 %v3907
  %v3909 = vpop.xlane.xlu0 %3908
  %v3910 = vsel %vm3159, %v3866, 0.0
  %3911 = vadd.xlane.f32.xlu0 %v3910
  %v3912 = vpop.xlane.xlu0 %3911
  %v3913 = vsel %vm3159, %v3867, 0.0
  %3914 = vadd.xlane.f32.xlu0 %v3913
  %v3915 = vpop.xlane.xlu0 %3914
  %v3916 = vld [vmem:[#allocation2] sm:$0x1]
  %v3918 = vperm.slane %v3916, 0
  %v3920 = vadd.f32 %v3870, %v3918
  %v3921 = vadd.f32 %v3873, %v3918
  %v3922 = vadd.f32 %v3876, %v3918
  %v3923 = vadd.f32 %v3879, %v3918
  %v3924 = vadd.f32 %v3882, %v3918
  %v3925 = vadd.f32 %v3885, %v3918
  %v3926 = vadd.f32 %v3888, %v3918
  %v3927 = vadd.f32 %v3891, %v3918
  %v3928 = vadd.f32 %v3894, %v3918
  %v3929 = vadd.f32 %v3897, %v3918
  %v3930 = vadd.f32 %v3900, %v3918
  %v3931 = vadd.f32 %v3903, %v3918
  %v3932 = vadd.f32 %v3906, %v3918
  %v3933 = vadd.f32 %v3909, %v3918
  %v3934 = vadd.f32 %v3912, %v3918
  %v3935 = vadd.f32 %v3915, %v3918
  %vm3936 = vcmask 7168
  %3937 = vst.msk [vmem:[%s12] sm:$0xff] %vm3936, %v3920
  %3938 = vst.msk [vmem:[%s12 + $0x8] sm:$0xff] %vm3936, %v3921
  %3939 = vst.msk [vmem:[%s12 + $0x10] sm:$0xff] %vm3936, %v3922
  %3940 = vst.msk [vmem:[%s12 + $0x18] sm:$0xff] %vm3936, %v3923
  %3941 = vst.msk [vmem:[%s12 + $0x20] sm:$0xff] %vm3936, %v3924
  %3942 = vst.msk [vmem:[%s12 + $0x28] sm:$0xff] %vm3936, %v3925
  %3943 = vst.msk [vmem:[%s12 + $0x30] sm:$0xff] %vm3936, %v3926
  %3944 = vst.msk [vmem:[%s12 + $0x38] sm:$0xff] %vm3936, %v3927
  %3945 = vst.msk [vmem:[%s12 + $0x40] sm:$0xff] %vm3936, %v3928
  %3946 = vst.msk [vmem:[%s12 + $0x48] sm:$0xff] %vm3936, %v3929
  %3947 = vst.msk [vmem:[%s12 + $0x50] sm:$0xff] %vm3936, %v3930
  %3948 = vst.msk [vmem:[%s12 + $0x58] sm:$0xff] %vm3936, %v3931
  %3949 = vst.msk [vmem:[%s12 + $0x60] sm:$0xff] %vm3936, %v3932
  %3950 = vst.msk [vmem:[%s12 + $0x68] sm:$0xff] %vm3936, %v3933
  %3951 = vst.msk [vmem:[%s12 + $0x70] sm:$0xff] %vm3936, %v3934
  %3952 = vst.msk [vmem:[%s12 + $0x78] sm:$0xff] %vm3936, %v3935
  %v3953 = vld [vmem:[%s10] sm:$0xff]
  %v3954 = vld [vmem:[%s10 + $0x8] sm:$0xff]
  %v3955 = vld [vmem:[%s10 + $0x10] sm:$0xff]
  %v3956 = vld [vmem:[%s10 + $0x18] sm:$0xff]
  %v3957 = vld [vmem:[%s11] sm:$0x1]
  %v3959 = vperm.slane %v3957, 0
  %v3962 = vsel %vm3159, %v3832, 0
  %v3965 = vsel %vm3159, %v3833, 0
  %v3968 = vsel %vm3159, %v3834, 0
  %v3971 = vsel %vm3159, %v3835, 0
  %v3974 = vsel %vm3159, %v3836, 0
  %v3977 = vsel %vm3159, %v3837, 0
  %v3980 = vsel %vm3159, %v3838, 0
  %v3983 = vsel %vm3159, %v3839, 0
  %v3986 = vsel %vm3159, %v3840, 0
  %v3989 = vsel %vm3159, %v3841, 0
  %v3992 = vsel %vm3159, %v3842, 0
  %v3995 = vsel %vm3159, %v3843, 0
  %v3998 = vsel %vm3159, %v3844, 0
  %v4001 = vsel %vm3159, %v3845, 0
  %v4004 = vsel %vm3159, %v3846, 0
  %v4007 = vsel %vm3159, %v3847, 0
  %4009 = vmatpush.msra.mxu0 0.0
  %4010 = vmatpush.msra.mxu0 0.0
  %4011 = vmatpush.msra.mxu0 0.0
  %4012 = vmatpush.msra.mxu0 0.0
  %4013 = vmatpush.msra.mxu0 0.0
  %4014 = vmatpush.msra.mxu0 0.0
  %4015 = vmatpush.msra.mxu0 0.0
  %4016 = vmatpush.msra.mxu0 0.0
  %4017 = vmatpush.msra.mxu0 0.0
  %4018 = vmatpush.msra.mxu0 0.0
  %4019 = vmatpush.msra.mxu0 0.0
  %4020 = vmatpush.msra.mxu0 0.0
  %4021 = vmatpush.msra.mxu0 %v3956
  %4022 = vmatpush.msra.mxu0 %v3955
  %4023 = vmatpush.msra.mxu0 %v3954
  %4024 = vmatpush.msra.mxu0 %v3953
  %4025 = vmatmul.f32.gmra.mxu0 %v3962
  %v4026 = vpop.f32.mrf.mxu0
  %v4027 = vadd.f32 %v3959, %v4026
  %4028 = vmatmul.f32.gmra.mxu0 %v3965
  %v4029 = vpop.f32.mrf.mxu0
  %v4030 = vadd.f32 %v3959, %v4029
  %4031 = vmatmul.f32.gmra.mxu0 %v3968
  %v4032 = vpop.f32.mrf.mxu0
  %v4033 = vadd.f32 %v3959, %v4032
  %4034 = vmatmul.f32.gmra.mxu0 %v3971
  %v4035 = vpop.f32.mrf.mxu0
  %v4036 = vadd.f32 %v3959, %v4035
  %4037 = vmatmul.f32.gmra.mxu0 %v3974
  %v4038 = vpop.f32.mrf.mxu0
  %v4039 = vadd.f32 %v3959, %v4038
  %4040 = vmatmul.f32.gmra.mxu0 %v3977
  %v4041 = vpop.f32.mrf.mxu0
  %v4042 = vadd.f32 %v3959, %v4041
  %4043 = vmatmul.f32.gmra.mxu0 %v3980
  %v4044 = vpop.f32.mrf.mxu0
  %v4045 = vadd.f32 %v3959, %v4044
  %4046 = vmatmul.f32.gmra.mxu0 %v3983
  %v4047 = vpop.f32.mrf.mxu0
  %v4048 = vadd.f32 %v3959, %v4047
  %4049 = vmatmul.f32.gmra.mxu0 %v3986
  %v4050 = vpop.f32.mrf.mxu0
  %v4051 = vadd.f32 %v3959, %v4050
  %4052 = vmatmul.f32.gmra.mxu0 %v3989
  %v4053 = vpop.f32.mrf.mxu0
  %v4054 = vadd.f32 %v3959, %v4053
  %4055 = vmatmul.f32.gmra.mxu0 %v3992
  %v4056 = vpop.f32.mrf.mxu0
  %v4057 = vadd.f32 %v3959, %v4056
  %4058 = vmatmul.f32.gmra.mxu0 %v3995
  %v4059 = vpop.f32.mrf.mxu0
  %v4060 = vadd.f32 %v3959, %v4059
  %4061 = vmatmul.f32.gmra.mxu0 %v3998
  %v4062 = vpop.f32.mrf.mxu0
  %v4063 = vadd.f32 %v3959, %v4062
  %4064 = vmatmul.f32.gmra.mxu0 %v4001
  %v4065 = vpop.f32.mrf.mxu0
  %v4066 = vadd.f32 %v3959, %v4065
  %4067 = vmatmul.f32.gmra.mxu0 %v4004
  %v4068 = vpop.f32.mrf.mxu0
  %v4069 = vadd.f32 %v3959, %v4068
  %4070 = vmatmul.f32.gmra.mxu0 %v4007
  %v4071 = vpop.f32.mrf.mxu0
  %v4072 = vadd.f32 %v3959, %v4071
  %4073 = vdwg.mxu0
  %vm4074 = vcmask 64512
  %4075 = vst.msk [vmem:[%s13] sm:$0xff] %vm4074, %v4027
  %4076 = vst.msk [vmem:[%s13 + $0x8] sm:$0xff] %vm4074, %v4030
  %4077 = vst.msk [vmem:[%s13 + $0x10] sm:$0xff] %vm4074, %v4033
  %4078 = vst.msk [vmem:[%s13 + $0x18] sm:$0xff] %vm4074, %v4036
  %4079 = vst.msk [vmem:[%s13 + $0x20] sm:$0xff] %vm4074, %v4039
  %4080 = vst.msk [vmem:[%s13 + $0x28] sm:$0xff] %vm4074, %v4042
  %4081 = vst.msk [vmem:[%s13 + $0x30] sm:$0xff] %vm4074, %v4045
  %4082 = vst.msk [vmem:[%s13 + $0x38] sm:$0xff] %vm4074, %v4048
  %4083 = vst.msk [vmem:[%s13 + $0x40] sm:$0xff] %vm4074, %v4051
  %4084 = vst.msk [vmem:[%s13 + $0x48] sm:$0xff] %vm4074, %v4054
  %4085 = vst.msk [vmem:[%s13 + $0x50] sm:$0xff] %vm4074, %v4057
  %4086 = vst.msk [vmem:[%s13 + $0x58] sm:$0xff] %vm4074, %v4060
  %4087 = vst.msk [vmem:[%s13 + $0x60] sm:$0xff] %vm4074, %v4063
  %4088 = vst.msk [vmem:[%s13 + $0x68] sm:$0xff] %vm4074, %v4066
  %4089 = vst.msk [vmem:[%s13 + $0x70] sm:$0xff] %vm4074, %v4069
  %4090 = vst.msk [vmem:[%s13 + $0x78] sm:$0xff] %vm4074, %v4072
  // Predicated region
  $region50: #{_geometry_forward.1} parent=0 // pred_check
    _
  $region51: #{_geometry_forward.1} parent=0 // pred_check_branch
    %4092 = sbr.rel (0) target = $region53
  $region52: #{_geometry_forward.1} parent=0 // pred_region
    _
  $region53: #{_geometry_forward.1} parent=0 // pred_fallthru
    _
  // Predicated region
  $region54: #{_geometry_forward.1} parent=0 // pred_check
    _
  $region55: #{_geometry_forward.1} parent=0 // pred_check_branch
    %4094 = sbr.rel (0) target = $region57
  $region56: #{_geometry_forward.1} parent=0 // pred_region
    _
  $region57: #{_geometry_forward.1} parent=0 // pred_fallthru
    _
  // Predicated region
  $region58: #{_geometry_forward.1} parent=0 // pred_check
    _
  $region59: #{_geometry_forward.1} parent=0 // pred_check_branch
    %4096 = sbr.rel (0) target = $region61
  $region60: #{_geometry_forward.1} parent=0 // pred_region
    _
  $region61: #{_geometry_forward.1} parent=0 // pred_fallthru
    _
  // Predicated region
  $region62: #{_geometry_forward.1} parent=0 // pred_check
    _
  $region63: #{_geometry_forward.1} parent=0 // pred_check_branch
    %4098 = sbr.rel (0) target = $region65
  $region64: #{_geometry_forward.1} parent=0 // pred_region
    _
  $region65: #{_geometry_forward.1} parent=0 // pred_fallthru
    _

</llo_original>
